<compile_context>
chip_gen: v6e
topology: v6e:2x2x1
jax: 0.10.0
libtpu: 0.0.40
codegen_flags: <defaults>
</compile_context>

<pallas_src>
import functools

import jax
import jax.numpy as jnp
import numpy as np
from jax import lax
from jax.experimental import pallas as pl
from jax.experimental.pallas import tpu as pltpu


def _round_up(a, b):
    return -(-a // b) * b


# ----------------------------------- kernel ---------------------------------

def _resblock_kernel(mid_ref, top_ref, bot_ref, w1_ref, g1_ref, b1_ref,
                     w2_ref, g2_ref, b2_ref, alpha_ref, out_ref, halo_scr):
    """One (batch, row-block) tile of the fused residual block.

    mid_ref : (1, th, Wp, P)  current th image rows, width zero-padded to Wp
    top_ref : (1, 1,  Wp, P)  row just above the block (clamped at i == 0)
    bot_ref : (1, 1,  Wp, P)  row just below the block (clamped at the end)
    w1_ref  : (3, 3P, P)      conv1 taps; w1_ref[dy][dx*P + cin, cout]
    g*_ref  : (P, P)          GDN gamma (stream dtype); b*_ref : (1, P) f32
    w2_ref  : (P, P)          conv2 (1x1) weight
    alpha   : (1, 1) SMEM f32 shared PReLU slope
    out_ref : (1, th, W, P)   output block (W un-padded columns)
    halo_scr: (th+2, Wp, P)   VMEM scratch holding the row halo
    """
    i = pl.program_id(1)
    nblk = pl.num_programs(1)

    th = mid_ref.shape[1]
    Wp = mid_ref.shape[2]
    P = mid_ref.shape[3]
    W = out_ref.shape[2]
    a = alpha_ref[0, 0]

    # ---- halo assembly: one aligned slab copy into the VMEM scratch ---------
    halo_scr[1:th + 1] = mid_ref[0]
    top = top_ref[0, 0]
    bot = bot_ref[0, 0]
    halo_scr[0] = jnp.where(i > 0, top, jnp.zeros_like(top))
    halo_scr[th + 1] = jnp.where(i < nblk - 1, bot, jnp.zeros_like(bot))

    n_halo = (th + 2) * Wp                 # Wp % 16 == 0 -> layout-free reshape
    nrows = th * Wp
    flat = halo_scr[...].reshape(n_halo, P)          # stream dtype

    # ---- dx shifts via XLU roll: rolled_k[j] = flat[j + k] -------------------
    # Wrapped / cross-row elements only land in pad columns (x >= W), which are
    # never stored.  Rolls are done in f32 (robust 32-bit sublane rotate).
    flat32 = flat.astype(jnp.float32)
    r1 = pltpu.roll(flat32, shift=n_halo - 1, axis=0)     # == shift by -1
    r2 = pltpu.roll(flat32, shift=n_halo - 2, axis=0)     # == shift by -2
    big = jnp.concatenate(
        [flat, r1.astype(flat.dtype), r2.astype(flat.dtype)], axis=-1)

    # ---- conv1 (3x3, pad=1, stride=1, no bias): 3 matmuls with K = 3P --------
    h = jnp.dot(big[0:nrows], w1_ref[0],
                preferred_element_type=jnp.float32)
    h = h + jnp.dot(big[Wp:Wp + nrows], w1_ref[1],
                    preferred_element_type=jnp.float32)
    h = h + jnp.dot(big[2 * Wp:2 * Wp + nrows], w1_ref[2],
                    preferred_element_type=jnp.float32)    # (th*Wp, P) f32

    # ---- GDN1: h_j * rsqrt(beta_j + sum_i gamma[i, j] * h_i^2) ---------------
    hh = (h * h).astype(g1_ref.dtype)      # square in f32, matmul in stream dt
    norm1 = jnp.dot(hh, g1_ref[...],
                    preferred_element_type=jnp.float32) + b1_ref[...]
    h = h * lax.rsqrt(norm1)

    # ---- PReLU (single shared slope, nn.PReLU() default) ---------------------
    h = jnp.where(h >= 0, h, a * h)

    # ---- conv2 (1x1, no bias) -------------------------------------------------
    h = jnp.dot(h.astype(w2_ref.dtype), w2_ref[...],
                preferred_element_type=jnp.float32)

    # ---- GDN2 -----------------------------------------------------------------
    hh = (h * h).astype(g2_ref.dtype)
    norm2 = jnp.dot(hh, g2_ref[...],
                    preferred_element_type=jnp.float32) + b2_ref[...]
    h = h * lax.rsqrt(norm2)

    # ---- residual add (= centre tap, reused from the dx=1 roll) + PReLU ------
    h = h + r1[Wp:Wp + nrows]
    h = jnp.where(h >= 0, h, a * h)

    # ---- store only the W valid columns of every row group -------------------
    out_ref[0] = h.reshape(th, Wp, P)[:, :W, :].astype(out_ref.dtype)


# -------------------------- generation-aware tiling --------------------------

def _tpu_vmem_capacity_bytes():
    try:
        return int(pltpu.get_tpu_info().vmem_capacity_bytes)
    except Exception:
        return 64 * 1024 * 1024            # conservative (v7x-sized) fallback


def _vmem_limit_bytes(cap):
    """v5e/v6e (128 MiB physical): raise the scoped limit toward ~96 MiB so
    large row blocks fit.  v7x (64 MiB physical): keep real headroom."""
    if cap >= 96 * 1024 * 1024:
        return int(min(cap - 24 * 1024 * 1024, 96 * 1024 * 1024))
    return int(max(24 * 1024 * 1024,
                   min(cap - 24 * 1024 * 1024, 40 * 1024 * 1024)))


def _pick_row_tile(H, W, n_batch, cap, stream_bytes, out_bytes):
    """Largest divisor of H fitting the generation-aware VMEM / pixel budget."""
    Wp = _round_up(W + 2, 16)
    per_row = Wp * 128 * (2 * stream_bytes       # mid block, double buffered
                          + 2 * out_bytes        # out block, double buffered
                          + stream_bytes         # halo scratch
                          + 3 * stream_bytes     # K-fused conv1 LHS
                          + 5 * 4)               # ~5 live f32 temporaries
    budget = _vmem_limit_bytes(cap) // 2
    th_cap = max(1, budget // per_row)
    # v5e/v6e: amortise the ~600-cycle grid-step overhead with big blocks;
    # v7x: smaller blocks + VMEM headroom (HBM is 3.2 TB/s there anyway).
    pix_target = 8192 if cap >= 96 * 1024 * 1024 else 3072
    th_cap = min(th_cap, max(1, pix_target // max(W, 1)))

    th = 1
    for d in range(1, H + 1):
        if H % d == 0 and d <= th_cap:
            th = d
    # keep at least two grid blocks so both v7x TensorCores get work
    if n_batch * (H // th) < 2 and th > 1:
        divs = [d for d in range(1, th) if H % d == 0]
        if divs:
            th = divs[-1]
    return th


# ----------------------------------- wrapper ---------------------------------

@functools.partial(jax.jit,
                   static_argnames=("row_tile", "stream_dtype", "out_dtype",
                                    "keep_channel_pad"))
def conv_resblock_forward_nhwc(x_nhwc, params, *, row_tile=None,
                               stream_dtype=jnp.bfloat16,
                               out_dtype=jnp.bfloat16,
                               keep_channel_pad=False):
    """Fused conv_ResBlock forward on NHWC (use_conv1x1=False, stride=1,
    skip=None).  Returns (N, H, W, Cout), or (N, H, W, P) with
    keep_channel_pad=True to avoid the extra HBM unpad pass."""
    w1, g1, b1, w2, g2, b2, alpha = params
    N, H, W, C = x_nhwc.shape
    Cout = w1.shape[1]
    if w1.shape[0] != 9 * C:
        raise ValueError("w1 must have shape (9*Cin, Cout)")
    if C != Cout:
        raise ValueError("residual add needs in_channels == out_channels "
                         "(use_conv1x1=False path)")

    P = _round_up(Cout, 128)               # lane-dense channel padding
    Wp = _round_up(W + 2, 16)              # sublane-tile aligned padded width

    stream_bytes = jnp.dtype(stream_dtype).itemsize
    out_bytes = jnp.dtype(out_dtype).itemsize
    cap = _tpu_vmem_capacity_bytes()
    th = row_tile if row_tile is not None else _pick_row_tile(
        H, W, N, cap, stream_bytes, out_bytes)
    if H % th != 0:
        raise ValueError(f"row_tile={th} must divide H={H}")

    # --- input: zero-pad width to Wp (left pad 1), channels to P, cast --------
    x_p = jnp.pad(x_nhwc.astype(stream_dtype),
                  ((0, 0), (0, 0), (1, Wp - W - 1), (0, P - C)))

    # --- parameters: pad to P lanes; dead channels stay exactly zero ----------
    w1_t = w1.reshape(3, 3, C, Cout).astype(stream_dtype)
    w1_p = jnp.zeros((3, 3, P, P), stream_dtype).at[:, :, :C, :Cout].set(w1_t)
    w1_p = w1_p.reshape(3, 3 * P, P)       # row block dy, K index = dx*P + cin
    w2_p = jnp.zeros((P, P), stream_dtype).at[:Cout, :Cout].set(
        w2.astype(stream_dtype))
    g1_p = jnp.zeros((P, P), stream_dtype).at[:Cout, :Cout].set(
        g1.astype(stream_dtype))
    g2_p = jnp.zeros((P, P), stream_dtype).at[:Cout, :Cout].set(
        g2.astype(stream_dtype))
    # beta = 1 on dead lanes keeps the GDN norm > 0 there (output stays 0).
    b1_p = jnp.ones((1, P), jnp.float32).at[:, :Cout].set(b1.astype(jnp.float32))
    b2_p = jnp.ones((1, P), jnp.float32).at[:, :Cout].set(b2.astype(jnp.float32))
    alpha_s = alpha.astype(jnp.float32).reshape(1, 1)

    grid = (N, H // th)

    def mid_map(n, i):                     # current th rows (block index)
        return (n, i, 0, 0)

    def top_map(n, i):                     # single row just above the block
        return (n, jnp.maximum(i * th - 1, 0), 0, 0)

    def bot_map(n, i):                     # single row just below the block
        return (n, jnp.minimum((i + 1) * th, H - 1), 0, 0)

    def full(shape):                       # resident, grid-invariant block
        if len(shape) == 2:
            return pl.BlockSpec(shape, lambda n, i: (0, 0))
        return pl.BlockSpec(shape, lambda n, i: (0, 0, 0))

    # TODO(synk): mark the grid-invariant weight specs pipeline_mode=
    # pl.Buffered(1) (v7x VMEM micro-opt) once that kwarg is guaranteed here.
    out = pl.pallas_call(
        _resblock_kernel,
        out_shape=jax.ShapeDtypeStruct((N, H, W, P), out_dtype),
        grid=grid,
        in_specs=[
            pl.BlockSpec((1, th, Wp, P), mid_map),   # same array, 3 views
            pl.BlockSpec((1, 1, Wp, P), top_map),
            pl.BlockSpec((1, 1, Wp, P), bot_map),
            full(w1_p.shape), full(g1_p.shape), full(b1_p.shape),
            full(w2_p.shape), full(g2_p.shape), full(b2_p.shape),
            pl.BlockSpec(memory_space=pltpu.MemorySpace.SMEM),  # alpha scalar
        ],
        out_specs=pl.BlockSpec((1, th, W, P), lambda n, i: (n, i, 0, 0)),
        scratch_shapes=[pltpu.VMEM((th + 2, Wp, P), stream_dtype)],
        compiler_params=pltpu.CompilerParams(
            dimension_semantics=("parallel", "parallel"),
            vmem_limit_bytes=_vmem_limit_bytes(cap)),
    )(x_p, x_p, x_p, w1_p, g1_p, b1_p, w2_p, g2_p, b2_p, alpha_s)

    if keep_channel_pad:
        return out
    return out[..., :Cout]


def conv_resblock_forward(x_nchw, params, **kw):
    """NCHW wrapper matching the PyTorch interface.  Prefer the NHWC entry
    point in an NHWC pipeline: each transpose here is an extra HBM pass."""
    x_nhwc = jnp.transpose(x_nchw, (0, 2, 3, 1))
    out = conv_resblock_forward_nhwc(x_nhwc, params, **kw)
    return jnp.transpose(out, (0, 3, 1, 2))


# ----------------------------- pure-JAX reference ----------------------------

def im2col_3x3(x_nhwc):
    N, H, W, C = x_nhwc.shape
    xp = jnp.pad(x_nhwc, ((0, 0), (1, 1), (1, 1), (0, 0)))
    blocks = [xp[:, dy:dy + H, dx:dx + W, :]
              for dy in range(3) for dx in range(3)]
    return jnp.concatenate(blocks, axis=-1)              # (N, H, W, 9*C)


def reference_forward(x_nchw, params):
    """Pure-JAX f32 reference with identical math, for the correctness check."""
    w1, g1, b1, w2, g2, b2, alpha = params
    N, C, H, W = x_nchw.shape
    x_nhwc = jnp.transpose(x_nchw, (0, 2, 3, 1))
    patches = im2col_3x3(x_nhwc).reshape(N * H * W, 9 * C)
    xres = x_nhwc.reshape(N * H * W, C)
    a = alpha[0, 0]

    h = patches @ w1
    h = h * lax.rsqrt((h * h) @ g1 + b1)
    h = jnp.where(h >= 0, h, a * h)
    h = h @ w2
    h = h * lax.rsqrt((h * h) @ g2 + b2)
    h = h + xres
    h = jnp.where(h >= 0, h, a * h)
    return h.reshape(N, H, W, -1).transpose(0, 3, 1, 2)


def make_params(key, in_channels, out_channels, kernel_size=3):
    """Deterministic synthetic parameters matching conv_ResBlock.__init__."""
    k1, k2 = jax.random.split(key)

    # conv1: PyTorch weight (Cout, Cin, 3, 3) -> matmul form (kh*kw*Cin, Cout)
    w1_t = jax.random.normal(
        k1, (out_channels, in_channels, kernel_size, kernel_size),
        jnp.float32) * 0.1
    w1 = jnp.transpose(w1_t, (2, 3, 1, 0)).reshape(
        kernel_size * kernel_size * in_channels, out_channels)

    # conv2: 1x1 -> (Cin=Cout, Cout)
    w2_t = jax.random.normal(k2, (out_channels, out_channels, 1, 1),
                             jnp.float32) * 0.1
    w2 = jnp.transpose(w2_t, (2, 3, 1, 0)).reshape(out_channels, out_channels)

    # GDN params: gamma = 0.1 * I (norm = x^2 @ gamma), beta = 1
    g = 0.1 * jnp.eye(out_channels, dtype=jnp.float32)
    b = jnp.ones((1, out_channels), jnp.float32)

    # nn.PReLU() default single slope 0.25
    alpha = jnp.full((1, 1), 0.25, jnp.float32)

    return (w1, g, b, w2, g, b, alpha)


if __name__ == "__main__":
    # batch=2, in_channels=out_channels=4, spatial 16x16 (use_conv1x1=False,
    # stride=1, so the residual add is well-defined).
    N, C, H, W = 2, 4, 16, 16
    key = jax.random.PRNGKey(0)
    kx, kp = jax.random.split(key)
    x = jax.random.normal(kx, (N, C, H, W), jnp.float32)
    params = make_params(kp, in_channels=C, out_channels=C)

    ref = jax.block_until_ready(reference_forward(x, params))

    # f32 streams + f32 output: tight check against the pure-JAX reference.
    out_f32 = jax.block_until_ready(
        conv_resblock_forward(x, params, stream_dtype=jnp.float32,
                              out_dtype=jnp.float32))
    assert out_f32.shape == (N, C, H, W)
    np.testing.assert_allclose(np.asarray(out_f32), np.asarray(ref),
                               rtol=1e-5, atol=1e-5)

    # default bf16 streams / bf16 output with f32 accumulation: loose check.
    out_bf16 = jax.block_until_ready(conv_resblock_forward(x, params))
    assert out_bf16.shape == (N, C, H, W)
    np.testing.assert_allclose(
        np.asarray(out_bf16.astype(jnp.float32)), np.asarray(ref),
        rtol=5e-2, atol=5e-2)

    print("KERNEL_OK")
</pallas_src>

<mosaic_0001>
module attributes {stable_mosaic.version = 11 : i64} {
  func.func @_resblock_kernel(%arg0: i32, %arg1: i32, %arg2: memref<1x16x32x128xf32, #tpu.memory_space<vmem>>, %arg3: memref<1x1x32x128xf32, #tpu.memory_space<vmem>>, %arg4: memref<1x1x32x128xf32, #tpu.memory_space<vmem>>, %arg5: memref<3x384x128xf32, #tpu.memory_space<vmem>>, %arg6: memref<128x128xf32, #tpu.memory_space<vmem>>, %arg7: memref<1x128xf32, #tpu.memory_space<vmem>>, %arg8: memref<128x128xf32, #tpu.memory_space<vmem>>, %arg9: memref<128x128xf32, #tpu.memory_space<vmem>>, %arg10: memref<1x128xf32, #tpu.memory_space<vmem>>, %arg11: memref<1x1xf32, #tpu.memory_space<smem>>, %arg12: memref<1x16x16x128xf32, #tpu.memory_space<vmem>>, %arg13: memref<18x32x128xf32, #tpu.memory_space<vmem>>) attributes {dimension_semantics = [#tpu.dimension_semantics<parallel>, #tpu.dimension_semantics<parallel>], iteration_bounds = array<i64: 2, 1>, scalar_prefetch = 0 : i64, scratch_operands = 1 : i64, tpu.core_type = #tpu.core_type<tc>, window_params = [{transform_indices = @transform_0, window_bounds = array<i64: 1, 16, 32, 128>}, {transform_indices = @transform_1, window_bounds = array<i64: 1, 1, 32, 128>}, {transform_indices = @transform_2, window_bounds = array<i64: 1, 1, 32, 128>}, {pipeline_mode = #tpu.pipeline_mode<synchronous>, transform_indices = @transform_3, window_bounds = array<i64: 3, 384, 128>}, {pipeline_mode = #tpu.pipeline_mode<synchronous>, transform_indices = @transform_4, window_bounds = array<i64: 128, 128>}, {pipeline_mode = #tpu.pipeline_mode<synchronous>, transform_indices = @transform_5, window_bounds = array<i64: 1, 128>}, {pipeline_mode = #tpu.pipeline_mode<synchronous>, transform_indices = @transform_6, window_bounds = array<i64: 128, 128>}, {pipeline_mode = #tpu.pipeline_mode<synchronous>, transform_indices = @transform_7, window_bounds = array<i64: 128, 128>}, {pipeline_mode = #tpu.pipeline_mode<synchronous>, transform_indices = @transform_8, window_bounds = array<i64: 1, 128>}, {transform_indices = @transform_9, window_bounds = array<i64: 1, 1>}, {transform_indices = @transform_10, window_bounds = array<i64: 1, 16, 16, 128>}]} {
    %c0 = arith.constant 0 : index
    %c0_0 = arith.constant 0 : index
    %0 = memref.load %arg11[%c0, %c0_0] : memref<1x1xf32, #tpu.memory_space<smem>>
    %c0_1 = arith.constant 0 : index
    %c0_2 = arith.constant 0 : index
    %c0_3 = arith.constant 0 : index
    %c0_4 = arith.constant 0 : index
    %1 = vector.load %arg2[%c0_1, %c0_2, %c0_3, %c0_4] : memref<1x16x32x128xf32, #tpu.memory_space<vmem>>, vector<1x16x32x128xf32>
    %2 = vector.shape_cast %1 : vector<1x16x32x128xf32> to vector<16x32x128xf32>
    %c1 = arith.constant 1 : index
    %c0_5 = arith.constant 0 : index
    %c0_6 = arith.constant 0 : index
    %3 = vector.load %arg13[%c1, %c0_5, %c0_6] : memref<18x32x128xf32, #tpu.memory_space<vmem>>, vector<16x32x128xf32>
    tpu.vector_store %arg13[%c1, %c0_5, %c0_6], %2 {strides = array<i32>} : memref<18x32x128xf32, #tpu.memory_space<vmem>>, vector<16x32x128xf32>,
    %c0_7 = arith.constant 0 : index
    %c0_8 = arith.constant 0 : index
    %c0_9 = arith.constant 0 : index
    %c0_10 = arith.constant 0 : index
    %4 = vector.load %arg3[%c0_7, %c0_8, %c0_9, %c0_10] : memref<1x1x32x128xf32, #tpu.memory_space<vmem>>, vector<1x1x32x128xf32>
    %5 = vector.shape_cast %4 : vector<1x1x32x128xf32> to vector<32x128xf32>
    %c0_11 = arith.constant 0 : index
    %c0_12 = arith.constant 0 : index
    %c0_13 = arith.constant 0 : index
    %c0_14 = arith.constant 0 : index
    %6 = vector.load %arg4[%c0_11, %c0_12, %c0_13, %c0_14] : memref<1x1x32x128xf32, #tpu.memory_space<vmem>>, vector<1x1x32x128xf32>
    %7 = vector.shape_cast %6 : vector<1x1x32x128xf32> to vector<32x128xf32>
    %c0_i32 = arith.constant 0 : i32
    %8 = arith.cmpi sgt, %arg1, %c0_i32 : i32
    %cst = arith.constant 0.000000e+00 : f32
    %9 = vector.broadcast %cst : f32 to vector<32x128xf32>
    %10 = arith.select %8, %5, %9 : vector<32x128xf32>
    %c0_15 = arith.constant 0 : index
    %c0_16 = arith.constant 0 : index
    %c0_17 = arith.constant 0 : index
    %11 = vector.load %arg13[%c0_15, %c0_16, %c0_17] : memref<18x32x128xf32, #tpu.memory_space<vmem>>, vector<1x32x128xf32>
    %12 = vector.shape_cast %11 : vector<1x32x128xf32> to vector<32x128xf32>
    %13 = vector.shape_cast %10 : vector<32x128xf32> to vector<1x32x128xf32>
    tpu.vector_store %arg13[%c0_15, %c0_16, %c0_17], %13 {strides = array<i32>} : memref<18x32x128xf32, #tpu.memory_space<vmem>>, vector<1x32x128xf32>,
    %c0_i32_18 = arith.constant 0 : i32
    %14 = arith.cmpi slt, %arg1, %c0_i32_18 : i32
    %cst_19 = arith.constant 0.000000e+00 : f32
    %15 = vector.broadcast %cst_19 : f32 to vector<32x128xf32>
    %16 = arith.select %14, %7, %15 : vector<32x128xf32>
    %c17 = arith.constant 17 : index
    %c0_20 = arith.constant 0 : index
    %c0_21 = arith.constant 0 : index
    %17 = vector.load %arg13[%c17, %c0_20, %c0_21] : memref<18x32x128xf32, #tpu.memory_space<vmem>>, vector<1x32x128xf32>
    %18 = vector.shape_cast %17 : vector<1x32x128xf32> to vector<32x128xf32>
    %19 = vector.shape_cast %16 : vector<32x128xf32> to vector<1x32x128xf32>
    tpu.vector_store %arg13[%c17, %c0_20, %c0_21], %19 {strides = array<i32>} : memref<18x32x128xf32, #tpu.memory_space<vmem>>, vector<1x32x128xf32>,
    %c0_22 = arith.constant 0 : index
    %c0_23 = arith.constant 0 : index
    %c0_24 = arith.constant 0 : index
    %20 = vector.load %arg13[%c0_22, %c0_23, %c0_24] : memref<18x32x128xf32, #tpu.memory_space<vmem>>, vector<18x32x128xf32>
    %21 = vector.shape_cast %20 : vector<18x32x128xf32> to vector<576x128xf32>
    %c575_i32 = arith.constant 575 : i32
    %22 = tpu.dynamic_rotate %21 by %c575_i32 dim 0 : vector<576x128xf32>, i32 -> vector<576x128xf32>
    %c574_i32 = arith.constant 574 : i32
    %23 = tpu.dynamic_rotate %21 by %c574_i32 dim 0 : vector<576x128xf32>, i32 -> vector<576x128xf32>
    %24 = tpu.concatenate %21, %22, %23 in 1 : vector<576x128xf32>, vector<576x128xf32>, vector<576x128xf32> -> vector<576x384xf32>
    %25 = vector.extract_strided_slice %24 {offsets = [0, 0], sizes = [512, 384], strides = [1, 1]} : vector<576x384xf32> to vector<512x384xf32>
    %c0_25 = arith.constant 0 : index
    %c0_26 = arith.constant 0 : index
    %c0_27 = arith.constant 0 : index
    %26 = vector.load %arg5[%c0_25, %c0_26, %c0_27] : memref<3x384x128xf32, #tpu.memory_space<vmem>>, vector<1x384x128xf32>
    %27 = vector.shape_cast %26 : vector<1x384x128xf32> to vector<384x128xf32>
    %cst_28 = arith.constant dense<0.000000e+00> : vector<512x128xf32>
    %28 = tpu.matmul %25, %27, %cst_28 {dimension_numbers = #tpu.dot_dimension_numbers<[1], [0], [0], [1], [0, 0, 1, 1], [], []>} : vector<512x384xf32>, vector<384x128xf32>, vector<512x128xf32> -> vector<512x128xf32>
    %29 = vector.extract_strided_slice %24 {offsets = [32, 0], sizes = [512, 384], strides = [1, 1]} : vector<576x384xf32> to vector<512x384xf32>
    %c1_29 = arith.constant 1 : index
    %c0_30 = arith.constant 0 : index
    %c0_31 = arith.constant 0 : index
    %30 = vector.load %arg5[%c1_29, %c0_30, %c0_31] : memref<3x384x128xf32, #tpu.memory_space<vmem>>, vector<1x384x128xf32>
    %31 = vector.shape_cast %30 : vector<1x384x128xf32> to vector<384x128xf32>
    %cst_32 = arith.constant dense<0.000000e+00> : vector<512x128xf32>
    %32 = tpu.matmul %29, %31, %cst_32 {dimension_numbers = #tpu.dot_dimension_numbers<[1], [0], [0], [1], [0, 0, 1, 1], [], []>} : vector<512x384xf32>, vector<384x128xf32>, vector<512x128xf32> -> vector<512x128xf32>
    %33 = arith.addf %28, %32 : vector<512x128xf32>
    %34 = vector.extract_strided_slice %24 {offsets = [64, 0], sizes = [512, 384], strides = [1, 1]} : vector<576x384xf32> to vector<512x384xf32>
    %c2 = arith.constant 2 : index
    %c0_33 = arith.constant 0 : index
    %c0_34 = arith.constant 0 : index
    %35 = vector.load %arg5[%c2, %c0_33, %c0_34] : memref<3x384x128xf32, #tpu.memory_space<vmem>>, vector<1x384x128xf32>
    %36 = vector.shape_cast %35 : vector<1x384x128xf32> to vector<384x128xf32>
    %cst_35 = arith.constant dense<0.000000e+00> : vector<512x128xf32>
    %37 = tpu.matmul %34, %36, %cst_35 {dimension_numbers = #tpu.dot_dimension_numbers<[1], [0], [0], [1], [0, 0, 1, 1], [], []>} : vector<512x384xf32>, vector<384x128xf32>, vector<512x128xf32> -> vector<512x128xf32>
    %38 = arith.addf %33, %37 : vector<512x128xf32>
    %39 = arith.mulf %38, %38 : vector<512x128xf32>
    %c0_36 = arith.constant 0 : index
    %c0_37 = arith.constant 0 : index
    %40 = vector.load %arg6[%c0_36, %c0_37] : memref<128x128xf32, #tpu.memory_space<vmem>>, vector<128x128xf32>
    %cst_38 = arith.constant dense<0.000000e+00> : vector<512x128xf32>
    %41 = tpu.matmul %39, %40, %cst_38 {dimension_numbers = #tpu.dot_dimension_numbers<[1], [0], [0], [1], [0, 0, 1, 1], [], []>} : vector<512x128xf32>, vector<128x128xf32>, vector<512x128xf32> -> vector<512x128xf32>
    %c0_39 = arith.constant 0 : index
    %c0_40 = arith.constant 0 : index
    %42 = vector.load %arg7[%c0_39, %c0_40] : memref<1x128xf32, #tpu.memory_space<vmem>>, vector<1x128xf32>
    %43 = vector.broadcast %42 : vector<1x128xf32> to vector<512x128xf32>
    %44 = arith.addf %41, %43 : vector<512x128xf32>
    %45 = math.rsqrt %44 : vector<512x128xf32>
    %46 = arith.mulf %38, %45 : vector<512x128xf32>
    %cst_41 = arith.constant 0.000000e+00 : f32
    %47 = vector.broadcast %cst_41 : f32 to vector<512x128xf32>
    %48 = arith.cmpf oge, %46, %47 : vector<512x128xf32>
    %49 = vector.broadcast %0 : f32 to vector<512x128xf32>
    %50 = arith.mulf %49, %46 : vector<512x128xf32>
    %51 = arith.select %48, %46, %50 : vector<512x128xi1>, vector<512x128xf32>
    %c0_42 = arith.constant 0 : index
    %c0_43 = arith.constant 0 : index
    %52 = vector.load %arg8[%c0_42, %c0_43] : memref<128x128xf32, #tpu.memory_space<vmem>>, vector<128x128xf32>
    %cst_44 = arith.constant dense<0.000000e+00> : vector<512x128xf32>
    %53 = tpu.matmul %51, %52, %cst_44 {dimension_numbers = #tpu.dot_dimension_numbers<[1], [0], [0], [1], [0, 0, 1, 1], [], []>} : vector<512x128xf32>, vector<128x128xf32>, vector<512x128xf32> -> vector<512x128xf32>
    %54 = arith.mulf %53, %53 : vector<512x128xf32>
    %c0_45 = arith.constant 0 : index
    %c0_46 = arith.constant 0 : index
    %55 = vector.load %arg9[%c0_45, %c0_46] : memref<128x128xf32, #tpu.memory_space<vmem>>, vector<128x128xf32>
    %cst_47 = arith.constant dense<0.000000e+00> : vector<512x128xf32>
    %56 = tpu.matmul %54, %55, %cst_47 {dimension_numbers = #tpu.dot_dimension_numbers<[1], [0], [0], [1], [0, 0, 1, 1], [], []>} : vector<512x128xf32>, vector<128x128xf32>, vector<512x128xf32> -> vector<512x128xf32>
    %c0_48 = arith.constant 0 : index
    %c0_49 = arith.constant 0 : index
    %57 = vector.load %arg10[%c0_48, %c0_49] : memref<1x128xf32, #tpu.memory_space<vmem>>, vector<1x128xf32>
    %58 = vector.broadcast %57 : vector<1x128xf32> to vector<512x128xf32>
    %59 = arith.addf %56, %58 : vector<512x128xf32>
    %60 = math.rsqrt %59 : vector<512x128xf32>
    %61 = arith.mulf %53, %60 : vector<512x128xf32>
    %62 = vector.extract_strided_slice %22 {offsets = [32, 0], sizes = [512, 128], strides = [1, 1]} : vector<576x128xf32> to vector<512x128xf32>
    %63 = arith.addf %61, %62 : vector<512x128xf32>
    %cst_50 = arith.constant 0.000000e+00 : f32
    %64 = vector.broadcast %cst_50 : f32 to vector<512x128xf32>
    %65 = arith.cmpf oge, %63, %64 : vector<512x128xf32>
    %66 = vector.broadcast %0 : f32 to vector<512x128xf32>
    %67 = arith.mulf %66, %63 : vector<512x128xf32>
    %68 = arith.select %65, %63, %67 : vector<512x128xi1>, vector<512x128xf32>
    %69 = vector.shape_cast %68 : vector<512x128xf32> to vector<16x32x128xf32>
    %70 = vector.extract_strided_slice %69 {offsets = [0, 0, 0], sizes = [16, 16, 128], strides = [1, 1, 1]} : vector<16x32x128xf32> to vector<16x16x128xf32>
    %c0_51 = arith.constant 0 : index
    %c0_52 = arith.constant 0 : index
    %c0_53 = arith.constant 0 : index
    %c0_54 = arith.constant 0 : index
    %71 = vector.load %arg12[%c0_51, %c0_52, %c0_53, %c0_54] : memref<1x16x16x128xf32, #tpu.memory_space<vmem>>, vector<1x16x16x128xf32>
    %72 = vector.shape_cast %71 : vector<1x16x16x128xf32> to vector<16x16x128xf32>
    %73 = vector.shape_cast %70 : vector<16x16x128xf32> to vector<1x16x16x128xf32>
    tpu.vector_store %arg12[%c0_51, %c0_52, %c0_53, %c0_54], %73 {strides = array<i32>} : memref<1x16x16x128xf32, #tpu.memory_space<vmem>>, vector<1x16x16x128xf32>,
    return
  }
  func.func @transform_0(%arg0: i32, %arg1: i32) -> (i32, i32, i32, i32) {
    %c0_i32 = arith.constant 0 : i32
    %c0_i32_0 = arith.constant 0 : i32
    %c0_i32_1 = arith.constant 0 : i32
    return %arg0, %arg1, %c0_i32, %c0_i32_0 : i32, i32, i32, i32
  }
  func.func @transform_1(%arg0: i32, %arg1: i32) -> (i32, i32, i32, i32) {
    %c16_i32 = arith.constant 16 : i32
    %0 = arith.muli %arg1, %c16_i32 : i32
    %c1_i32 = arith.constant 1 : i32
    %1 = arith.subi %0, %c1_i32 : i32
    %c0_i32 = arith.constant 0 : i32
    %2 = arith.maxsi %1, %c0_i32 : i32
    %c0_i32_0 = arith.constant 0 : i32
    %c0_i32_1 = arith.constant 0 : i32
    %c0_i32_2 = arith.constant 0 : i32
    return %arg0, %2, %c0_i32_0, %c0_i32_1 : i32, i32, i32, i32
  }
  func.func @transform_2(%arg0: i32, %arg1: i32) -> (i32, i32, i32, i32) {
    %c1_i32 = arith.constant 1 : i32
    %0 = arith.addi %arg1, %c1_i32 : i32
    %c16_i32 = arith.constant 16 : i32
    %1 = arith.muli %0, %c16_i32 : i32
    %c15_i32 = arith.constant 15 : i32
    %2 = arith.minsi %1, %c15_i32 : i32
    %c0_i32 = arith.constant 0 : i32
    %c0_i32_0 = arith.constant 0 : i32
    %c0_i32_1 = arith.constant 0 : i32
    return %arg0, %2, %c0_i32, %c0_i32_0 : i32, i32, i32, i32
  }
  func.func @transform_3(%arg0: i32, %arg1: i32) -> (i32, i32, i32) {
    %c0_i32 = arith.constant 0 : i32
    %c0_i32_0 = arith.constant 0 : i32
    %c0_i32_1 = arith.constant 0 : i32
    %c0_i32_2 = arith.constant 0 : i32
    return %c0_i32, %c0_i32_0, %c0_i32_1 : i32, i32, i32
  }
  func.func @transform_4(%arg0: i32, %arg1: i32) -> (i32, i32) {
    %c0_i32 = arith.constant 0 : i32
    %c0_i32_0 = arith.constant 0 : i32
    %c0_i32_1 = arith.constant 0 : i32
    return %c0_i32, %c0_i32_0 : i32, i32
  }
  func.func @transform_5(%arg0: i32, %arg1: i32) -> (i32, i32) {
    %c0_i32 = arith.constant 0 : i32
    %c0_i32_0 = arith.constant 0 : i32
    %c0_i32_1 = arith.constant 0 : i32
    return %c0_i32, %c0_i32_0 : i32, i32
  }
  func.func @transform_6(%arg0: i32, %arg1: i32) -> (i32, i32) {
    %c0_i32 = arith.constant 0 : i32
    %c0_i32_0 = arith.constant 0 : i32
    %c0_i32_1 = arith.constant 0 : i32
    return %c0_i32, %c0_i32_0 : i32, i32
  }
  func.func @transform_7(%arg0: i32, %arg1: i32) -> (i32, i32) {
    %c0_i32 = arith.constant 0 : i32
    %c0_i32_0 = arith.constant 0 : i32
    %c0_i32_1 = arith.constant 0 : i32
    return %c0_i32, %c0_i32_0 : i32, i32
  }
  func.func @transform_8(%arg0: i32, %arg1: i32) -> (i32, i32) {
    %c0_i32 = arith.constant 0 : i32
    %c0_i32_0 = arith.constant 0 : i32
    %c0_i32_1 = arith.constant 0 : i32
    return %c0_i32, %c0_i32_0 : i32, i32
  }
  func.func @transform_9(%arg0: i32, %arg1: i32) -> (i32, i32) {
    %c0_i32 = arith.constant 0 : i32
    %c0_i32_0 = arith.constant 0 : i32
    %c0_i32_1 = arith.constant 0 : i32
    return %c0_i32, %c0_i32_0 : i32, i32
  }
  func.func @transform_10(%arg0: i32, %arg1: i32) -> (i32, i32, i32, i32) {
    %c0_i32 = arith.constant 0 : i32
    %c0_i32_0 = arith.constant 0 : i32
    %c0_i32_1 = arith.constant 0 : i32
    return %arg0, %arg1, %c0_i32, %c0_i32_0 : i32, i32, i32, i32
  }
}

</mosaic_0001>

<llo_original>
// kernel: conv_resblock_forward_nhwc.1
$region0: #{conv_resblock_forward_nhwc.1}
  #allocation0 [shape = 'u32[]', space=smem, size = 0x4, offset = 0x4, fixed_abs, tag = 'smem constant byte address 0x4 - core index']
  #allocation1 [shape = 'u32[144,128]{1,0:T(1,128)}', space=vmem, size = 0x12000, scoped, tag = 'internal scratch']
  #allocation2 [shape = 'f32[18,32,128]{2,1,0:T(8,128)}', space=vmem, size = 0x48000, scoped, tag = 'scratch operand']
  #allocation3 [shape = 'f32[1,1]{1,0:T(1,128)S(6)}', space=smem, size = 0x200, scoped, tag = 'scoped memory for conv_resblock_forward_nhwc.1']
  %s0 = inlined_call_operand.vmem [shape: f32[2,16,32,128], index: 0, kind: input, shape index: {}, may-alias: {0,1,2}]
  %s1 = inlined_call_operand.vmem [shape: f32[2,16,32,128], index: 1, kind: input, shape index: {}, may-alias: {0,1,2}]
  %s2 = inlined_call_operand.vmem [shape: f32[2,16,32,128], index: 2, kind: input, shape index: {}, may-alias: {0,1,2}]
  %s3 = inlined_call_operand.vmem [shape: f32[3,384,128], index: 3, kind: input, shape index: {}]
  %s4 = inlined_call_operand.vmem [shape: f32[128,128], index: 4, kind: input, shape index: {}]
  %s5 = inlined_call_operand.vmem [shape: f32[1,128], index: 5, kind: input, shape index: {}]
  %s6 = inlined_call_operand.vmem [shape: f32[128,128], index: 6, kind: input, shape index: {}]
  %s7 = inlined_call_operand.vmem [shape: f32[128,128], index: 7, kind: input, shape index: {}]
  %s8 = inlined_call_operand.vmem [shape: f32[1,128], index: 8, kind: input, shape index: {}]
  %s9 = inlined_call_operand.<no memory space> [shape: f32[1,1], index: 9, kind: input, shape index: {}]
  %s10 = inlined_call_operand.vmem [shape: f32[2,16,16,128], index: 10, kind: output, shape index: {}]
  %s11 = sld [smem:[#allocation0]]
  $region73: #{conv_resblock_forward_nhwc.1} parent=0
    _
  %s13 = ssub.s32 1, %s11
  %s14 = scalar_select 0, %s13, %s11
  %15 = sst [smem:[#allocation3]] %s9
  loop: start=0, step=1, limit=4
  $region2: #{conv_resblock_forward_nhwc.1} parent=0 // loop_pre_header
    _
  $region3: #{conv_resblock_forward_nhwc.1} parent=0 // loop_header
    %s17 = sphi 0, %s21
    %p18 = scmp.ge.s32.totalorder %s17, 4
    %s24 = sphi 0, %s36
    %s25 = sphi 0, %s32
    %s26 = sphi 0, %s24
    %s27 = sphi 0, %s25
    %s28 = sphi 0, %s26
    %s29 = sphi 0, %s27
    %s41 = sphi 0, %s43
    %s44 = sphi 0, %s41
    %s45 = sphi 0, %s44
    %s61 = sphi 0, %s45
    %s77 = sphi 0, %s79
    %s80 = sphi 0, %s77
    %s81 = sphi 0, %s80
    %s97 = sphi 0, %s81
    %s113 = sphi 0, %s115
    %s116 = sphi 0, %s113
    %s117 = sphi 0, %s116
    %s133 = sphi 0, %s117
    %s137 = sphi 0, %s137
    %s139 = sphi 0, %s137
    %s140 = sphi 0, %s139
    %s154 = sphi 0, %s140
    %s158 = sphi 0, %s158
    %s160 = sphi 0, %s158
    %s161 = sphi 0, %s160
    %s175 = sphi 0, %s161
    %s179 = sphi 0, %s179
    %s181 = sphi 0, %s179
    %s182 = sphi 0, %s181
    %s196 = sphi 0, %s182
    %s200 = sphi 0, %s200
    %s202 = sphi 0, %s200
    %s203 = sphi 0, %s202
    %s217 = sphi 0, %s203
    %s221 = sphi 0, %s221
    %s223 = sphi 0, %s221
    %s224 = sphi 0, %s223
    %s238 = sphi 0, %s224
    %s242 = sphi 0, %s242
    %s244 = sphi 0, %s242
    %s245 = sphi 0, %s244
    %s259 = sphi 0, %s245
    %s263 = sphi 0, %s263
    %s265 = sphi 0, %s263
    %s266 = sphi 0, %s265
    %s280 = sphi 0, %s266
    %s288 = sphi 0, %s290
    %s291 = sphi 0, %s288
    %s292 = sphi 0, %s291
    %s308 = sphi 0, %s292
  $region4: #{conv_resblock_forward_nhwc.1} parent=0 // loop_header_branch
    %20 = sbr.rel (%p18) target = $region8
  $region5: #{conv_resblock_forward_nhwc.1} parent=0 // loop_body
    %s22 = ssub.s32 %s17, 1
    %s23 = ssub.s32 %s17, 2
    %s30 = sadd.s32 1, %s25
    %p31 = scmp.ge.s32.totalorder %s30, 1
    %s32 = scalar_select %p31, 0, %s30
    %s33 = sadd.s32 1, %s24
    %s34 = scalar_select %p31, %s33, %s24
    %p35 = scmp.ge.s32.totalorder %s34, 2
    %s36 = scalar_select %p35, 0, %s34
    %s37 = ssub.s32 %s24, %s36
    %s38 = ssub.s32 %s25, %s32
    %s39 = sor.u32 %s37, %s38
    %p40 = scmp.eq.s32.totalorder %s39, 0
    %s42 = sadd.s32 %s41, 1
    %s43 = scalar_select %p40, %s41, %s42
    %p46 = pneg %p40
    %p47 = scmp.eq.s32.totalorder %s17, 1
    %p48 = por %p46, %p47
    %p49 = scmp.ne.s32.totalorder %s41, %s44
    %p50 = scmp.eq.s32.totalorder %s17, 0
    %p51 = por %p49, %p50
    %p52 = scmp.ne.s32.totalorder %s41, %s44
    %p53 = scmp.eq.s32.totalorder %s22, 1
    %p54 = por %p52, %p53
    %p55 = scmp.ne.s32.totalorder %s44, %s45
    %p56 = scmp.eq.s32.totalorder %s22, 0
    %p57 = por %p55, %p56
    %p58 = scmp.ne.s32.totalorder %s44, %s45
    %p59 = scmp.eq.s32.totalorder %s23, 1
    %p60 = por %p58, %p59
    %p62 = scmp.ne.s32.totalorder %s45, %s61
    %p63 = scmp.eq.s32.totalorder %s23, 0
    %p64 = por %p62, %p63
    %s65 = smul.u32 %s25, 16
    %s66 = ssub.s32 %s65, 1
    %p67 = scmp.gt.s32.totalorder %s66, 0
    %s68 = scalar_select %p67, %s66, 0
    %s69 = smul.u32 %s32, 16
    %s70 = ssub.s32 %s69, 1
    %p71 = scmp.gt.s32.totalorder %s70, 0
    %s72 = scalar_select %p71, %s70, 0
    %s73 = ssub.s32 %s24, %s36
    %s74 = ssub.s32 %s68, %s72
    %s75 = sor.u32 %s73, %s74
    %p76 = scmp.eq.s32.totalorder %s75, 0
    %s78 = sadd.s32 %s77, 1
    %s79 = scalar_select %p76, %s77, %s78
    %p82 = pneg %p76
    %p83 = scmp.eq.s32.totalorder %s17, 1
    %p84 = por %p82, %p83
    %p85 = scmp.ne.s32.totalorder %s77, %s80
    %p86 = scmp.eq.s32.totalorder %s17, 0
    %p87 = por %p85, %p86
    %p88 = scmp.ne.s32.totalorder %s77, %s80
    %p89 = scmp.eq.s32.totalorder %s22, 1
    %p90 = por %p88, %p89
    %p91 = scmp.ne.s32.totalorder %s80, %s81
    %p92 = scmp.eq.s32.totalorder %s22, 0
    %p93 = por %p91, %p92
    %p94 = scmp.ne.s32.totalorder %s80, %s81
    %p95 = scmp.eq.s32.totalorder %s23, 1
    %p96 = por %p94, %p95
    %p98 = scmp.ne.s32.totalorder %s81, %s97
    %p99 = scmp.eq.s32.totalorder %s23, 0
    %p100 = por %p98, %p99
    %s101 = sadd.s32 %s25, 1
    %s102 = smul.u32 %s101, 16
    %p103 = scmp.lt.s32.totalorder %s102, 15
    %s104 = scalar_select %p103, %s102, 15
    %s105 = sadd.s32 %s32, 1
    %s106 = smul.u32 %s105, 16
    %p107 = scmp.lt.s32.totalorder %s106, 15
    %s108 = scalar_select %p107, %s106, 15
    %s109 = ssub.s32 %s24, %s36
    %s110 = ssub.s32 %s104, %s108
    %s111 = sor.u32 %s109, %s110
    %p112 = scmp.eq.s32.totalorder %s111, 0
    %s114 = sadd.s32 %s113, 1
    %s115 = scalar_select %p112, %s113, %s114
    %p118 = pneg %p112
    %p119 = scmp.eq.s32.totalorder %s17, 1
    %p120 = por %p118, %p119
    %p121 = scmp.ne.s32.totalorder %s113, %s116
    %p122 = scmp.eq.s32.totalorder %s17, 0
    %p123 = por %p121, %p122
    %p124 = scmp.ne.s32.totalorder %s113, %s116
    %p125 = scmp.eq.s32.totalorder %s22, 1
    %p126 = por %p124, %p125
    %p127 = scmp.ne.s32.totalorder %s116, %s117
    %p128 = scmp.eq.s32.totalorder %s22, 0
    %p129 = por %p127, %p128
    %p130 = scmp.ne.s32.totalorder %s116, %s117
    %p131 = scmp.eq.s32.totalorder %s23, 1
    %p132 = por %p130, %p131
    %p134 = scmp.ne.s32.totalorder %s117, %s133
    %p135 = scmp.eq.s32.totalorder %s23, 0
    %p136 = por %p134, %p135
    %s138 = sadd.s32 %s137, 1
    %p141 = scmp.eq.s32.totalorder %s17, 1
    %p142 = scmp.ne.s32.totalorder %s137, %s139
    %p143 = scmp.eq.s32.totalorder %s17, 0
    %p144 = por %p142, %p143
    %p145 = scmp.ne.s32.totalorder %s137, %s139
    %p146 = scmp.eq.s32.totalorder %s22, 1
    %p147 = por %p145, %p146
    %p148 = scmp.ne.s32.totalorder %s139, %s140
    %p149 = scmp.eq.s32.totalorder %s22, 0
    %p150 = por %p148, %p149
    %p151 = scmp.ne.s32.totalorder %s139, %s140
    %p152 = scmp.eq.s32.totalorder %s23, 1
    %p153 = por %p151, %p152
    %p155 = scmp.ne.s32.totalorder %s140, %s154
    %p156 = scmp.eq.s32.totalorder %s23, 0
    %p157 = por %p155, %p156
    %s159 = sadd.s32 %s158, 1
    %p162 = scmp.eq.s32.totalorder %s17, 1
    %p163 = scmp.ne.s32.totalorder %s158, %s160
    %p164 = scmp.eq.s32.totalorder %s17, 0
    %p165 = por %p163, %p164
    %p166 = scmp.ne.s32.totalorder %s158, %s160
    %p167 = scmp.eq.s32.totalorder %s22, 1
    %p168 = por %p166, %p167
    %p169 = scmp.ne.s32.totalorder %s160, %s161
    %p170 = scmp.eq.s32.totalorder %s22, 0
    %p171 = por %p169, %p170
    %p172 = scmp.ne.s32.totalorder %s160, %s161
    %p173 = scmp.eq.s32.totalorder %s23, 1
    %p174 = por %p172, %p173
    %p176 = scmp.ne.s32.totalorder %s161, %s175
    %p177 = scmp.eq.s32.totalorder %s23, 0
    %p178 = por %p176, %p177
    %s180 = sadd.s32 %s179, 1
    %p183 = scmp.eq.s32.totalorder %s17, 1
    %p184 = scmp.ne.s32.totalorder %s179, %s181
    %p185 = scmp.eq.s32.totalorder %s17, 0
    %p186 = por %p184, %p185
    %p187 = scmp.ne.s32.totalorder %s179, %s181
    %p188 = scmp.eq.s32.totalorder %s22, 1
    %p189 = por %p187, %p188
    %p190 = scmp.ne.s32.totalorder %s181, %s182
    %p191 = scmp.eq.s32.totalorder %s22, 0
    %p192 = por %p190, %p191
    %p193 = scmp.ne.s32.totalorder %s181, %s182
    %p194 = scmp.eq.s32.totalorder %s23, 1
    %p195 = por %p193, %p194
    %p197 = scmp.ne.s32.totalorder %s182, %s196
    %p198 = scmp.eq.s32.totalorder %s23, 0
    %p199 = por %p197, %p198
    %s201 = sadd.s32 %s200, 1
    %p204 = scmp.eq.s32.totalorder %s17, 1
    %p205 = scmp.ne.s32.totalorder %s200, %s202
    %p206 = scmp.eq.s32.totalorder %s17, 0
    %p207 = por %p205, %p206
    %p208 = scmp.ne.s32.totalorder %s200, %s202
    %p209 = scmp.eq.s32.totalorder %s22, 1
    %p210 = por %p208, %p209
    %p211 = scmp.ne.s32.totalorder %s202, %s203
    %p212 = scmp.eq.s32.totalorder %s22, 0
    %p213 = por %p211, %p212
    %p214 = scmp.ne.s32.totalorder %s202, %s203
    %p215 = scmp.eq.s32.totalorder %s23, 1
    %p216 = por %p214, %p215
    %p218 = scmp.ne.s32.totalorder %s203, %s217
    %p219 = scmp.eq.s32.totalorder %s23, 0
    %p220 = por %p218, %p219
    %s222 = sadd.s32 %s221, 1
    %p225 = scmp.eq.s32.totalorder %s17, 1
    %p226 = scmp.ne.s32.totalorder %s221, %s223
    %p227 = scmp.eq.s32.totalorder %s17, 0
    %p228 = por %p226, %p227
    %p229 = scmp.ne.s32.totalorder %s221, %s223
    %p230 = scmp.eq.s32.totalorder %s22, 1
    %p231 = por %p229, %p230
    %p232 = scmp.ne.s32.totalorder %s223, %s224
    %p233 = scmp.eq.s32.totalorder %s22, 0
    %p234 = por %p232, %p233
    %p235 = scmp.ne.s32.totalorder %s223, %s224
    %p236 = scmp.eq.s32.totalorder %s23, 1
    %p237 = por %p235, %p236
    %p239 = scmp.ne.s32.totalorder %s224, %s238
    %p240 = scmp.eq.s32.totalorder %s23, 0
    %p241 = por %p239, %p240
    %s243 = sadd.s32 %s242, 1
    %p246 = scmp.eq.s32.totalorder %s17, 1
    %p247 = scmp.ne.s32.totalorder %s242, %s244
    %p248 = scmp.eq.s32.totalorder %s17, 0
    %p249 = por %p247, %p248
    %p250 = scmp.ne.s32.totalorder %s242, %s244
    %p251 = scmp.eq.s32.totalorder %s22, 1
    %p252 = por %p250, %p251
    %p253 = scmp.ne.s32.totalorder %s244, %s245
    %p254 = scmp.eq.s32.totalorder %s22, 0
    %p255 = por %p253, %p254
    %p256 = scmp.ne.s32.totalorder %s244, %s245
    %p257 = scmp.eq.s32.totalorder %s23, 1
    %p258 = por %p256, %p257
    %p260 = scmp.ne.s32.totalorder %s245, %s259
    %p261 = scmp.eq.s32.totalorder %s23, 0
    %p262 = por %p260, %p261
    %s264 = sadd.s32 %s263, 1
    %p267 = scmp.eq.s32.totalorder %s17, 1
    %p268 = scmp.ne.s32.totalorder %s263, %s265
    %p269 = scmp.eq.s32.totalorder %s17, 0
    %p270 = por %p268, %p269
    %p271 = scmp.ne.s32.totalorder %s263, %s265
    %p272 = scmp.eq.s32.totalorder %s22, 1
    %p273 = por %p271, %p272
    %p274 = scmp.ne.s32.totalorder %s265, %s266
    %p275 = scmp.eq.s32.totalorder %s22, 0
    %p276 = por %p274, %p275
    %p277 = scmp.ne.s32.totalorder %s265, %s266
    %p278 = scmp.eq.s32.totalorder %s23, 1
    %p279 = por %p277, %p278
    %p281 = scmp.ne.s32.totalorder %s266, %s280
    %p282 = scmp.eq.s32.totalorder %s23, 0
    %p283 = por %p281, %p282
    %s284 = ssub.s32 %s24, %s36
    %s285 = ssub.s32 %s25, %s32
    %s286 = sor.u32 %s284, %s285
    %p287 = scmp.eq.s32.totalorder %s286, 0
    %s289 = sadd.s32 %s288, 1
    %s290 = scalar_select %p287, %s288, %s289
    %p293 = pneg %p287
    %p294 = scmp.eq.s32.totalorder %s17, 1
    %p295 = por %p293, %p294
    %p296 = scmp.ne.s32.totalorder %s288, %s291
    %p297 = scmp.eq.s32.totalorder %s17, 0
    %p298 = por %p296, %p297
    %p299 = scmp.ne.s32.totalorder %s288, %s291
    %p300 = scmp.eq.s32.totalorder %s22, 1
    %p301 = por %p299, %p300
    %p302 = scmp.ne.s32.totalorder %s291, %s292
    %p303 = scmp.eq.s32.totalorder %s22, 0
    %p304 = por %p302, %p303
    %p305 = scmp.ne.s32.totalorder %s291, %s292
    %p306 = scmp.eq.s32.totalorder %s23, 1
    %p307 = por %p305, %p306
    %p309 = scmp.ne.s32.totalorder %s292, %s308
    %p310 = scmp.eq.s32.totalorder %s23, 0
    %p311 = por %p309, %p310
    %p312 = scmp.le.s32.totalorder 1, %s17
    %p313 = scmp.lt.s32.totalorder %s17, 3
    %p314 = pnand %p312, %p313
    %p315 = pneg %p314
    // Predicated region
    $region9: #{conv_resblock_forward_nhwc.1} parent=5 // pred_check
      _
    $region10: #{conv_resblock_forward_nhwc.1} parent=5 // pred_check_branch
      %317 = sbr.rel (%p314) target = $region12
    $region11: #{conv_resblock_forward_nhwc.1} parent=5 // pred_region
      %s318 = ssub.s32 %s17, 1
      // Predicated region
      $region13: #{conv_resblock_forward_nhwc.1} parent=11 // pred_check
        %p319 = pneg %p150
      $region14: #{conv_resblock_forward_nhwc.1} parent=11 // pred_check_branch
        %321 = sbr.rel (%p319) target = $region16
      $region15: #{conv_resblock_forward_nhwc.1} parent=11 // pred_region
        _
      $region16: #{conv_resblock_forward_nhwc.1} parent=11 // pred_fallthru
        _
      // Predicated region
      $region17: #{conv_resblock_forward_nhwc.1} parent=11 // pred_check
        %p322 = pneg %p171
      $region18: #{conv_resblock_forward_nhwc.1} parent=11 // pred_check_branch
        %324 = sbr.rel (%p322) target = $region20
      $region19: #{conv_resblock_forward_nhwc.1} parent=11 // pred_region
        _
      $region20: #{conv_resblock_forward_nhwc.1} parent=11 // pred_fallthru
        _
      // Predicated region
      $region21: #{conv_resblock_forward_nhwc.1} parent=11 // pred_check
        %p325 = pneg %p192
      $region22: #{conv_resblock_forward_nhwc.1} parent=11 // pred_check_branch
        %327 = sbr.rel (%p325) target = $region24
      $region23: #{conv_resblock_forward_nhwc.1} parent=11 // pred_region
        _
      $region24: #{conv_resblock_forward_nhwc.1} parent=11 // pred_fallthru
        _
      // Predicated region
      $region25: #{conv_resblock_forward_nhwc.1} parent=11 // pred_check
        %p328 = pneg %p213
      $region26: #{conv_resblock_forward_nhwc.1} parent=11 // pred_check_branch
        %330 = sbr.rel (%p328) target = $region28
      $region27: #{conv_resblock_forward_nhwc.1} parent=11 // pred_region
        _
      $region28: #{conv_resblock_forward_nhwc.1} parent=11 // pred_fallthru
        _
      // Predicated region
      $region29: #{conv_resblock_forward_nhwc.1} parent=11 // pred_check
        %p331 = pneg %p234
      $region30: #{conv_resblock_forward_nhwc.1} parent=11 // pred_check_branch
        %333 = sbr.rel (%p331) target = $region32
      $region31: #{conv_resblock_forward_nhwc.1} parent=11 // pred_region
        _
      $region32: #{conv_resblock_forward_nhwc.1} parent=11 // pred_fallthru
        _
      // Predicated region
      $region33: #{conv_resblock_forward_nhwc.1} parent=11 // pred_check
        %p334 = pneg %p255
      $region34: #{conv_resblock_forward_nhwc.1} parent=11 // pred_check_branch
        %336 = sbr.rel (%p334) target = $region36
      $region35: #{conv_resblock_forward_nhwc.1} parent=11 // pred_region
        _
      $region36: #{conv_resblock_forward_nhwc.1} parent=11 // pred_fallthru
        _
      // Predicated region
      $region37: #{conv_resblock_forward_nhwc.1} parent=11 // pred_check
        %p337 = pneg %p276
      $region38: #{conv_resblock_forward_nhwc.1} parent=11 // pred_check_branch
        %339 = sbr.rel (%p337) target = $region40
      $region39: #{conv_resblock_forward_nhwc.1} parent=11 // pred_region
        _
      $region40: #{conv_resblock_forward_nhwc.1} parent=11 // pred_fallthru
        _
    $region12: #{conv_resblock_forward_nhwc.1} parent=5 // pred_fallthru
      _
    %p340 = scmp.lt.s32.totalorder %s17, 2
    // Predicated region
    $region41: #{conv_resblock_forward_nhwc.1} parent=5 // pred_check
      %p341 = pneg %p340
    $region42: #{conv_resblock_forward_nhwc.1} parent=5 // pred_check_branch
      %343 = sbr.rel (%p341) target = $region44
    $region43: #{conv_resblock_forward_nhwc.1} parent=5 // pred_region
      // Predicated region
      $region45: #{conv_resblock_forward_nhwc.1} parent=43 // pred_check
        %p344 = pneg %p51
      $region46: #{conv_resblock_forward_nhwc.1} parent=43 // pred_check_branch
        %346 = sbr.rel (%p344) target = $region48
      $region47: #{conv_resblock_forward_nhwc.1} parent=43 // pred_region
        %s347 = smul.u32 16, %s25
        %p348 = scmp.lt.s32.totalorder %s24, 1
        %s349 = scalar_select %p348, %s24, 1
        %p350 = scmp.lt.s32.totalorder %s347, 15
        %s351 = scalar_select %p350, %s347, 15
        %s352 = smul.addr %s351, 4
        %s353 = smul.addr %s349, 64
        %s354 = sadd.s32 %s352, %s353
        %s355 = smul.addr %s354, 8
        %s356 = scalar_lea.vmem %s0, %s355
        %s357 = smul.u32 16, %s25
      $region48: #{conv_resblock_forward_nhwc.1} parent=43 // pred_fallthru
        _
      // Predicated region
      $region49: #{conv_resblock_forward_nhwc.1} parent=43 // pred_check
        %p358 = pneg %p87
      $region50: #{conv_resblock_forward_nhwc.1} parent=43 // pred_check_branch
        %360 = sbr.rel (%p358) target = $region52
      $region51: #{conv_resblock_forward_nhwc.1} parent=43 // pred_region
        %s361 = smul.u32 %s25, 16
        %s362 = ssub.s32 %s361, 1
        %p363 = scmp.gt.s32.totalorder %s362, 0
        %s364 = scalar_select %p363, %s362, 0
        %p365 = scmp.lt.s32.totalorder %s24, 1
        %s366 = scalar_select %p365, %s24, 1
        %p367 = scmp.lt.s32.totalorder %s364, 15
        %s368 = scalar_select %p367, %s364, 15
        %s369 = smul.addr %s368, 4
        %s370 = smul.addr %s366, 64
        %s371 = sadd.s32 %s369, %s370
        %s372 = smul.addr %s371, 8
        %s373 = scalar_lea.vmem %s1, %s372
        %s374 = smul.u32 %s25, 16
        %s375 = ssub.s32 %s374, 1
        %p376 = scmp.gt.s32.totalorder %s375, 0
        %s377 = scalar_select %p376, %s375, 0
      $region52: #{conv_resblock_forward_nhwc.1} parent=43 // pred_fallthru
        _
      // Predicated region
      $region53: #{conv_resblock_forward_nhwc.1} parent=43 // pred_check
        %p378 = pneg %p123
      $region54: #{conv_resblock_forward_nhwc.1} parent=43 // pred_check_branch
        %380 = sbr.rel (%p378) target = $region56
      $region55: #{conv_resblock_forward_nhwc.1} parent=43 // pred_region
        %s381 = sadd.s32 %s25, 1
        %s382 = smul.u32 %s381, 16
        %p383 = scmp.lt.s32.totalorder %s382, 15
        %s384 = scalar_select %p383, %s382, 15
        %p385 = scmp.lt.s32.totalorder %s24, 1
        %s386 = scalar_select %p385, %s24, 1
        %p387 = scmp.lt.s32.totalorder %s384, 15
        %s388 = scalar_select %p387, %s384, 15
        %s389 = smul.addr %s388, 4
        %s390 = smul.addr %s386, 64
        %s391 = sadd.s32 %s389, %s390
        %s392 = smul.addr %s391, 8
        %s393 = scalar_lea.vmem %s2, %s392
        %s394 = sadd.s32 %s25, 1
        %s395 = smul.u32 %s394, 16
        %p396 = scmp.lt.s32.totalorder %s395, 15
        %s397 = scalar_select %p396, %s395, 15
      $region56: #{conv_resblock_forward_nhwc.1} parent=43 // pred_fallthru
        _
    $region44: #{conv_resblock_forward_nhwc.1} parent=5 // pred_fallthru
      _
    %p398 = scmp.le.s32.totalorder 1, %s17
    %p399 = scmp.lt.s32.totalorder %s17, 3
    %p400 = pnand %p398, %p399
    %p401 = pneg %p400
    // Predicated region
    $region57: #{conv_resblock_forward_nhwc.1} parent=5 // pred_check
      _
    $region58: #{conv_resblock_forward_nhwc.1} parent=5 // pred_check_branch
      %403 = sbr.rel (%p400) target = $region60
    $region59: #{conv_resblock_forward_nhwc.1} parent=5 // pred_region
      %s404 = ssub.s32 %s17, 1
      %s405 = smul.u32 16, %s27
      %p406 = scmp.lt.s32.totalorder %s26, 1
      %s407 = scalar_select %p406, %s26, 1
      %p408 = scmp.lt.s32.totalorder %s405, 15
      %s409 = scalar_select %p408, %s405, 15
      %s410 = smul.addr %s409, 4
      %s411 = smul.addr %s407, 64
      %s412 = sadd.s32 %s410, %s411
      %s413 = smul.addr %s412, 8
      %s414 = scalar_lea.vmem %s0, %s413
      %p415 = pneg %p57
      %p416 = pneg %p54
      %s417 = smul.u32 %s27, 16
      %s418 = ssub.s32 %s417, 1
      %p419 = scmp.gt.s32.totalorder %s418, 0
      %s420 = scalar_select %p419, %s418, 0
      %p421 = scmp.lt.s32.totalorder %s26, 1
      %s422 = scalar_select %p421, %s26, 1
      %p423 = scmp.lt.s32.totalorder %s420, 15
      %s424 = scalar_select %p423, %s420, 15
      %s425 = smul.addr %s424, 4
      %s426 = smul.addr %s422, 64
      %s427 = sadd.s32 %s425, %s426
      %s428 = smul.addr %s427, 8
      %s429 = scalar_lea.vmem %s1, %s428
      %p430 = pneg %p93
      %p431 = pneg %p90
      %s432 = sadd.s32 %s27, 1
      %s433 = smul.u32 %s432, 16
      %p434 = scmp.lt.s32.totalorder %s433, 15
      %s435 = scalar_select %p434, %s433, 15
      %p436 = scmp.lt.s32.totalorder %s26, 1
      %s437 = scalar_select %p436, %s26, 1
      %p438 = scmp.lt.s32.totalorder %s435, 15
      %s439 = scalar_select %p438, %s435, 15
      %s440 = smul.addr %s439, 4
      %s441 = smul.addr %s437, 64
      %s442 = sadd.s32 %s440, %s441
      %s443 = smul.addr %s442, 8
      %s444 = scalar_lea.vmem %s2, %s443
      %p445 = pneg %p129
      %p446 = pneg %p126
      %p447 = pneg %p150
      %p448 = pneg %p147
      %p449 = pneg %p171
      %p450 = pneg %p168
      %p451 = pneg %p192
      %p452 = pneg %p189
      %p453 = pneg %p213
      %p454 = pneg %p210
      %p455 = pneg %p234
      %p456 = pneg %p231
      %p457 = pneg %p255
      %p458 = pneg %p252
      %p459 = pneg %p276
      %p460 = pneg %p273
      %p461 = pneg %p304
      %p462 = pneg %p301
      %s463 = smul.u32 16, %s27
      %p464 = scmp.lt.s32.totalorder %s26, 1
      %s465 = scalar_select %p464, %s26, 1
      %p466 = scmp.lt.s32.totalorder %s463, 15
      %s467 = scalar_select %p466, %s463, 15
      %s468 = smul.addr %s467, 2
      %s469 = smul.addr %s465, 32
      %s470 = sadd.s32 %s468, %s469
      %s471 = smul.addr %s470, 8
      %s472 = scalar_lea.vmem %s10, %s471
      %s473 = smul.u32 16, %s27
      %p474 = scmp.lt.s32.totalorder %s26, 1
      %s475 = scalar_select %p474, %s26, 1
      %p476 = scmp.lt.s32.totalorder %s473, 15
      %s477 = scalar_select %p476, %s473, 15
      %s478 = smul.addr %s477, 4
      %s479 = smul.addr %s475, 64
      %s480 = sadd.s32 %s478, %s479
      %s481 = smul.addr %s480, 8
      %s482 = scalar_lea.vmem %s0, %s481
      %s483 = smul.u32 16, %s27
      %s484 = smul.u32 %s27, 16
      %s485 = ssub.s32 %s484, 1
      %p486 = scmp.gt.s32.totalorder %s485, 0
      %s487 = scalar_select %p486, %s485, 0
      %p488 = scmp.lt.s32.totalorder %s26, 1
      %s489 = scalar_select %p488, %s26, 1
      %p490 = scmp.lt.s32.totalorder %s487, 15
      %s491 = scalar_select %p490, %s487, 15
      %s492 = smul.addr %s491, 4
      %s493 = smul.addr %s489, 64
      %s494 = sadd.s32 %s492, %s493
      %s495 = smul.addr %s494, 8
      %s496 = scalar_lea.vmem %s1, %s495
      %s497 = smul.u32 %s27, 16
      %s498 = ssub.s32 %s497, 1
      %p499 = scmp.gt.s32.totalorder %s498, 0
      %s500 = scalar_select %p499, %s498, 0
      %s501 = sadd.s32 %s27, 1
      %s502 = smul.u32 %s501, 16
      %p503 = scmp.lt.s32.totalorder %s502, 15
      %s504 = scalar_select %p503, %s502, 15
      %p505 = scmp.lt.s32.totalorder %s26, 1
      %s506 = scalar_select %p505, %s26, 1
      %p507 = scmp.lt.s32.totalorder %s504, 15
      %s508 = scalar_select %p507, %s504, 15
      %s509 = smul.addr %s508, 4
      %s510 = smul.addr %s506, 64
      %s511 = sadd.s32 %s509, %s510
      %s512 = smul.addr %s511, 8
      %s513 = scalar_lea.vmem %s2, %s512
      %s514 = sadd.s32 %s27, 1
      %s515 = smul.u32 %s514, 16
      %p516 = scmp.lt.s32.totalorder %s515, 15
      %s517 = scalar_select %p516, %s515, 15
      %s518 = smul.u32 16, %s27
      %p519 = scmp.lt.s32.totalorder %s26, 1
      %s520 = scalar_select %p519, %s26, 1
      %p521 = scmp.lt.s32.totalorder %s518, 15
      %s522 = scalar_select %p521, %s518, 15
      %s523 = smul.addr %s522, 2
      %s524 = smul.addr %s520, 32
      %s525 = sadd.s32 %s523, %s524
      %s526 = smul.addr %s525, 8
      %s527 = scalar_lea.vmem %s10, %s526
      %s528 = smul.u32 16, %s27
      %s529 = sld [smem:[#allocation3]]
      %v530 = vld [vmem:[%s482] sm:$0xff]
      %v531 = vld [vmem:[%s482 + $0x8] sm:$0xff]
      %v532 = vld [vmem:[%s482 + $0x10] sm:$0xff]
      %v533 = vld [vmem:[%s482 + $0x18] sm:$0xff]
      %v534 = vld [vmem:[%s482 + $0x20] sm:$0xff]
      %v535 = vld [vmem:[%s482 + $0x28] sm:$0xff]
      %v536 = vld [vmem:[%s482 + $0x30] sm:$0xff]
      %v537 = vld [vmem:[%s482 + $0x38] sm:$0xff]
      %v538 = vld [vmem:[%s482 + $0x40] sm:$0xff]
      %v539 = vld [vmem:[%s482 + $0x48] sm:$0xff]
      %v540 = vld [vmem:[%s482 + $0x50] sm:$0xff]
      %v541 = vld [vmem:[%s482 + $0x58] sm:$0xff]
      %v542 = vld [vmem:[%s482 + $0x60] sm:$0xff]
      %v543 = vld [vmem:[%s482 + $0x68] sm:$0xff]
      %v544 = vld [vmem:[%s482 + $0x70] sm:$0xff]
      %v545 = vld [vmem:[%s482 + $0x78] sm:$0xff]
      %v546 = vld [vmem:[%s482 + $0x80] sm:$0xff]
      %v547 = vld [vmem:[%s482 + $0x88] sm:$0xff]
      %v548 = vld [vmem:[%s482 + $0x90] sm:$0xff]
      %v549 = vld [vmem:[%s482 + $0x98] sm:$0xff]
      %v550 = vld [vmem:[%s482 + $0xa0] sm:$0xff]
      %v551 = vld [vmem:[%s482 + $0xa8] sm:$0xff]
      %v552 = vld [vmem:[%s482 + $0xb0] sm:$0xff]
      %v553 = vld [vmem:[%s482 + $0xb8] sm:$0xff]
      %v554 = vld [vmem:[%s482 + $0xc0] sm:$0xff]
      %v555 = vld [vmem:[%s482 + $0xc8] sm:$0xff]
      %v556 = vld [vmem:[%s482 + $0xd0] sm:$0xff]
      %v557 = vld [vmem:[%s482 + $0xd8] sm:$0xff]
      %v558 = vld [vmem:[%s482 + $0xe0] sm:$0xff]
      %v559 = vld [vmem:[%s482 + $0xe8] sm:$0xff]
      %v560 = vld [vmem:[%s482 + $0xf0] sm:$0xff]
      %v561 = vld [vmem:[%s482 + $0xf8] sm:$0xff]
      %v562 = vld [vmem:[%s482 + $0x100] sm:$0xff]
      %v563 = vld [vmem:[%s482 + $0x108] sm:$0xff]
      %v564 = vld [vmem:[%s482 + $0x110] sm:$0xff]
      %v565 = vld [vmem:[%s482 + $0x118] sm:$0xff]
      %v566 = vld [vmem:[%s482 + $0x120] sm:$0xff]
      %v567 = vld [vmem:[%s482 + $0x128] sm:$0xff]
      %v568 = vld [vmem:[%s482 + $0x130] sm:$0xff]
      %v569 = vld [vmem:[%s482 + $0x138] sm:$0xff]
      %v570 = vld [vmem:[%s482 + $0x140] sm:$0xff]
      %v571 = vld [vmem:[%s482 + $0x148] sm:$0xff]
      %v572 = vld [vmem:[%s482 + $0x150] sm:$0xff]
      %v573 = vld [vmem:[%s482 + $0x158] sm:$0xff]
      %v574 = vld [vmem:[%s482 + $0x160] sm:$0xff]
      %v575 = vld [vmem:[%s482 + $0x168] sm:$0xff]
      %v576 = vld [vmem:[%s482 + $0x170] sm:$0xff]
      %v577 = vld [vmem:[%s482 + $0x178] sm:$0xff]
      %v578 = vld [vmem:[%s482 + $0x180] sm:$0xff]
      %v579 = vld [vmem:[%s482 + $0x188] sm:$0xff]
      %v580 = vld [vmem:[%s482 + $0x190] sm:$0xff]
      %v581 = vld [vmem:[%s482 + $0x198] sm:$0xff]
      %v582 = vld [vmem:[%s482 + $0x1a0] sm:$0xff]
      %v583 = vld [vmem:[%s482 + $0x1a8] sm:$0xff]
      %v584 = vld [vmem:[%s482 + $0x1b0] sm:$0xff]
      %v585 = vld [vmem:[%s482 + $0x1b8] sm:$0xff]
      %v586 = vld [vmem:[%s482 + $0x1c0] sm:$0xff]
      %v587 = vld [vmem:[%s482 + $0x1c8] sm:$0xff]
      %v588 = vld [vmem:[%s482 + $0x1d0] sm:$0xff]
      %v589 = vld [vmem:[%s482 + $0x1d8] sm:$0xff]
      %v590 = vld [vmem:[%s482 + $0x1e0] sm:$0xff]
      %v591 = vld [vmem:[%s482 + $0x1e8] sm:$0xff]
      %v592 = vld [vmem:[%s482 + $0x1f0] sm:$0xff]
      %v593 = vld [vmem:[%s482 + $0x1f8] sm:$0xff]
      %s594 = scalar_lea.vmem [#allocation2], 32
      %595 = vst [vmem:[%s594] sm:$0xff] %v530
      %596 = vst [vmem:[%s594 + $0x8] sm:$0xff] %v531
      %597 = vst [vmem:[%s594 + $0x10] sm:$0xff] %v532
      %598 = vst [vmem:[%s594 + $0x18] sm:$0xff] %v533
      %599 = vst [vmem:[%s594 + $0x20] sm:$0xff] %v534
      %600 = vst [vmem:[%s594 + $0x28] sm:$0xff] %v535
      %601 = vst [vmem:[%s594 + $0x30] sm:$0xff] %v536
      %602 = vst [vmem:[%s594 + $0x38] sm:$0xff] %v537
      %603 = vst [vmem:[%s594 + $0x40] sm:$0xff] %v538
      %604 = vst [vmem:[%s594 + $0x48] sm:$0xff] %v539
      %605 = vst [vmem:[%s594 + $0x50] sm:$0xff] %v540
      %606 = vst [vmem:[%s594 + $0x58] sm:$0xff] %v541
      %607 = vst [vmem:[%s594 + $0x60] sm:$0xff] %v542
      %608 = vst [vmem:[%s594 + $0x68] sm:$0xff] %v543
      %609 = vst [vmem:[%s594 + $0x70] sm:$0xff] %v544
      %610 = vst [vmem:[%s594 + $0x78] sm:$0xff] %v545
      %611 = vst [vmem:[%s594 + $0x80] sm:$0xff] %v546
      %612 = vst [vmem:[%s594 + $0x88] sm:$0xff] %v547
      %613 = vst [vmem:[%s594 + $0x90] sm:$0xff] %v548
      %614 = vst [vmem:[%s594 + $0x98] sm:$0xff] %v549
      %615 = vst [vmem:[%s594 + $0xa0] sm:$0xff] %v550
      %616 = vst [vmem:[%s594 + $0xa8] sm:$0xff] %v551
      %617 = vst [vmem:[%s594 + $0xb0] sm:$0xff] %v552
      %618 = vst [vmem:[%s594 + $0xb8] sm:$0xff] %v553
      %619 = vst [vmem:[%s594 + $0xc0] sm:$0xff] %v554
      %620 = vst [vmem:[%s594 + $0xc8] sm:$0xff] %v555
      %621 = vst [vmem:[%s594 + $0xd0] sm:$0xff] %v556
      %622 = vst [vmem:[%s594 + $0xd8] sm:$0xff] %v557
      %623 = vst [vmem:[%s594 + $0xe0] sm:$0xff] %v558
      %624 = vst [vmem:[%s594 + $0xe8] sm:$0xff] %v559
      %625 = vst [vmem:[%s594 + $0xf0] sm:$0xff] %v560
      %626 = vst [vmem:[%s594 + $0xf8] sm:$0xff] %v561
      %627 = vst [vmem:[%s594 + $0x100] sm:$0xff] %v562
      %628 = vst [vmem:[%s594 + $0x108] sm:$0xff] %v563
      %629 = vst [vmem:[%s594 + $0x110] sm:$0xff] %v564
      %630 = vst [vmem:[%s594 + $0x118] sm:$0xff] %v565
      %631 = vst [vmem:[%s594 + $0x120] sm:$0xff] %v566
      %632 = vst [vmem:[%s594 + $0x128] sm:$0xff] %v567
      %633 = vst [vmem:[%s594 + $0x130] sm:$0xff] %v568
      %634 = vst [vmem:[%s594 + $0x138] sm:$0xff] %v569
      %635 = vst [vmem:[%s594 + $0x140] sm:$0xff] %v570
      %636 = vst [vmem:[%s594 + $0x148] sm:$0xff] %v571
      %637 = vst [vmem:[%s594 + $0x150] sm:$0xff] %v572
      %638 = vst [vmem:[%s594 + $0x158] sm:$0xff] %v573
      %639 = vst [vmem:[%s594 + $0x160] sm:$0xff] %v574
      %640 = vst [vmem:[%s594 + $0x168] sm:$0xff] %v575
      %641 = vst [vmem:[%s594 + $0x170] sm:$0xff] %v576
      %642 = vst [vmem:[%s594 + $0x178] sm:$0xff] %v577
      %643 = vst [vmem:[%s594 + $0x180] sm:$0xff] %v578
      %644 = vst [vmem:[%s594 + $0x188] sm:$0xff] %v579
      %645 = vst [vmem:[%s594 + $0x190] sm:$0xff] %v580
      %646 = vst [vmem:[%s594 + $0x198] sm:$0xff] %v581
      %647 = vst [vmem:[%s594 + $0x1a0] sm:$0xff] %v582
      %648 = vst [vmem:[%s594 + $0x1a8] sm:$0xff] %v583
      %649 = vst [vmem:[%s594 + $0x1b0] sm:$0xff] %v584
      %650 = vst [vmem:[%s594 + $0x1b8] sm:$0xff] %v585
      %651 = vst [vmem:[%s594 + $0x1c0] sm:$0xff] %v586
      %652 = vst [vmem:[%s594 + $0x1c8] sm:$0xff] %v587
      %653 = vst [vmem:[%s594 + $0x1d0] sm:$0xff] %v588
      %654 = vst [vmem:[%s594 + $0x1d8] sm:$0xff] %v589
      %655 = vst [vmem:[%s594 + $0x1e0] sm:$0xff] %v590
      %656 = vst [vmem:[%s594 + $0x1e8] sm:$0xff] %v591
      %657 = vst [vmem:[%s594 + $0x1f0] sm:$0xff] %v592
      %658 = vst [vmem:[%s594 + $0x1f8] sm:$0xff] %v593
      %v659 = vld [vmem:[%s496] sm:$0xff]
      %v660 = vld [vmem:[%s496 + $0x8] sm:$0xff]
      %v661 = vld [vmem:[%s496 + $0x10] sm:$0xff]
      %v662 = vld [vmem:[%s496 + $0x18] sm:$0xff]
      %v663 = vld [vmem:[%s513] sm:$0xff]
      %v664 = vld [vmem:[%s513 + $0x8] sm:$0xff]
      %v665 = vld [vmem:[%s513 + $0x10] sm:$0xff]
      %v666 = vld [vmem:[%s513 + $0x18] sm:$0xff]
      %p667 = scmp.gt.s32.totalorder %s27, 0
      %s668 = scalar_select %p667, 1, 0
      %v669 = vstv %s668
      %vm670 = vcmp.eq.s32.totalorder %v669, 1
      %v671 = vsel %vm670, %v659, 0.0
      %v672 = vsel %vm670, %v660, 0.0
      %v673 = vsel %vm670, %v661, 0.0
      %v674 = vsel %vm670, %v662, 0.0
      %675 = vst [vmem:[#allocation2] sm:$0xff] %v671
      %676 = vst [vmem:[#allocation2 + $0x8] sm:$0xff] %v672
      %677 = vst [vmem:[#allocation2 + $0x10] sm:$0xff] %v673
      %678 = vst [vmem:[#allocation2 + $0x18] sm:$0xff] %v674
      %p679 = scmp.lt.s32.totalorder %s27, 0
      %s680 = scalar_select %p679, 1, 0
      %v681 = vstv %s680
      %vm682 = vcmp.eq.s32.totalorder %v681, 1
      %v683 = vsel %vm682, %v663, 0.0
      %v684 = vsel %vm682, %v664, 0.0
      %v685 = vsel %vm682, %v665, 0.0
      %v686 = vsel %vm682, %v666, 0.0
      %s687 = scalar_lea.vmem [#allocation2], 544
      %688 = vst [vmem:[%s687] sm:$0xff] %v683
      %689 = vst [vmem:[%s687 + $0x8] sm:$0xff] %v684
      %690 = vst [vmem:[%s687 + $0x10] sm:$0xff] %v685
      %691 = vst [vmem:[%s687 + $0x18] sm:$0xff] %v686
      %v692 = vld [vmem:[#allocation2] sm:$0xff]
      %v693 = vld [vmem:[#allocation2 + $0x8] sm:$0xff]
      %v694 = vld [vmem:[#allocation2 + $0x10] sm:$0xff]
      %v695 = vld [vmem:[#allocation2 + $0x18] sm:$0xff]
      %v696 = vld [vmem:[#allocation2 + $0x20] sm:$0xff]
      %v697 = vld [vmem:[#allocation2 + $0x28] sm:$0xff]
      %v698 = vld [vmem:[#allocation2 + $0x30] sm:$0xff]
      %v699 = vld [vmem:[#allocation2 + $0x38] sm:$0xff]
      %v700 = vld [vmem:[#allocation2 + $0x40] sm:$0xff]
      %v701 = vld [vmem:[#allocation2 + $0x48] sm:$0xff]
      %v702 = vld [vmem:[#allocation2 + $0x50] sm:$0xff]
      %v703 = vld [vmem:[#allocation2 + $0x58] sm:$0xff]
      %v704 = vld [vmem:[#allocation2 + $0x60] sm:$0xff]
      %v705 = vld [vmem:[#allocation2 + $0x68] sm:$0xff]
      %v706 = vld [vmem:[#allocation2 + $0x70] sm:$0xff]
      %v707 = vld [vmem:[#allocation2 + $0x78] sm:$0xff]
      %v708 = vld [vmem:[#allocation2 + $0x80] sm:$0xff]
      %v709 = vld [vmem:[#allocation2 + $0x88] sm:$0xff]
      %v710 = vld [vmem:[#allocation2 + $0x90] sm:$0xff]
      %v711 = vld [vmem:[#allocation2 + $0x98] sm:$0xff]
      %v712 = vld [vmem:[#allocation2 + $0xa0] sm:$0xff]
      %v713 = vld [vmem:[#allocation2 + $0xa8] sm:$0xff]
      %v714 = vld [vmem:[#allocation2 + $0xb0] sm:$0xff]
      %v715 = vld [vmem:[#allocation2 + $0xb8] sm:$0xff]
      %v716 = vld [vmem:[#allocation2 + $0xc0] sm:$0xff]
      %v717 = vld [vmem:[#allocation2 + $0xc8] sm:$0xff]
      %v718 = vld [vmem:[#allocation2 + $0xd0] sm:$0xff]
      %v719 = vld [vmem:[#allocation2 + $0xd8] sm:$0xff]
      %v720 = vld [vmem:[#allocation2 + $0xe0] sm:$0xff]
      %v721 = vld [vmem:[#allocation2 + $0xe8] sm:$0xff]
      %v722 = vld [vmem:[#allocation2 + $0xf0] sm:$0xff]
      %v723 = vld [vmem:[#allocation2 + $0xf8] sm:$0xff]
      %v724 = vld [vmem:[#allocation2 + $0x100] sm:$0xff]
      %v725 = vld [vmem:[#allocation2 + $0x108] sm:$0xff]
      %v726 = vld [vmem:[#allocation2 + $0x110] sm:$0xff]
      %v727 = vld [vmem:[#allocation2 + $0x118] sm:$0xff]
      %v728 = vld [vmem:[#allocation2 + $0x120] sm:$0xff]
      %v729 = vld [vmem:[#allocation2 + $0x128] sm:$0xff]
      %v730 = vld [vmem:[#allocation2 + $0x130] sm:$0xff]
      %v731 = vld [vmem:[#allocation2 + $0x138] sm:$0xff]
      %v732 = vld [vmem:[#allocation2 + $0x140] sm:$0xff]
      %v733 = vld [vmem:[#allocation2 + $0x148] sm:$0xff]
      %v734 = vld [vmem:[#allocation2 + $0x150] sm:$0xff]
      %v735 = vld [vmem:[#allocation2 + $0x158] sm:$0xff]
      %v736 = vld [vmem:[#allocation2 + $0x160] sm:$0xff]
      %v737 = vld [vmem:[#allocation2 + $0x168] sm:$0xff]
      %v738 = vld [vmem:[#allocation2 + $0x170] sm:$0xff]
      %v739 = vld [vmem:[#allocation2 + $0x178] sm:$0xff]
      %v740 = vld [vmem:[#allocation2 + $0x180] sm:$0xff]
      %v741 = vld [vmem:[#allocation2 + $0x188] sm:$0xff]
      %v742 = vld [vmem:[#allocation2 + $0x190] sm:$0xff]
      %v743 = vld [vmem:[#allocation2 + $0x198] sm:$0xff]
      %v744 = vld [vmem:[#allocation2 + $0x1a0] sm:$0xff]
      %v745 = vld [vmem:[#allocation2 + $0x1a8] sm:$0xff]
      %v746 = vld [vmem:[#allocation2 + $0x1b0] sm:$0xff]
      %v747 = vld [vmem:[#allocation2 + $0x1b8] sm:$0xff]
      %v748 = vld [vmem:[#allocation2 + $0x1c0] sm:$0xff]
      %v749 = vld [vmem:[#allocation2 + $0x1c8] sm:$0xff]
      %v750 = vld [vmem:[#allocation2 + $0x1d0] sm:$0xff]
      %v751 = vld [vmem:[#allocation2 + $0x1d8] sm:$0xff]
      %v752 = vld [vmem:[#allocation2 + $0x1e0] sm:$0xff]
      %v753 = vld [vmem:[#allocation2 + $0x1e8] sm:$0xff]
      %v754 = vld [vmem:[#allocation2 + $0x1f0] sm:$0xff]
      %v755 = vld [vmem:[#allocation2 + $0x1f8] sm:$0xff]
      %v756 = vld [vmem:[#allocation2 + $0x200] sm:$0xff]
      %v757 = vld [vmem:[#allocation2 + $0x208] sm:$0xff]
      %v758 = vld [vmem:[#allocation2 + $0x210] sm:$0xff]
      %v759 = vld [vmem:[#allocation2 + $0x218] sm:$0xff]
      %v760 = vld [vmem:[#allocation2 + $0x220] sm:$0xff]
      %v761 = vld [vmem:[#allocation2 + $0x228] sm:$0xff]
      %v762 = vld [vmem:[#allocation2 + $0x230] sm:$0xff]
      %v763 = vld [vmem:[#allocation2 + $0x238] sm:$0xff]
      %v764 = vrot.slane %v692, 1
      %v765 = vrot.slane %v693, 1
      %v766 = vrot.slane %v694, 1
      %v767 = vrot.slane %v695, 1
      %v768 = vrot.slane %v696, 1
      %v769 = vrot.slane %v697, 1
      %v770 = vrot.slane %v698, 1
      %v771 = vrot.slane %v699, 1
      %v772 = vrot.slane %v700, 1
      %v773 = vrot.slane %v701, 1
      %v774 = vrot.slane %v702, 1
      %v775 = vrot.slane %v703, 1
      %v776 = vrot.slane %v704, 1
      %v777 = vrot.slane %v705, 1
      %v778 = vrot.slane %v706, 1
      %v779 = vrot.slane %v707, 1
      %v780 = vrot.slane %v708, 1
      %v781 = vrot.slane %v709, 1
      %v782 = vrot.slane %v710, 1
      %v783 = vrot.slane %v711, 1
      %v784 = vrot.slane %v712, 1
      %v785 = vrot.slane %v713, 1
      %v786 = vrot.slane %v714, 1
      %v787 = vrot.slane %v715, 1
      %v788 = vrot.slane %v716, 1
      %v789 = vrot.slane %v717, 1
      %v790 = vrot.slane %v718, 1
      %v791 = vrot.slane %v719, 1
      %v792 = vrot.slane %v720, 1
      %v793 = vrot.slane %v721, 1
      %v794 = vrot.slane %v722, 1
      %v795 = vrot.slane %v723, 1
      %v796 = vrot.slane %v724, 1
      %v797 = vrot.slane %v725, 1
      %v798 = vrot.slane %v726, 1
      %v799 = vrot.slane %v727, 1
      %v800 = vrot.slane %v728, 1
      %v801 = vrot.slane %v729, 1
      %v802 = vrot.slane %v730, 1
      %v803 = vrot.slane %v731, 1
      %v804 = vrot.slane %v732, 1
      %v805 = vrot.slane %v733, 1
      %v806 = vrot.slane %v734, 1
      %v807 = vrot.slane %v735, 1
      %v808 = vrot.slane %v736, 1
      %v809 = vrot.slane %v737, 1
      %v810 = vrot.slane %v738, 1
      %v811 = vrot.slane %v739, 1
      %v812 = vrot.slane %v740, 1
      %v813 = vrot.slane %v741, 1
      %v814 = vrot.slane %v742, 1
      %v815 = vrot.slane %v743, 1
      %v816 = vrot.slane %v744, 1
      %v817 = vrot.slane %v745, 1
      %v818 = vrot.slane %v746, 1
      %v819 = vrot.slane %v747, 1
      %v820 = vrot.slane %v748, 1
      %v821 = vrot.slane %v749, 1
      %v822 = vrot.slane %v750, 1
      %v823 = vrot.slane %v751, 1
      %v824 = vrot.slane %v752, 1
      %v825 = vrot.slane %v753, 1
      %v826 = vrot.slane %v754, 1
      %v827 = vrot.slane %v755, 1
      %v828 = vrot.slane %v756, 1
      %v829 = vrot.slane %v757, 1
      %v830 = vrot.slane %v758, 1
      %v831 = vrot.slane %v759, 1
      %v832 = vrot.slane %v760, 1
      %v833 = vrot.slane %v761, 1
      %v834 = vrot.slane %v762, 1
      %v835 = vrot.slane %v763, 1
      %v836 = vlaneseq
      %v837 = vshrl.u32 %v836, 7
      %vm838 = vcmp.lt.s32.totalorder %v837, 7
      %v839 = vsel %vm838, %v834, %v835
      %v840 = vsel %vm838, %v833, %v834
      %v841 = vsel %vm838, %v832, %v833
      %v842 = vsel %vm838, %v831, %v832
      %v843 = vsel %vm838, %v830, %v831
      %v844 = vsel %vm838, %v829, %v830
      %v845 = vsel %vm838, %v828, %v829
      %v846 = vsel %vm838, %v827, %v828
      %v847 = vsel %vm838, %v826, %v827
      %v848 = vsel %vm838, %v825, %v826
      %v849 = vsel %vm838, %v824, %v825
      %v850 = vsel %vm838, %v823, %v824
      %v851 = vsel %vm838, %v822, %v823
      %v852 = vsel %vm838, %v821, %v822
      %v853 = vsel %vm838, %v820, %v821
      %v854 = vsel %vm838, %v819, %v820
      %v855 = vsel %vm838, %v818, %v819
      %v856 = vsel %vm838, %v817, %v818
      %v857 = vsel %vm838, %v816, %v817
      %v858 = vsel %vm838, %v815, %v816
      %v859 = vsel %vm838, %v814, %v815
      %v860 = vsel %vm838, %v813, %v814
      %v861 = vsel %vm838, %v812, %v813
      %v862 = vsel %vm838, %v811, %v812
      %v863 = vsel %vm838, %v810, %v811
      %v864 = vsel %vm838, %v809, %v810
      %v865 = vsel %vm838, %v808, %v809
      %v866 = vsel %vm838, %v807, %v808
      %v867 = vsel %vm838, %v806, %v807
      %v868 = vsel %vm838, %v805, %v806
      %v869 = vsel %vm838, %v804, %v805
      %v870 = vsel %vm838, %v803, %v804
      %v871 = vsel %vm838, %v802, %v803
      %v872 = vsel %vm838, %v801, %v802
      %v873 = vsel %vm838, %v800, %v801
      %v874 = vsel %vm838, %v799, %v800
      %v875 = vsel %vm838, %v798, %v799
      %v876 = vsel %vm838, %v797, %v798
      %v877 = vsel %vm838, %v796, %v797
      %v878 = vsel %vm838, %v795, %v796
      %v879 = vsel %vm838, %v794, %v795
      %v880 = vsel %vm838, %v793, %v794
      %v881 = vsel %vm838, %v792, %v793
      %v882 = vsel %vm838, %v791, %v792
      %v883 = vsel %vm838, %v790, %v791
      %v884 = vsel %vm838, %v789, %v790
      %v885 = vsel %vm838, %v788, %v789
      %v886 = vsel %vm838, %v787, %v788
      %v887 = vsel %vm838, %v786, %v787
      %v888 = vsel %vm838, %v785, %v786
      %v889 = vsel %vm838, %v784, %v785
      %v890 = vsel %vm838, %v783, %v784
      %v891 = vsel %vm838, %v782, %v783
      %v892 = vsel %vm838, %v781, %v782
      %v893 = vsel %vm838, %v780, %v781
      %v894 = vsel %vm838, %v779, %v780
      %v895 = vsel %vm838, %v778, %v779
      %v896 = vsel %vm838, %v777, %v778
      %v897 = vsel %vm838, %v776, %v777
      %v898 = vsel %vm838, %v775, %v776
      %v899 = vsel %vm838, %v774, %v775
      %v900 = vsel %vm838, %v773, %v774
      %v901 = vsel %vm838, %v772, %v773
      %v902 = vsel %vm838, %v771, %v772
      %v903 = vsel %vm838, %v770, %v771
      %v904 = vsel %vm838, %v769, %v770
      %v905 = vsel %vm838, %v768, %v769
      %v906 = vsel %vm838, %v767, %v768
      %v907 = vsel %vm838, %v766, %v767
      %v908 = vsel %vm838, %v765, %v766
      %v909 = vsel %vm838, %v764, %v765
      %v910 = vsel %vm838, %v835, %v764
      %v911 = vrot.slane %v692, 2
      %v912 = vrot.slane %v693, 2
      %v913 = vrot.slane %v694, 2
      %v914 = vrot.slane %v695, 2
      %v915 = vrot.slane %v696, 2
      %v916 = vrot.slane %v697, 2
      %v917 = vrot.slane %v698, 2
      %v918 = vrot.slane %v699, 2
      %v919 = vrot.slane %v700, 2
      %v920 = vrot.slane %v701, 2
      %v921 = vrot.slane %v702, 2
      %v922 = vrot.slane %v703, 2
      %v923 = vrot.slane %v704, 2
      %v924 = vrot.slane %v705, 2
      %v925 = vrot.slane %v706, 2
      %v926 = vrot.slane %v707, 2
      %v927 = vrot.slane %v708, 2
      %v928 = vrot.slane %v709, 2
      %v929 = vrot.slane %v710, 2
      %v930 = vrot.slane %v711, 2
      %v931 = vrot.slane %v712, 2
      %v932 = vrot.slane %v713, 2
      %v933 = vrot.slane %v714, 2
      %v934 = vrot.slane %v715, 2
      %v935 = vrot.slane %v716, 2
      %v936 = vrot.slane %v717, 2
      %v937 = vrot.slane %v718, 2
      %v938 = vrot.slane %v719, 2
      %v939 = vrot.slane %v720, 2
      %v940 = vrot.slane %v721, 2
      %v941 = vrot.slane %v722, 2
      %v942 = vrot.slane %v723, 2
      %v943 = vrot.slane %v724, 2
      %v944 = vrot.slane %v725, 2
      %v945 = vrot.slane %v726, 2
      %v946 = vrot.slane %v727, 2
      %v947 = vrot.slane %v728, 2
      %v948 = vrot.slane %v729, 2
      %v949 = vrot.slane %v730, 2
      %v950 = vrot.slane %v731, 2
      %v951 = vrot.slane %v732, 2
      %v952 = vrot.slane %v733, 2
      %v953 = vrot.slane %v734, 2
      %v954 = vrot.slane %v735, 2
      %v955 = vrot.slane %v736, 2
      %v956 = vrot.slane %v737, 2
      %v957 = vrot.slane %v738, 2
      %v958 = vrot.slane %v739, 2
      %v959 = vrot.slane %v740, 2
      %v960 = vrot.slane %v741, 2
      %v961 = vrot.slane %v742, 2
      %v962 = vrot.slane %v743, 2
      %v963 = vrot.slane %v744, 2
      %v964 = vrot.slane %v745, 2
      %v965 = vrot.slane %v746, 2
      %v966 = vrot.slane %v747, 2
      %v967 = vrot.slane %v748, 2
      %v968 = vrot.slane %v749, 2
      %v969 = vrot.slane %v750, 2
      %v970 = vrot.slane %v751, 2
      %v971 = vrot.slane %v752, 2
      %v972 = vrot.slane %v753, 2
      %v973 = vrot.slane %v754, 2
      %v974 = vrot.slane %v755, 2
      %v975 = vrot.slane %v756, 2
      %v976 = vrot.slane %v757, 2
      %v977 = vrot.slane %v758, 2
      %v978 = vrot.slane %v759, 2
      %v979 = vrot.slane %v760, 2
      %v980 = vrot.slane %v761, 2
      %v981 = vrot.slane %v762, 2
      %v982 = vrot.slane %v763, 2
      %vm983 = vcmp.lt.s32.totalorder %v837, 6
      %v984 = vsel %vm983, %v981, %v982
      %v985 = vsel %vm983, %v980, %v981
      %v986 = vsel %vm983, %v979, %v980
      %v987 = vsel %vm983, %v978, %v979
      %v988 = vsel %vm983, %v977, %v978
      %v989 = vsel %vm983, %v976, %v977
      %v990 = vsel %vm983, %v975, %v976
      %v991 = vsel %vm983, %v974, %v975
      %v992 = vsel %vm983, %v973, %v974
      %v993 = vsel %vm983, %v972, %v973
      %v994 = vsel %vm983, %v971, %v972
      %v995 = vsel %vm983, %v970, %v971
      %v996 = vsel %vm983, %v969, %v970
      %v997 = vsel %vm983, %v968, %v969
      %v998 = vsel %vm983, %v967, %v968
      %v999 = vsel %vm983, %v966, %v967
      %v1000 = vsel %vm983, %v965, %v966
      %v1001 = vsel %vm983, %v964, %v965
      %v1002 = vsel %vm983, %v963, %v964
      %v1003 = vsel %vm983, %v962, %v963
      %v1004 = vsel %vm983, %v961, %v962
      %v1005 = vsel %vm983, %v960, %v961
      %v1006 = vsel %vm983, %v959, %v960
      %v1007 = vsel %vm983, %v958, %v959
      %v1008 = vsel %vm983, %v957, %v958
      %v1009 = vsel %vm983, %v956, %v957
      %v1010 = vsel %vm983, %v955, %v956
      %v1011 = vsel %vm983, %v954, %v955
      %v1012 = vsel %vm983, %v953, %v954
      %v1013 = vsel %vm983, %v952, %v953
      %v1014 = vsel %vm983, %v951, %v952
      %v1015 = vsel %vm983, %v950, %v951
      %v1016 = vsel %vm983, %v949, %v950
      %v1017 = vsel %vm983, %v948, %v949
      %v1018 = vsel %vm983, %v947, %v948
      %v1019 = vsel %vm983, %v946, %v947
      %v1020 = vsel %vm983, %v945, %v946
      %v1021 = vsel %vm983, %v944, %v945
      %v1022 = vsel %vm983, %v943, %v944
      %v1023 = vsel %vm983, %v942, %v943
      %v1024 = vsel %vm983, %v941, %v942
      %v1025 = vsel %vm983, %v940, %v941
      %v1026 = vsel %vm983, %v939, %v940
      %v1027 = vsel %vm983, %v938, %v939
      %v1028 = vsel %vm983, %v937, %v938
      %v1029 = vsel %vm983, %v936, %v937
      %v1030 = vsel %vm983, %v935, %v936
      %v1031 = vsel %vm983, %v934, %v935
      %v1032 = vsel %vm983, %v933, %v934
      %v1033 = vsel %vm983, %v932, %v933
      %v1034 = vsel %vm983, %v931, %v932
      %v1035 = vsel %vm983, %v930, %v931
      %v1036 = vsel %vm983, %v929, %v930
      %v1037 = vsel %vm983, %v928, %v929
      %v1038 = vsel %vm983, %v927, %v928
      %v1039 = vsel %vm983, %v926, %v927
      %v1040 = vsel %vm983, %v925, %v926
      %v1041 = vsel %vm983, %v924, %v925
      %v1042 = vsel %vm983, %v923, %v924
      %v1043 = vsel %vm983, %v922, %v923
      %v1044 = vsel %vm983, %v921, %v922
      %v1045 = vsel %vm983, %v920, %v921
      %v1046 = vsel %vm983, %v919, %v920
      %v1047 = vsel %vm983, %v918, %v919
      %v1048 = vsel %vm983, %v917, %v918
      %v1049 = vsel %vm983, %v916, %v917
      %v1050 = vsel %vm983, %v915, %v916
      %v1051 = vsel %vm983, %v914, %v915
      %v1052 = vsel %vm983, %v913, %v914
      %v1053 = vsel %vm983, %v912, %v913
      %v1054 = vsel %vm983, %v911, %v912
      %v1055 = vsel %vm983, %v982, %v911
      %v1056 = vld [vmem:[%s3] sm:$0xff]
      %v1057 = vld [vmem:[%s3 + $0x8] sm:$0xff]
      %v1058 = vld [vmem:[%s3 + $0x10] sm:$0xff]
      %v1059 = vld [vmem:[%s3 + $0x18] sm:$0xff]
      %v1060 = vld [vmem:[%s3 + $0x20] sm:$0xff]
      %v1061 = vld [vmem:[%s3 + $0x28] sm:$0xff]
      %v1062 = vld [vmem:[%s3 + $0x30] sm:$0xff]
      %v1063 = vld [vmem:[%s3 + $0x38] sm:$0xff]
      %v1064 = vld [vmem:[%s3 + $0x40] sm:$0xff]
      %v1065 = vld [vmem:[%s3 + $0x48] sm:$0xff]
      %v1066 = vld [vmem:[%s3 + $0x50] sm:$0xff]
      %v1067 = vld [vmem:[%s3 + $0x58] sm:$0xff]
      %v1068 = vld [vmem:[%s3 + $0x60] sm:$0xff]
      %v1069 = vld [vmem:[%s3 + $0x68] sm:$0xff]
      %v1070 = vld [vmem:[%s3 + $0x70] sm:$0xff]
      %v1071 = vld [vmem:[%s3 + $0x78] sm:$0xff]
      %v1072 = vld [vmem:[%s3 + $0x80] sm:$0xff]
      %v1073 = vld [vmem:[%s3 + $0x88] sm:$0xff]
      %v1074 = vld [vmem:[%s3 + $0x90] sm:$0xff]
      %v1075 = vld [vmem:[%s3 + $0x98] sm:$0xff]
      %v1076 = vld [vmem:[%s3 + $0xa0] sm:$0xff]
      %v1077 = vld [vmem:[%s3 + $0xa8] sm:$0xff]
      %v1078 = vld [vmem:[%s3 + $0xb0] sm:$0xff]
      %v1079 = vld [vmem:[%s3 + $0xb8] sm:$0xff]
      %v1080 = vld [vmem:[%s3 + $0xc0] sm:$0xff]
      %v1081 = vld [vmem:[%s3 + $0xc8] sm:$0xff]
      %v1082 = vld [vmem:[%s3 + $0xd0] sm:$0xff]
      %v1083 = vld [vmem:[%s3 + $0xd8] sm:$0xff]
      %v1084 = vld [vmem:[%s3 + $0xe0] sm:$0xff]
      %v1085 = vld [vmem:[%s3 + $0xe8] sm:$0xff]
      %v1086 = vld [vmem:[%s3 + $0xf0] sm:$0xff]
      %v1087 = vld [vmem:[%s3 + $0xf8] sm:$0xff]
      %v1088 = vld [vmem:[%s3 + $0x100] sm:$0xff]
      %v1089 = vld [vmem:[%s3 + $0x108] sm:$0xff]
      %v1090 = vld [vmem:[%s3 + $0x110] sm:$0xff]
      %v1091 = vld [vmem:[%s3 + $0x118] sm:$0xff]
      %v1092 = vld [vmem:[%s3 + $0x120] sm:$0xff]
      %v1093 = vld [vmem:[%s3 + $0x128] sm:$0xff]
      %v1094 = vld [vmem:[%s3 + $0x130] sm:$0xff]
      %v1095 = vld [vmem:[%s3 + $0x138] sm:$0xff]
      %v1096 = vld [vmem:[%s3 + $0x140] sm:$0xff]
      %v1097 = vld [vmem:[%s3 + $0x148] sm:$0xff]
      %v1098 = vld [vmem:[%s3 + $0x150] sm:$0xff]
      %v1099 = vld [vmem:[%s3 + $0x158] sm:$0xff]
      %v1100 = vld [vmem:[%s3 + $0x160] sm:$0xff]
      %v1101 = vld [vmem:[%s3 + $0x168] sm:$0xff]
      %v1102 = vld [vmem:[%s3 + $0x170] sm:$0xff]
      %v1103 = vld [vmem:[%s3 + $0x178] sm:$0xff]
      %s1104 = scalar_lea.vmem %s3, 384
      %v1105 = vld [vmem:[%s1104] sm:$0xff]
      %v1106 = vld [vmem:[%s1104 + $0x8] sm:$0xff]
      %v1107 = vld [vmem:[%s1104 + $0x10] sm:$0xff]
      %v1108 = vld [vmem:[%s1104 + $0x18] sm:$0xff]
      %v1109 = vld [vmem:[%s1104 + $0x20] sm:$0xff]
      %v1110 = vld [vmem:[%s1104 + $0x28] sm:$0xff]
      %v1111 = vld [vmem:[%s1104 + $0x30] sm:$0xff]
      %v1112 = vld [vmem:[%s1104 + $0x38] sm:$0xff]
      %v1113 = vld [vmem:[%s1104 + $0x40] sm:$0xff]
      %v1114 = vld [vmem:[%s1104 + $0x48] sm:$0xff]
      %v1115 = vld [vmem:[%s1104 + $0x50] sm:$0xff]
      %v1116 = vld [vmem:[%s1104 + $0x58] sm:$0xff]
      %v1117 = vld [vmem:[%s1104 + $0x60] sm:$0xff]
      %v1118 = vld [vmem:[%s1104 + $0x68] sm:$0xff]
      %v1119 = vld [vmem:[%s1104 + $0x70] sm:$0xff]
      %v1120 = vld [vmem:[%s1104 + $0x78] sm:$0xff]
      %v1121 = vld [vmem:[%s1104 + $0x80] sm:$0xff]
      %v1122 = vld [vmem:[%s1104 + $0x88] sm:$0xff]
      %v1123 = vld [vmem:[%s1104 + $0x90] sm:$0xff]
      %v1124 = vld [vmem:[%s1104 + $0x98] sm:$0xff]
      %v1125 = vld [vmem:[%s1104 + $0xa0] sm:$0xff]
      %v1126 = vld [vmem:[%s1104 + $0xa8] sm:$0xff]
      %v1127 = vld [vmem:[%s1104 + $0xb0] sm:$0xff]
      %v1128 = vld [vmem:[%s1104 + $0xb8] sm:$0xff]
      %v1129 = vld [vmem:[%s1104 + $0xc0] sm:$0xff]
      %v1130 = vld [vmem:[%s1104 + $0xc8] sm:$0xff]
      %v1131 = vld [vmem:[%s1104 + $0xd0] sm:$0xff]
      %v1132 = vld [vmem:[%s1104 + $0xd8] sm:$0xff]
      %v1133 = vld [vmem:[%s1104 + $0xe0] sm:$0xff]
      %v1134 = vld [vmem:[%s1104 + $0xe8] sm:$0xff]
      %v1135 = vld [vmem:[%s1104 + $0xf0] sm:$0xff]
      %v1136 = vld [vmem:[%s1104 + $0xf8] sm:$0xff]
      %v1137 = vld [vmem:[%s1104 + $0x100] sm:$0xff]
      %v1138 = vld [vmem:[%s1104 + $0x108] sm:$0xff]
      %v1139 = vld [vmem:[%s1104 + $0x110] sm:$0xff]
      %v1140 = vld [vmem:[%s1104 + $0x118] sm:$0xff]
      %v1141 = vld [vmem:[%s1104 + $0x120] sm:$0xff]
      %v1142 = vld [vmem:[%s1104 + $0x128] sm:$0xff]
      %v1143 = vld [vmem:[%s1104 + $0x130] sm:$0xff]
      %v1144 = vld [vmem:[%s1104 + $0x138] sm:$0xff]
      %v1145 = vld [vmem:[%s1104 + $0x140] sm:$0xff]
      %v1146 = vld [vmem:[%s1104 + $0x148] sm:$0xff]
      %v1147 = vld [vmem:[%s1104 + $0x150] sm:$0xff]
      %v1148 = vld [vmem:[%s1104 + $0x158] sm:$0xff]
      %v1149 = vld [vmem:[%s1104 + $0x160] sm:$0xff]
      %v1150 = vld [vmem:[%s1104 + $0x168] sm:$0xff]
      %v1151 = vld [vmem:[%s1104 + $0x170] sm:$0xff]
      %v1152 = vld [vmem:[%s1104 + $0x178] sm:$0xff]
      %1153 = vmatprep.subr.mxu0 0.0
      %1154 = vmatpush1.msra.mxu0 %v1120
      %1155 = vmatprep.subr.mxu0 0.0
      %1156 = vmatpush1.msra.mxu0 %v1119
      %1157 = vmatprep.subr.mxu0 0.0
      %1158 = vmatpush1.msra.mxu0 %v1118
      %1159 = vmatprep.subr.mxu0 0.0
      %1160 = vmatpush1.msra.mxu0 %v1117
      %1161 = vmatprep.subr.mxu0 0.0
      %1162 = vmatpush1.msra.mxu0 %v1116
      %1163 = vmatprep.subr.mxu0 0.0
      %1164 = vmatpush1.msra.mxu0 %v1115
      %1165 = vmatprep.subr.mxu0 0.0
      %1166 = vmatpush1.msra.mxu0 %v1114
      %1167 = vmatprep.subr.mxu0 0.0
      %1168 = vmatpush1.msra.mxu0 %v1113
      %1169 = vmatprep.subr.mxu0 0.0
      %1170 = vmatpush1.msra.mxu0 %v1112
      %1171 = vmatprep.subr.mxu0 0.0
      %1172 = vmatpush1.msra.mxu0 %v1111
      %1173 = vmatprep.subr.mxu0 0.0
      %1174 = vmatpush1.msra.mxu0 %v1110
      %1175 = vmatprep.subr.mxu0 0.0
      %1176 = vmatpush1.msra.mxu0 %v1109
      %1177 = vmatprep.subr.mxu0 0.0
      %1178 = vmatpush1.msra.mxu0 %v1108
      %1179 = vmatprep.subr.mxu0 0.0
      %1180 = vmatpush1.msra.mxu0 %v1107
      %1181 = vmatprep.subr.mxu0 0.0
      %1182 = vmatpush1.msra.mxu0 %v1106
      %1183 = vmatprep.subr.mxu0 0.0
      %1184 = vmatpush1.msra.mxu0 %v1105
      %1185 = vmatprep.subr.mxu0 0.0
      %1186 = vmatpush2.msra.mxu0 %v1136
      %1187 = vmatprep.subr.mxu0 0.0
      %1188 = vmatpush2.msra.mxu0 %v1135
      %1189 = vmatprep.subr.mxu0 0.0
      %1190 = vmatpush2.msra.mxu0 %v1134
      %1191 = vmatprep.subr.mxu0 0.0
      %1192 = vmatpush2.msra.mxu0 %v1133
      %1193 = vmatprep.subr.mxu0 0.0
      %1194 = vmatpush2.msra.mxu0 %v1132
      %1195 = vmatprep.subr.mxu0 0.0
      %1196 = vmatpush2.msra.mxu0 %v1131
      %1197 = vmatprep.subr.mxu0 0.0
      %1198 = vmatpush2.msra.mxu0 %v1130
      %1199 = vmatprep.subr.mxu0 0.0
      %1200 = vmatpush2.msra.mxu0 %v1129
      %1201 = vmatprep.subr.mxu0 0.0
      %1202 = vmatpush2.msra.mxu0 %v1128
      %1203 = vmatprep.subr.mxu0 0.0
      %1204 = vmatpush2.msra.mxu0 %v1127
      %1205 = vmatprep.subr.mxu0 0.0
      %1206 = vmatpush2.msra.mxu0 %v1126
      %1207 = vmatprep.subr.mxu0 0.0
      %1208 = vmatpush2.msra.mxu0 %v1125
      %1209 = vmatprep.subr.mxu0 0.0
      %1210 = vmatpush2.msra.mxu0 %v1124
      %1211 = vmatprep.subr.mxu0 0.0
      %1212 = vmatpush2.msra.mxu0 %v1123
      %1213 = vmatprep.subr.mxu0 0.0
      %1214 = vmatpush2.msra.mxu0 %v1122
      %1215 = vmatprep.subr.mxu0 0.0
      %1216 = vmatpush2.msra.mxu0 %v1121
      %1217 = vmatprep.mubr.f32.mxu0 %v905
      %1218 = vmatmul.mubr.f32.gmra.mxu0 %v696
      %v1219 = vpop.f32.mrf.mxu0
      %v1220 = vadd.f32 0.0, %v1219
      %v1221 = vpop.f32.mrf.mxu0
      %1222 = vmatprep.mubr.f32.mxu0 %v904
      %1223 = vmatmul.mubr.f32.gmra.mxu0 %v697
      %v1224 = vpop.f32.mrf.mxu0
      %v1225 = vadd.f32 0.0, %v1224
      %v1226 = vpop.f32.mrf.mxu0
      %1227 = vmatprep.mubr.f32.mxu0 %v903
      %1228 = vmatmul.mubr.f32.gmra.mxu0 %v698
      %v1229 = vpop.f32.mrf.mxu0
      %v1230 = vadd.f32 0.0, %v1229
      %v1231 = vpop.f32.mrf.mxu0
      %1232 = vmatprep.mubr.f32.mxu0 %v902
      %1233 = vmatmul.mubr.f32.gmra.mxu0 %v699
      %v1234 = vpop.f32.mrf.mxu0
      %v1235 = vadd.f32 0.0, %v1234
      %v1236 = vpop.f32.mrf.mxu0
      %1237 = vmatprep.mubr.f32.mxu0 %v901
      %1238 = vmatmul.mubr.f32.gmra.mxu0 %v700
      %v1239 = vpop.f32.mrf.mxu0
      %v1240 = vadd.f32 0.0, %v1239
      %v1241 = vpop.f32.mrf.mxu0
      %1242 = vmatprep.mubr.f32.mxu0 %v900
      %1243 = vmatmul.mubr.f32.gmra.mxu0 %v701
      %v1244 = vpop.f32.mrf.mxu0
      %v1245 = vadd.f32 0.0, %v1244
      %v1246 = vpop.f32.mrf.mxu0
      %1247 = vmatprep.mubr.f32.mxu0 %v899
      %1248 = vmatmul.mubr.f32.gmra.mxu0 %v702
      %v1249 = vpop.f32.mrf.mxu0
      %v1250 = vadd.f32 0.0, %v1249
      %v1251 = vpop.f32.mrf.mxu0
      %1252 = vmatprep.mubr.f32.mxu0 %v898
      %1253 = vmatmul.mubr.f32.gmra.mxu0 %v703
      %v1254 = vpop.f32.mrf.mxu0
      %v1255 = vadd.f32 0.0, %v1254
      %v1256 = vpop.f32.mrf.mxu0
      %1257 = vmatprep.mubr.f32.mxu0 %v897
      %1258 = vmatmul.mubr.f32.gmra.mxu0 %v704
      %v1259 = vpop.f32.mrf.mxu0
      %v1260 = vadd.f32 0.0, %v1259
      %v1261 = vpop.f32.mrf.mxu0
      %1262 = vmatprep.mubr.f32.mxu0 %v896
      %1263 = vmatmul.mubr.f32.gmra.mxu0 %v705
      %v1264 = vpop.f32.mrf.mxu0
      %v1265 = vadd.f32 0.0, %v1264
      %v1266 = vpop.f32.mrf.mxu0
      %1267 = vmatprep.mubr.f32.mxu0 %v895
      %1268 = vmatmul.mubr.f32.gmra.mxu0 %v706
      %v1269 = vpop.f32.mrf.mxu0
      %v1270 = vadd.f32 0.0, %v1269
      %v1271 = vpop.f32.mrf.mxu0
      %1272 = vmatprep.mubr.f32.mxu0 %v894
      %1273 = vmatmul.mubr.f32.gmra.mxu0 %v707
      %v1274 = vpop.f32.mrf.mxu0
      %v1275 = vadd.f32 0.0, %v1274
      %v1276 = vpop.f32.mrf.mxu0
      %1277 = vmatprep.mubr.f32.mxu0 %v893
      %1278 = vmatmul.mubr.f32.gmra.mxu0 %v708
      %v1279 = vpop.f32.mrf.mxu0
      %v1280 = vadd.f32 0.0, %v1279
      %v1281 = vpop.f32.mrf.mxu0
      %1282 = vmatprep.mubr.f32.mxu0 %v892
      %1283 = vmatmul.mubr.f32.gmra.mxu0 %v709
      %v1284 = vpop.f32.mrf.mxu0
      %v1285 = vadd.f32 0.0, %v1284
      %v1286 = vpop.f32.mrf.mxu0
      %1287 = vmatprep.mubr.f32.mxu0 %v891
      %1288 = vmatmul.mubr.f32.gmra.mxu0 %v710
      %v1289 = vpop.f32.mrf.mxu0
      %v1290 = vadd.f32 0.0, %v1289
      %v1291 = vpop.f32.mrf.mxu0
      %1292 = vmatprep.mubr.f32.mxu0 %v890
      %1293 = vmatmul.mubr.f32.gmra.mxu0 %v711
      %v1294 = vpop.f32.mrf.mxu0
      %v1295 = vadd.f32 0.0, %v1294
      %v1296 = vpop.f32.mrf.mxu0
      %1297 = vmatprep.mubr.f32.mxu0 %v889
      %1298 = vmatmul.mubr.f32.gmra.mxu0 %v712
      %v1299 = vpop.f32.mrf.mxu0
      %v1300 = vadd.f32 0.0, %v1299
      %v1301 = vpop.f32.mrf.mxu0
      %1302 = vmatprep.mubr.f32.mxu0 %v888
      %1303 = vmatmul.mubr.f32.gmra.mxu0 %v713
      %v1304 = vpop.f32.mrf.mxu0
      %v1305 = vadd.f32 0.0, %v1304
      %v1306 = vpop.f32.mrf.mxu0
      %1307 = vmatprep.mubr.f32.mxu0 %v887
      %1308 = vmatmul.mubr.f32.gmra.mxu0 %v714
      %v1309 = vpop.f32.mrf.mxu0
      %v1310 = vadd.f32 0.0, %v1309
      %v1311 = vpop.f32.mrf.mxu0
      %1312 = vmatprep.mubr.f32.mxu0 %v886
      %1313 = vmatmul.mubr.f32.gmra.mxu0 %v715
      %v1314 = vpop.f32.mrf.mxu0
      %v1315 = vadd.f32 0.0, %v1314
      %v1316 = vpop.f32.mrf.mxu0
      %1317 = vmatprep.mubr.f32.mxu0 %v885
      %1318 = vmatmul.mubr.f32.gmra.mxu0 %v716
      %v1319 = vpop.f32.mrf.mxu0
      %v1320 = vadd.f32 0.0, %v1319
      %v1321 = vpop.f32.mrf.mxu0
      %1322 = vmatprep.mubr.f32.mxu0 %v884
      %1323 = vmatmul.mubr.f32.gmra.mxu0 %v717
      %v1324 = vpop.f32.mrf.mxu0
      %v1325 = vadd.f32 0.0, %v1324
      %v1326 = vpop.f32.mrf.mxu0
      %1327 = vmatprep.mubr.f32.mxu0 %v883
      %1328 = vmatmul.mubr.f32.gmra.mxu0 %v718
      %v1329 = vpop.f32.mrf.mxu0
      %v1330 = vadd.f32 0.0, %v1329
      %v1331 = vpop.f32.mrf.mxu0
      %1332 = vmatprep.mubr.f32.mxu0 %v882
      %1333 = vmatmul.mubr.f32.gmra.mxu0 %v719
      %v1334 = vpop.f32.mrf.mxu0
      %v1335 = vadd.f32 0.0, %v1334
      %v1336 = vpop.f32.mrf.mxu0
      %1337 = vmatprep.mubr.f32.mxu0 %v881
      %1338 = vmatmul.mubr.f32.gmra.mxu0 %v720
      %v1339 = vpop.f32.mrf.mxu0
      %v1340 = vadd.f32 0.0, %v1339
      %v1341 = vpop.f32.mrf.mxu0
      %1342 = vmatprep.mubr.f32.mxu0 %v880
      %1343 = vmatmul.mubr.f32.gmra.mxu0 %v721
      %v1344 = vpop.f32.mrf.mxu0
      %v1345 = vadd.f32 0.0, %v1344
      %v1346 = vpop.f32.mrf.mxu0
      %1347 = vmatprep.mubr.f32.mxu0 %v879
      %1348 = vmatmul.mubr.f32.gmra.mxu0 %v722
      %v1349 = vpop.f32.mrf.mxu0
      %v1350 = vadd.f32 0.0, %v1349
      %v1351 = vpop.f32.mrf.mxu0
      %1352 = vmatprep.mubr.f32.mxu0 %v878
      %1353 = vmatmul.mubr.f32.gmra.mxu0 %v723
      %v1354 = vpop.f32.mrf.mxu0
      %v1355 = vadd.f32 0.0, %v1354
      %v1356 = vpop.f32.mrf.mxu0
      %1357 = vmatprep.mubr.f32.mxu0 %v877
      %1358 = vmatmul.mubr.f32.gmra.mxu0 %v724
      %v1359 = vpop.f32.mrf.mxu0
      %v1360 = vadd.f32 0.0, %v1359
      %v1361 = vpop.f32.mrf.mxu0
      %1362 = vmatprep.mubr.f32.mxu0 %v876
      %1363 = vmatmul.mubr.f32.gmra.mxu0 %v725
      %v1364 = vpop.f32.mrf.mxu0
      %v1365 = vadd.f32 0.0, %v1364
      %v1366 = vpop.f32.mrf.mxu0
      %1367 = vmatprep.mubr.f32.mxu0 %v875
      %1368 = vmatmul.mubr.f32.gmra.mxu0 %v726
      %v1369 = vpop.f32.mrf.mxu0
      %v1370 = vadd.f32 0.0, %v1369
      %v1371 = vpop.f32.mrf.mxu0
      %1372 = vmatprep.mubr.f32.mxu0 %v874
      %1373 = vmatmul.mubr.f32.gmra.mxu0 %v727
      %v1374 = vpop.f32.mrf.mxu0
      %v1375 = vadd.f32 0.0, %v1374
      %v1376 = vpop.f32.mrf.mxu0
      %1377 = vmatprep.mubr.f32.mxu0 %v873
      %1378 = vmatmul.mubr.f32.gmra.mxu0 %v728
      %v1379 = vpop.f32.mrf.mxu0
      %v1380 = vadd.f32 0.0, %v1379
      %v1381 = vpop.f32.mrf.mxu0
      %1382 = vmatprep.mubr.f32.mxu0 %v872
      %1383 = vmatmul.mubr.f32.gmra.mxu0 %v729
      %v1384 = vpop.f32.mrf.mxu0
      %v1385 = vadd.f32 0.0, %v1384
      %v1386 = vpop.f32.mrf.mxu0
      %1387 = vmatprep.mubr.f32.mxu0 %v871
      %1388 = vmatmul.mubr.f32.gmra.mxu0 %v730
      %v1389 = vpop.f32.mrf.mxu0
      %v1390 = vadd.f32 0.0, %v1389
      %v1391 = vpop.f32.mrf.mxu0
      %1392 = vmatprep.mubr.f32.mxu0 %v870
      %1393 = vmatmul.mubr.f32.gmra.mxu0 %v731
      %v1394 = vpop.f32.mrf.mxu0
      %v1395 = vadd.f32 0.0, %v1394
      %v1396 = vpop.f32.mrf.mxu0
      %1397 = vmatprep.mubr.f32.mxu0 %v869
      %1398 = vmatmul.mubr.f32.gmra.mxu0 %v732
      %v1399 = vpop.f32.mrf.mxu0
      %v1400 = vadd.f32 0.0, %v1399
      %v1401 = vpop.f32.mrf.mxu0
      %1402 = vmatprep.mubr.f32.mxu0 %v868
      %1403 = vmatmul.mubr.f32.gmra.mxu0 %v733
      %v1404 = vpop.f32.mrf.mxu0
      %v1405 = vadd.f32 0.0, %v1404
      %v1406 = vpop.f32.mrf.mxu0
      %1407 = vmatprep.mubr.f32.mxu0 %v867
      %1408 = vmatmul.mubr.f32.gmra.mxu0 %v734
      %v1409 = vpop.f32.mrf.mxu0
      %v1410 = vadd.f32 0.0, %v1409
      %v1411 = vpop.f32.mrf.mxu0
      %1412 = vmatprep.mubr.f32.mxu0 %v866
      %1413 = vmatmul.mubr.f32.gmra.mxu0 %v735
      %v1414 = vpop.f32.mrf.mxu0
      %v1415 = vadd.f32 0.0, %v1414
      %v1416 = vpop.f32.mrf.mxu0
      %1417 = vmatprep.mubr.f32.mxu0 %v865
      %1418 = vmatmul.mubr.f32.gmra.mxu0 %v736
      %v1419 = vpop.f32.mrf.mxu0
      %v1420 = vadd.f32 0.0, %v1419
      %v1421 = vpop.f32.mrf.mxu0
      %1422 = vmatprep.mubr.f32.mxu0 %v864
      %1423 = vmatmul.mubr.f32.gmra.mxu0 %v737
      %v1424 = vpop.f32.mrf.mxu0
      %v1425 = vadd.f32 0.0, %v1424
      %v1426 = vpop.f32.mrf.mxu0
      %1427 = vmatprep.mubr.f32.mxu0 %v863
      %1428 = vmatmul.mubr.f32.gmra.mxu0 %v738
      %v1429 = vpop.f32.mrf.mxu0
      %v1430 = vadd.f32 0.0, %v1429
      %v1431 = vpop.f32.mrf.mxu0
      %1432 = vmatprep.mubr.f32.mxu0 %v862
      %1433 = vmatmul.mubr.f32.gmra.mxu0 %v739
      %v1434 = vpop.f32.mrf.mxu0
      %v1435 = vadd.f32 0.0, %v1434
      %v1436 = vpop.f32.mrf.mxu0
      %1437 = vmatprep.mubr.f32.mxu0 %v861
      %1438 = vmatmul.mubr.f32.gmra.mxu0 %v740
      %v1439 = vpop.f32.mrf.mxu0
      %v1440 = vadd.f32 0.0, %v1439
      %v1441 = vpop.f32.mrf.mxu0
      %1442 = vmatprep.mubr.f32.mxu0 %v860
      %1443 = vmatmul.mubr.f32.gmra.mxu0 %v741
      %v1444 = vpop.f32.mrf.mxu0
      %v1445 = vadd.f32 0.0, %v1444
      %v1446 = vpop.f32.mrf.mxu0
      %1447 = vmatprep.mubr.f32.mxu0 %v859
      %1448 = vmatmul.mubr.f32.gmra.mxu0 %v742
      %v1449 = vpop.f32.mrf.mxu0
      %v1450 = vadd.f32 0.0, %v1449
      %v1451 = vpop.f32.mrf.mxu0
      %1452 = vmatprep.mubr.f32.mxu0 %v858
      %1453 = vmatmul.mubr.f32.gmra.mxu0 %v743
      %v1454 = vpop.f32.mrf.mxu0
      %v1455 = vadd.f32 0.0, %v1454
      %v1456 = vpop.f32.mrf.mxu0
      %1457 = vmatprep.mubr.f32.mxu0 %v857
      %1458 = vmatmul.mubr.f32.gmra.mxu0 %v744
      %v1459 = vpop.f32.mrf.mxu0
      %v1460 = vadd.f32 0.0, %v1459
      %v1461 = vpop.f32.mrf.mxu0
      %1462 = vmatprep.mubr.f32.mxu0 %v856
      %1463 = vmatmul.mubr.f32.gmra.mxu0 %v745
      %v1464 = vpop.f32.mrf.mxu0
      %v1465 = vadd.f32 0.0, %v1464
      %v1466 = vpop.f32.mrf.mxu0
      %1467 = vmatprep.mubr.f32.mxu0 %v855
      %1468 = vmatmul.mubr.f32.gmra.mxu0 %v746
      %v1469 = vpop.f32.mrf.mxu0
      %v1470 = vadd.f32 0.0, %v1469
      %v1471 = vpop.f32.mrf.mxu0
      %1472 = vmatprep.mubr.f32.mxu0 %v854
      %1473 = vmatmul.mubr.f32.gmra.mxu0 %v747
      %v1474 = vpop.f32.mrf.mxu0
      %v1475 = vadd.f32 0.0, %v1474
      %v1476 = vpop.f32.mrf.mxu0
      %1477 = vmatprep.mubr.f32.mxu0 %v853
      %1478 = vmatmul.mubr.f32.gmra.mxu0 %v748
      %v1479 = vpop.f32.mrf.mxu0
      %v1480 = vadd.f32 0.0, %v1479
      %v1481 = vpop.f32.mrf.mxu0
      %1482 = vmatprep.mubr.f32.mxu0 %v852
      %1483 = vmatmul.mubr.f32.gmra.mxu0 %v749
      %v1484 = vpop.f32.mrf.mxu0
      %v1485 = vadd.f32 0.0, %v1484
      %v1486 = vpop.f32.mrf.mxu0
      %1487 = vmatprep.mubr.f32.mxu0 %v851
      %1488 = vmatmul.mubr.f32.gmra.mxu0 %v750
      %v1489 = vpop.f32.mrf.mxu0
      %v1490 = vadd.f32 0.0, %v1489
      %v1491 = vpop.f32.mrf.mxu0
      %1492 = vmatprep.mubr.f32.mxu0 %v850
      %1493 = vmatmul.mubr.f32.gmra.mxu0 %v751
      %v1494 = vpop.f32.mrf.mxu0
      %v1495 = vadd.f32 0.0, %v1494
      %v1496 = vpop.f32.mrf.mxu0
      %1497 = vmatprep.mubr.f32.mxu0 %v849
      %1498 = vmatmul.mubr.f32.gmra.mxu0 %v752
      %v1499 = vpop.f32.mrf.mxu0
      %v1500 = vadd.f32 0.0, %v1499
      %v1501 = vpop.f32.mrf.mxu0
      %1502 = vmatprep.mubr.f32.mxu0 %v848
      %1503 = vmatmul.mubr.f32.gmra.mxu0 %v753
      %v1504 = vpop.f32.mrf.mxu0
      %v1505 = vadd.f32 0.0, %v1504
      %v1506 = vpop.f32.mrf.mxu0
      %1507 = vmatprep.mubr.f32.mxu0 %v847
      %1508 = vmatmul.mubr.f32.gmra.mxu0 %v754
      %v1509 = vpop.f32.mrf.mxu0
      %v1510 = vadd.f32 0.0, %v1509
      %v1511 = vpop.f32.mrf.mxu0
      %1512 = vmatprep.mubr.f32.mxu0 %v846
      %1513 = vmatmul.mubr.f32.gmra.mxu0 %v755
      %v1514 = vpop.f32.mrf.mxu0
      %v1515 = vadd.f32 0.0, %v1514
      %v1516 = vpop.f32.mrf.mxu0
      %1517 = vmatprep.mubr.f32.mxu0 %v845
      %1518 = vmatmul.mubr.f32.gmra.mxu0 %v756
      %v1519 = vpop.f32.mrf.mxu0
      %v1520 = vadd.f32 0.0, %v1519
      %v1521 = vpop.f32.mrf.mxu0
      %1522 = vmatprep.mubr.f32.mxu0 %v844
      %1523 = vmatmul.mubr.f32.gmra.mxu0 %v757
      %v1524 = vpop.f32.mrf.mxu0
      %v1525 = vadd.f32 0.0, %v1524
      %v1526 = vpop.f32.mrf.mxu0
      %1527 = vmatprep.mubr.f32.mxu0 %v843
      %1528 = vmatmul.mubr.f32.gmra.mxu0 %v758
      %v1529 = vpop.f32.mrf.mxu0
      %v1530 = vadd.f32 0.0, %v1529
      %v1531 = vpop.f32.mrf.mxu0
      %1532 = vmatprep.mubr.f32.mxu0 %v842
      %1533 = vmatmul.mubr.f32.gmra.mxu0 %v759
      %v1534 = vpop.f32.mrf.mxu0
      %v1535 = vadd.f32 0.0, %v1534
      %v1536 = vpop.f32.mrf.mxu0
      %1537 = vdwg.mxu0
      %1538 = vmatprep.subr.mxu0 0.0
      %1539 = vmatpush1.msra.mxu0 %v1152
      %1540 = vmatprep.subr.mxu0 0.0
      %1541 = vmatpush1.msra.mxu0 %v1151
      %1542 = vmatprep.subr.mxu0 0.0
      %1543 = vmatpush1.msra.mxu0 %v1150
      %1544 = vmatprep.subr.mxu0 0.0
      %1545 = vmatpush1.msra.mxu0 %v1149
      %1546 = vmatprep.subr.mxu0 0.0
      %1547 = vmatpush1.msra.mxu0 %v1148
      %1548 = vmatprep.subr.mxu0 0.0
      %1549 = vmatpush1.msra.mxu0 %v1147
      %1550 = vmatprep.subr.mxu0 0.0
      %1551 = vmatpush1.msra.mxu0 %v1146
      %1552 = vmatprep.subr.mxu0 0.0
      %1553 = vmatpush1.msra.mxu0 %v1145
      %1554 = vmatprep.subr.mxu0 0.0
      %1555 = vmatpush1.msra.mxu0 %v1144
      %1556 = vmatprep.subr.mxu0 0.0
      %1557 = vmatpush1.msra.mxu0 %v1143
      %1558 = vmatprep.subr.mxu0 0.0
      %1559 = vmatpush1.msra.mxu0 %v1142
      %1560 = vmatprep.subr.mxu0 0.0
      %1561 = vmatpush1.msra.mxu0 %v1141
      %1562 = vmatprep.subr.mxu0 0.0
      %1563 = vmatpush1.msra.mxu0 %v1140
      %1564 = vmatprep.subr.mxu0 0.0
      %1565 = vmatpush1.msra.mxu0 %v1139
      %1566 = vmatprep.subr.mxu0 0.0
      %1567 = vmatpush1.msra.mxu0 %v1138
      %1568 = vmatprep.subr.mxu0 0.0
      %1569 = vmatpush1.msra.mxu0 %v1137
      %1570 = vmatprep.subr.mxu0 0.0
      %1571 = vmatpush2.msra.mxu0 0.0
      %1572 = vmatprep.subr.mxu0 0.0
      %1573 = vmatpush2.msra.mxu0 0.0
      %1574 = vmatprep.subr.mxu0 0.0
      %1575 = vmatpush2.msra.mxu0 0.0
      %1576 = vmatprep.subr.mxu0 0.0
      %1577 = vmatpush2.msra.mxu0 0.0
      %1578 = vmatprep.subr.mxu0 0.0
      %1579 = vmatpush2.msra.mxu0 0.0
      %1580 = vmatprep.subr.mxu0 0.0
      %1581 = vmatpush2.msra.mxu0 0.0
      %1582 = vmatprep.subr.mxu0 0.0
      %1583 = vmatpush2.msra.mxu0 0.0
      %1584 = vmatprep.subr.mxu0 0.0
      %1585 = vmatpush2.msra.mxu0 0.0
      %1586 = vmatprep.subr.mxu0 0.0
      %1587 = vmatpush2.msra.mxu0 0.0
      %1588 = vmatprep.subr.mxu0 0.0
      %1589 = vmatpush2.msra.mxu0 0.0
      %1590 = vmatprep.subr.mxu0 0.0
      %1591 = vmatpush2.msra.mxu0 0.0
      %1592 = vmatprep.subr.mxu0 0.0
      %1593 = vmatpush2.msra.mxu0 0.0
      %1594 = vmatprep.subr.mxu0 0.0
      %1595 = vmatpush2.msra.mxu0 0.0
      %1596 = vmatprep.subr.mxu0 0.0
      %1597 = vmatpush2.msra.mxu0 0.0
      %1598 = vmatprep.subr.mxu0 0.0
      %1599 = vmatpush2.msra.mxu0 0.0
      %1600 = vmatprep.subr.mxu0 0.0
      %1601 = vmatpush2.msra.mxu0 0.0
      %1602 = vmatprep.mubr.f32.mxu0 0.0
      %1603 = vmatmul.mubr.f32.gmra.mxu0 %v1050
      %v1604 = vpop.f32.mrf.mxu0
      %v1605 = vadd.f32 %v1220, %v1604
      %v1606 = vpop.f32.mrf.mxu0
      %1607 = vmatprep.mubr.f32.mxu0 0.0
      %1608 = vmatmul.mubr.f32.gmra.mxu0 %v1049
      %v1609 = vpop.f32.mrf.mxu0
      %v1610 = vadd.f32 %v1225, %v1609
      %v1611 = vpop.f32.mrf.mxu0
      %1612 = vmatprep.mubr.f32.mxu0 0.0
      %1613 = vmatmul.mubr.f32.gmra.mxu0 %v1048
      %v1614 = vpop.f32.mrf.mxu0
      %v1615 = vadd.f32 %v1230, %v1614
      %v1616 = vpop.f32.mrf.mxu0
      %1617 = vmatprep.mubr.f32.mxu0 0.0
      %1618 = vmatmul.mubr.f32.gmra.mxu0 %v1047
      %v1619 = vpop.f32.mrf.mxu0
      %v1620 = vadd.f32 %v1235, %v1619
      %v1621 = vpop.f32.mrf.mxu0
      %1622 = vmatprep.mubr.f32.mxu0 0.0
      %1623 = vmatmul.mubr.f32.gmra.mxu0 %v1046
      %v1624 = vpop.f32.mrf.mxu0
      %v1625 = vadd.f32 %v1240, %v1624
      %v1626 = vpop.f32.mrf.mxu0
      %1627 = vmatprep.mubr.f32.mxu0 0.0
      %1628 = vmatmul.mubr.f32.gmra.mxu0 %v1045
      %v1629 = vpop.f32.mrf.mxu0
      %v1630 = vadd.f32 %v1245, %v1629
      %v1631 = vpop.f32.mrf.mxu0
      %1632 = vmatprep.mubr.f32.mxu0 0.0
      %1633 = vmatmul.mubr.f32.gmra.mxu0 %v1044
      %v1634 = vpop.f32.mrf.mxu0
      %v1635 = vadd.f32 %v1250, %v1634
      %v1636 = vpop.f32.mrf.mxu0
      %1637 = vmatprep.mubr.f32.mxu0 0.0
      %1638 = vmatmul.mubr.f32.gmra.mxu0 %v1043
      %v1639 = vpop.f32.mrf.mxu0
      %v1640 = vadd.f32 %v1255, %v1639
      %v1641 = vpop.f32.mrf.mxu0
      %1642 = vmatprep.mubr.f32.mxu0 0.0
      %1643 = vmatmul.mubr.f32.gmra.mxu0 %v1042
      %v1644 = vpop.f32.mrf.mxu0
      %v1645 = vadd.f32 %v1260, %v1644
      %v1646 = vpop.f32.mrf.mxu0
      %1647 = vmatprep.mubr.f32.mxu0 0.0
      %1648 = vmatmul.mubr.f32.gmra.mxu0 %v1041
      %v1649 = vpop.f32.mrf.mxu0
      %v1650 = vadd.f32 %v1265, %v1649
      %v1651 = vpop.f32.mrf.mxu0
      %1652 = vmatprep.mubr.f32.mxu0 0.0
      %1653 = vmatmul.mubr.f32.gmra.mxu0 %v1040
      %v1654 = vpop.f32.mrf.mxu0
      %v1655 = vadd.f32 %v1270, %v1654
      %v1656 = vpop.f32.mrf.mxu0
      %1657 = vmatprep.mubr.f32.mxu0 0.0
      %1658 = vmatmul.mubr.f32.gmra.mxu0 %v1039
      %v1659 = vpop.f32.mrf.mxu0
      %v1660 = vadd.f32 %v1275, %v1659
      %v1661 = vpop.f32.mrf.mxu0
      %1662 = vmatprep.mubr.f32.mxu0 0.0
      %1663 = vmatmul.mubr.f32.gmra.mxu0 %v1038
      %v1664 = vpop.f32.mrf.mxu0
      %v1665 = vadd.f32 %v1280, %v1664
      %v1666 = vpop.f32.mrf.mxu0
      %1667 = vmatprep.mubr.f32.mxu0 0.0
      %1668 = vmatmul.mubr.f32.gmra.mxu0 %v1037
      %v1669 = vpop.f32.mrf.mxu0
      %v1670 = vadd.f32 %v1285, %v1669
      %v1671 = vpop.f32.mrf.mxu0
      %1672 = vmatprep.mubr.f32.mxu0 0.0
      %1673 = vmatmul.mubr.f32.gmra.mxu0 %v1036
      %v1674 = vpop.f32.mrf.mxu0
      %v1675 = vadd.f32 %v1290, %v1674
      %v1676 = vpop.f32.mrf.mxu0
      %1677 = vmatprep.mubr.f32.mxu0 0.0
      %1678 = vmatmul.mubr.f32.gmra.mxu0 %v1035
      %v1679 = vpop.f32.mrf.mxu0
      %v1680 = vadd.f32 %v1295, %v1679
      %v1681 = vpop.f32.mrf.mxu0
      %1682 = vmatprep.mubr.f32.mxu0 0.0
      %1683 = vmatmul.mubr.f32.gmra.mxu0 %v1034
      %v1684 = vpop.f32.mrf.mxu0
      %v1685 = vadd.f32 %v1300, %v1684
      %v1686 = vpop.f32.mrf.mxu0
      %1687 = vmatprep.mubr.f32.mxu0 0.0
      %1688 = vmatmul.mubr.f32.gmra.mxu0 %v1033
      %v1689 = vpop.f32.mrf.mxu0
      %v1690 = vadd.f32 %v1305, %v1689
      %v1691 = vpop.f32.mrf.mxu0
      %1692 = vmatprep.mubr.f32.mxu0 0.0
      %1693 = vmatmul.mubr.f32.gmra.mxu0 %v1032
      %v1694 = vpop.f32.mrf.mxu0
      %v1695 = vadd.f32 %v1310, %v1694
      %v1696 = vpop.f32.mrf.mxu0
      %1697 = vmatprep.mubr.f32.mxu0 0.0
      %1698 = vmatmul.mubr.f32.gmra.mxu0 %v1031
      %v1699 = vpop.f32.mrf.mxu0
      %v1700 = vadd.f32 %v1315, %v1699
      %v1701 = vpop.f32.mrf.mxu0
      %1702 = vmatprep.mubr.f32.mxu0 0.0
      %1703 = vmatmul.mubr.f32.gmra.mxu0 %v1030
      %v1704 = vpop.f32.mrf.mxu0
      %v1705 = vadd.f32 %v1320, %v1704
      %v1706 = vpop.f32.mrf.mxu0
      %1707 = vmatprep.mubr.f32.mxu0 0.0
      %1708 = vmatmul.mubr.f32.gmra.mxu0 %v1029
      %v1709 = vpop.f32.mrf.mxu0
      %v1710 = vadd.f32 %v1325, %v1709
      %v1711 = vpop.f32.mrf.mxu0
      %1712 = vmatprep.mubr.f32.mxu0 0.0
      %1713 = vmatmul.mubr.f32.gmra.mxu0 %v1028
      %v1714 = vpop.f32.mrf.mxu0
      %v1715 = vadd.f32 %v1330, %v1714
      %v1716 = vpop.f32.mrf.mxu0
      %1717 = vmatprep.mubr.f32.mxu0 0.0
      %1718 = vmatmul.mubr.f32.gmra.mxu0 %v1027
      %v1719 = vpop.f32.mrf.mxu0
      %v1720 = vadd.f32 %v1335, %v1719
      %v1721 = vpop.f32.mrf.mxu0
      %1722 = vmatprep.mubr.f32.mxu0 0.0
      %1723 = vmatmul.mubr.f32.gmra.mxu0 %v1026
      %v1724 = vpop.f32.mrf.mxu0
      %v1725 = vadd.f32 %v1340, %v1724
      %v1726 = vpop.f32.mrf.mxu0
      %1727 = vmatprep.mubr.f32.mxu0 0.0
      %1728 = vmatmul.mubr.f32.gmra.mxu0 %v1025
      %v1729 = vpop.f32.mrf.mxu0
      %v1730 = vadd.f32 %v1345, %v1729
      %v1731 = vpop.f32.mrf.mxu0
      %1732 = vmatprep.mubr.f32.mxu0 0.0
      %1733 = vmatmul.mubr.f32.gmra.mxu0 %v1024
      %v1734 = vpop.f32.mrf.mxu0
      %v1735 = vadd.f32 %v1350, %v1734
      %v1736 = vpop.f32.mrf.mxu0
      %1737 = vmatprep.mubr.f32.mxu0 0.0
      %1738 = vmatmul.mubr.f32.gmra.mxu0 %v1023
      %v1739 = vpop.f32.mrf.mxu0
      %v1740 = vadd.f32 %v1355, %v1739
      %v1741 = vpop.f32.mrf.mxu0
      %1742 = vmatprep.mubr.f32.mxu0 0.0
      %1743 = vmatmul.mubr.f32.gmra.mxu0 %v1022
      %v1744 = vpop.f32.mrf.mxu0
      %v1745 = vadd.f32 %v1360, %v1744
      %v1746 = vpop.f32.mrf.mxu0
      %1747 = vmatprep.mubr.f32.mxu0 0.0
      %1748 = vmatmul.mubr.f32.gmra.mxu0 %v1021
      %v1749 = vpop.f32.mrf.mxu0
      %v1750 = vadd.f32 %v1365, %v1749
      %v1751 = vpop.f32.mrf.mxu0
      %1752 = vmatprep.mubr.f32.mxu0 0.0
      %1753 = vmatmul.mubr.f32.gmra.mxu0 %v1020
      %v1754 = vpop.f32.mrf.mxu0
      %v1755 = vadd.f32 %v1370, %v1754
      %v1756 = vpop.f32.mrf.mxu0
      %1757 = vmatprep.mubr.f32.mxu0 0.0
      %1758 = vmatmul.mubr.f32.gmra.mxu0 %v1019
      %v1759 = vpop.f32.mrf.mxu0
      %v1760 = vadd.f32 %v1375, %v1759
      %v1761 = vpop.f32.mrf.mxu0
      %1762 = vmatprep.mubr.f32.mxu0 0.0
      %1763 = vmatmul.mubr.f32.gmra.mxu0 %v1018
      %v1764 = vpop.f32.mrf.mxu0
      %v1765 = vadd.f32 %v1380, %v1764
      %v1766 = vpop.f32.mrf.mxu0
      %1767 = vmatprep.mubr.f32.mxu0 0.0
      %1768 = vmatmul.mubr.f32.gmra.mxu0 %v1017
      %v1769 = vpop.f32.mrf.mxu0
      %v1770 = vadd.f32 %v1385, %v1769
      %v1771 = vpop.f32.mrf.mxu0
      %1772 = vmatprep.mubr.f32.mxu0 0.0
      %1773 = vmatmul.mubr.f32.gmra.mxu0 %v1016
      %v1774 = vpop.f32.mrf.mxu0
      %v1775 = vadd.f32 %v1390, %v1774
      %v1776 = vpop.f32.mrf.mxu0
      %1777 = vmatprep.mubr.f32.mxu0 0.0
      %1778 = vmatmul.mubr.f32.gmra.mxu0 %v1015
      %v1779 = vpop.f32.mrf.mxu0
      %v1780 = vadd.f32 %v1395, %v1779
      %v1781 = vpop.f32.mrf.mxu0
      %1782 = vmatprep.mubr.f32.mxu0 0.0
      %1783 = vmatmul.mubr.f32.gmra.mxu0 %v1014
      %v1784 = vpop.f32.mrf.mxu0
      %v1785 = vadd.f32 %v1400, %v1784
      %v1786 = vpop.f32.mrf.mxu0
      %1787 = vmatprep.mubr.f32.mxu0 0.0
      %1788 = vmatmul.mubr.f32.gmra.mxu0 %v1013
      %v1789 = vpop.f32.mrf.mxu0
      %v1790 = vadd.f32 %v1405, %v1789
      %v1791 = vpop.f32.mrf.mxu0
      %1792 = vmatprep.mubr.f32.mxu0 0.0
      %1793 = vmatmul.mubr.f32.gmra.mxu0 %v1012
      %v1794 = vpop.f32.mrf.mxu0
      %v1795 = vadd.f32 %v1410, %v1794
      %v1796 = vpop.f32.mrf.mxu0
      %1797 = vmatprep.mubr.f32.mxu0 0.0
      %1798 = vmatmul.mubr.f32.gmra.mxu0 %v1011
      %v1799 = vpop.f32.mrf.mxu0
      %v1800 = vadd.f32 %v1415, %v1799
      %v1801 = vpop.f32.mrf.mxu0
      %1802 = vmatprep.mubr.f32.mxu0 0.0
      %1803 = vmatmul.mubr.f32.gmra.mxu0 %v1010
      %v1804 = vpop.f32.mrf.mxu0
      %v1805 = vadd.f32 %v1420, %v1804
      %v1806 = vpop.f32.mrf.mxu0
      %1807 = vmatprep.mubr.f32.mxu0 0.0
      %1808 = vmatmul.mubr.f32.gmra.mxu0 %v1009
      %v1809 = vpop.f32.mrf.mxu0
      %v1810 = vadd.f32 %v1425, %v1809
      %v1811 = vpop.f32.mrf.mxu0
      %1812 = vmatprep.mubr.f32.mxu0 0.0
      %1813 = vmatmul.mubr.f32.gmra.mxu0 %v1008
      %v1814 = vpop.f32.mrf.mxu0
      %v1815 = vadd.f32 %v1430, %v1814
      %v1816 = vpop.f32.mrf.mxu0
      %1817 = vmatprep.mubr.f32.mxu0 0.0
      %1818 = vmatmul.mubr.f32.gmra.mxu0 %v1007
      %v1819 = vpop.f32.mrf.mxu0
      %v1820 = vadd.f32 %v1435, %v1819
      %v1821 = vpop.f32.mrf.mxu0
      %1822 = vmatprep.mubr.f32.mxu0 0.0
      %1823 = vmatmul.mubr.f32.gmra.mxu0 %v1006
      %v1824 = vpop.f32.mrf.mxu0
      %v1825 = vadd.f32 %v1440, %v1824
      %v1826 = vpop.f32.mrf.mxu0
      %1827 = vmatprep.mubr.f32.mxu0 0.0
      %1828 = vmatmul.mubr.f32.gmra.mxu0 %v1005
      %v1829 = vpop.f32.mrf.mxu0
      %v1830 = vadd.f32 %v1445, %v1829
      %v1831 = vpop.f32.mrf.mxu0
      %1832 = vmatprep.mubr.f32.mxu0 0.0
      %1833 = vmatmul.mubr.f32.gmra.mxu0 %v1004
      %v1834 = vpop.f32.mrf.mxu0
      %v1835 = vadd.f32 %v1450, %v1834
      %v1836 = vpop.f32.mrf.mxu0
      %1837 = vmatprep.mubr.f32.mxu0 0.0
      %1838 = vmatmul.mubr.f32.gmra.mxu0 %v1003
      %v1839 = vpop.f32.mrf.mxu0
      %v1840 = vadd.f32 %v1455, %v1839
      %v1841 = vpop.f32.mrf.mxu0
      %1842 = vmatprep.mubr.f32.mxu0 0.0
      %1843 = vmatmul.mubr.f32.gmra.mxu0 %v1002
      %v1844 = vpop.f32.mrf.mxu0
      %v1845 = vadd.f32 %v1460, %v1844
      %v1846 = vpop.f32.mrf.mxu0
      %1847 = vmatprep.mubr.f32.mxu0 0.0
      %1848 = vmatmul.mubr.f32.gmra.mxu0 %v1001
      %v1849 = vpop.f32.mrf.mxu0
      %v1850 = vadd.f32 %v1465, %v1849
      %v1851 = vpop.f32.mrf.mxu0
      %1852 = vmatprep.mubr.f32.mxu0 0.0
      %1853 = vmatmul.mubr.f32.gmra.mxu0 %v1000
      %v1854 = vpop.f32.mrf.mxu0
      %v1855 = vadd.f32 %v1470, %v1854
      %v1856 = vpop.f32.mrf.mxu0
      %1857 = vmatprep.mubr.f32.mxu0 0.0
      %1858 = vmatmul.mubr.f32.gmra.mxu0 %v999
      %v1859 = vpop.f32.mrf.mxu0
      %v1860 = vadd.f32 %v1475, %v1859
      %v1861 = vpop.f32.mrf.mxu0
      %1862 = vmatprep.mubr.f32.mxu0 0.0
      %1863 = vmatmul.mubr.f32.gmra.mxu0 %v998
      %v1864 = vpop.f32.mrf.mxu0
      %v1865 = vadd.f32 %v1480, %v1864
      %v1866 = vpop.f32.mrf.mxu0
      %1867 = vmatprep.mubr.f32.mxu0 0.0
      %1868 = vmatmul.mubr.f32.gmra.mxu0 %v997
      %v1869 = vpop.f32.mrf.mxu0
      %v1870 = vadd.f32 %v1485, %v1869
      %v1871 = vpop.f32.mrf.mxu0
      %1872 = vmatprep.mubr.f32.mxu0 0.0
      %1873 = vmatmul.mubr.f32.gmra.mxu0 %v996
      %v1874 = vpop.f32.mrf.mxu0
      %v1875 = vadd.f32 %v1490, %v1874
      %v1876 = vpop.f32.mrf.mxu0
      %1877 = vmatprep.mubr.f32.mxu0 0.0
      %1878 = vmatmul.mubr.f32.gmra.mxu0 %v995
      %v1879 = vpop.f32.mrf.mxu0
      %v1880 = vadd.f32 %v1495, %v1879
      %v1881 = vpop.f32.mrf.mxu0
      %1882 = vmatprep.mubr.f32.mxu0 0.0
      %1883 = vmatmul.mubr.f32.gmra.mxu0 %v994
      %v1884 = vpop.f32.mrf.mxu0
      %v1885 = vadd.f32 %v1500, %v1884
      %v1886 = vpop.f32.mrf.mxu0
      %1887 = vmatprep.mubr.f32.mxu0 0.0
      %1888 = vmatmul.mubr.f32.gmra.mxu0 %v993
      %v1889 = vpop.f32.mrf.mxu0
      %v1890 = vadd.f32 %v1505, %v1889
      %v1891 = vpop.f32.mrf.mxu0
      %1892 = vmatprep.mubr.f32.mxu0 0.0
      %1893 = vmatmul.mubr.f32.gmra.mxu0 %v992
      %v1894 = vpop.f32.mrf.mxu0
      %v1895 = vadd.f32 %v1510, %v1894
      %v1896 = vpop.f32.mrf.mxu0
      %1897 = vmatprep.mubr.f32.mxu0 0.0
      %1898 = vmatmul.mubr.f32.gmra.mxu0 %v991
      %v1899 = vpop.f32.mrf.mxu0
      %v1900 = vadd.f32 %v1515, %v1899
      %v1901 = vpop.f32.mrf.mxu0
      %1902 = vmatprep.mubr.f32.mxu0 0.0
      %1903 = vmatmul.mubr.f32.gmra.mxu0 %v990
      %v1904 = vpop.f32.mrf.mxu0
      %v1905 = vadd.f32 %v1520, %v1904
      %v1906 = vpop.f32.mrf.mxu0
      %1907 = vmatprep.mubr.f32.mxu0 0.0
      %1908 = vmatmul.mubr.f32.gmra.mxu0 %v989
      %v1909 = vpop.f32.mrf.mxu0
      %v1910 = vadd.f32 %v1525, %v1909
      %v1911 = vpop.f32.mrf.mxu0
      %1912 = vmatprep.mubr.f32.mxu0 0.0
      %1913 = vmatmul.mubr.f32.gmra.mxu0 %v988
      %v1914 = vpop.f32.mrf.mxu0
      %v1915 = vadd.f32 %v1530, %v1914
      %v1916 = vpop.f32.mrf.mxu0
      %1917 = vmatprep.mubr.f32.mxu0 0.0
      %1918 = vmatmul.mubr.f32.gmra.mxu0 %v987
      %v1919 = vpop.f32.mrf.mxu0
      %v1920 = vadd.f32 %v1535, %v1919
      %v1921 = vpop.f32.mrf.mxu0
      %1922 = vdwg.mxu0
      %1923 = vmatprep.subr.mxu0 0.0
      %1924 = vmatpush1.msra.mxu0 %v1071
      %1925 = vmatprep.subr.mxu0 0.0
      %1926 = vmatpush1.msra.mxu0 %v1070
      %1927 = vmatprep.subr.mxu0 0.0
      %1928 = vmatpush1.msra.mxu0 %v1069
      %1929 = vmatprep.subr.mxu0 0.0
      %1930 = vmatpush1.msra.mxu0 %v1068
      %1931 = vmatprep.subr.mxu0 0.0
      %1932 = vmatpush1.msra.mxu0 %v1067
      %1933 = vmatprep.subr.mxu0 0.0
      %1934 = vmatpush1.msra.mxu0 %v1066
      %1935 = vmatprep.subr.mxu0 0.0
      %1936 = vmatpush1.msra.mxu0 %v1065
      %1937 = vmatprep.subr.mxu0 0.0
      %1938 = vmatpush1.msra.mxu0 %v1064
      %1939 = vmatprep.subr.mxu0 0.0
      %1940 = vmatpush1.msra.mxu0 %v1063
      %1941 = vmatprep.subr.mxu0 0.0
      %1942 = vmatpush1.msra.mxu0 %v1062
      %1943 = vmatprep.subr.mxu0 0.0
      %1944 = vmatpush1.msra.mxu0 %v1061
      %1945 = vmatprep.subr.mxu0 0.0
      %1946 = vmatpush1.msra.mxu0 %v1060
      %1947 = vmatprep.subr.mxu0 0.0
      %1948 = vmatpush1.msra.mxu0 %v1059
      %1949 = vmatprep.subr.mxu0 0.0
      %1950 = vmatpush1.msra.mxu0 %v1058
      %1951 = vmatprep.subr.mxu0 0.0
      %1952 = vmatpush1.msra.mxu0 %v1057
      %1953 = vmatprep.subr.mxu0 0.0
      %1954 = vmatpush1.msra.mxu0 %v1056
      %1955 = vmatprep.subr.mxu0 0.0
      %1956 = vmatpush2.msra.mxu0 %v1087
      %1957 = vmatprep.subr.mxu0 0.0
      %1958 = vmatpush2.msra.mxu0 %v1086
      %1959 = vmatprep.subr.mxu0 0.0
      %1960 = vmatpush2.msra.mxu0 %v1085
      %1961 = vmatprep.subr.mxu0 0.0
      %1962 = vmatpush2.msra.mxu0 %v1084
      %1963 = vmatprep.subr.mxu0 0.0
      %1964 = vmatpush2.msra.mxu0 %v1083
      %1965 = vmatprep.subr.mxu0 0.0
      %1966 = vmatpush2.msra.mxu0 %v1082
      %1967 = vmatprep.subr.mxu0 0.0
      %1968 = vmatpush2.msra.mxu0 %v1081
      %1969 = vmatprep.subr.mxu0 0.0
      %1970 = vmatpush2.msra.mxu0 %v1080
      %1971 = vmatprep.subr.mxu0 0.0
      %1972 = vmatpush2.msra.mxu0 %v1079
      %1973 = vmatprep.subr.mxu0 0.0
      %1974 = vmatpush2.msra.mxu0 %v1078
      %1975 = vmatprep.subr.mxu0 0.0
      %1976 = vmatpush2.msra.mxu0 %v1077
      %1977 = vmatprep.subr.mxu0 0.0
      %1978 = vmatpush2.msra.mxu0 %v1076
      %1979 = vmatprep.subr.mxu0 0.0
      %1980 = vmatpush2.msra.mxu0 %v1075
      %1981 = vmatprep.subr.mxu0 0.0
      %1982 = vmatpush2.msra.mxu0 %v1074
      %1983 = vmatprep.subr.mxu0 0.0
      %1984 = vmatpush2.msra.mxu0 %v1073
      %1985 = vmatprep.subr.mxu0 0.0
      %1986 = vmatpush2.msra.mxu0 %v1072
      %1987 = vmatprep.mubr.f32.mxu0 %v909
      %1988 = vmatmul.mubr.f32.gmra.mxu0 %v692
      %v1989 = vpop.f32.mrf.mxu0
      %v1990 = vadd.f32 %v1605, %v1989
      %v1991 = vpop.f32.mrf.mxu0
      %1992 = vmatprep.mubr.f32.mxu0 %v908
      %1993 = vmatmul.mubr.f32.gmra.mxu0 %v693
      %v1994 = vpop.f32.mrf.mxu0
      %v1995 = vadd.f32 %v1610, %v1994
      %v1996 = vpop.f32.mrf.mxu0
      %1997 = vmatprep.mubr.f32.mxu0 %v907
      %1998 = vmatmul.mubr.f32.gmra.mxu0 %v694
      %v1999 = vpop.f32.mrf.mxu0
      %v2000 = vadd.f32 %v1615, %v1999
      %v2001 = vpop.f32.mrf.mxu0
      %2002 = vmatprep.mubr.f32.mxu0 %v906
      %2003 = vmatmul.mubr.f32.gmra.mxu0 %v695
      %v2004 = vpop.f32.mrf.mxu0
      %v2005 = vadd.f32 %v1620, %v2004
      %v2006 = vpop.f32.mrf.mxu0
      %2007 = vmatprep.mubr.f32.mxu0 %v905
      %2008 = vmatmul.mubr.f32.gmra.mxu0 %v696
      %v2009 = vpop.f32.mrf.mxu0
      %v2010 = vadd.f32 %v1625, %v2009
      %v2011 = vpop.f32.mrf.mxu0
      %2012 = vmatprep.mubr.f32.mxu0 %v904
      %2013 = vmatmul.mubr.f32.gmra.mxu0 %v697
      %v2014 = vpop.f32.mrf.mxu0
      %v2015 = vadd.f32 %v1630, %v2014
      %v2016 = vpop.f32.mrf.mxu0
      %2017 = vmatprep.mubr.f32.mxu0 %v903
      %2018 = vmatmul.mubr.f32.gmra.mxu0 %v698
      %v2019 = vpop.f32.mrf.mxu0
      %v2020 = vadd.f32 %v1635, %v2019
      %v2021 = vpop.f32.mrf.mxu0
      %2022 = vmatprep.mubr.f32.mxu0 %v902
      %2023 = vmatmul.mubr.f32.gmra.mxu0 %v699
      %v2024 = vpop.f32.mrf.mxu0
      %v2025 = vadd.f32 %v1640, %v2024
      %v2026 = vpop.f32.mrf.mxu0
      %2027 = vmatprep.mubr.f32.mxu0 %v901
      %2028 = vmatmul.mubr.f32.gmra.mxu0 %v700
      %v2029 = vpop.f32.mrf.mxu0
      %v2030 = vadd.f32 %v1645, %v2029
      %v2031 = vpop.f32.mrf.mxu0
      %2032 = vmatprep.mubr.f32.mxu0 %v900
      %2033 = vmatmul.mubr.f32.gmra.mxu0 %v701
      %v2034 = vpop.f32.mrf.mxu0
      %v2035 = vadd.f32 %v1650, %v2034
      %v2036 = vpop.f32.mrf.mxu0
      %2037 = vmatprep.mubr.f32.mxu0 %v899
      %2038 = vmatmul.mubr.f32.gmra.mxu0 %v702
      %v2039 = vpop.f32.mrf.mxu0
      %v2040 = vadd.f32 %v1655, %v2039
      %v2041 = vpop.f32.mrf.mxu0
      %2042 = vmatprep.mubr.f32.mxu0 %v898
      %2043 = vmatmul.mubr.f32.gmra.mxu0 %v703
      %v2044 = vpop.f32.mrf.mxu0
      %v2045 = vadd.f32 %v1660, %v2044
      %v2046 = vpop.f32.mrf.mxu0
      %2047 = vmatprep.mubr.f32.mxu0 %v897
      %2048 = vmatmul.mubr.f32.gmra.mxu0 %v704
      %v2049 = vpop.f32.mrf.mxu0
      %v2050 = vadd.f32 %v1665, %v2049
      %v2051 = vpop.f32.mrf.mxu0
      %2052 = vmatprep.mubr.f32.mxu0 %v896
      %2053 = vmatmul.mubr.f32.gmra.mxu0 %v705
      %v2054 = vpop.f32.mrf.mxu0
      %v2055 = vadd.f32 %v1670, %v2054
      %v2056 = vpop.f32.mrf.mxu0
      %2057 = vmatprep.mubr.f32.mxu0 %v895
      %2058 = vmatmul.mubr.f32.gmra.mxu0 %v706
      %v2059 = vpop.f32.mrf.mxu0
      %v2060 = vadd.f32 %v1675, %v2059
      %v2061 = vpop.f32.mrf.mxu0
      %2062 = vmatprep.mubr.f32.mxu0 %v894
      %2063 = vmatmul.mubr.f32.gmra.mxu0 %v707
      %v2064 = vpop.f32.mrf.mxu0
      %v2065 = vadd.f32 %v1680, %v2064
      %v2066 = vpop.f32.mrf.mxu0
      %2067 = vmatprep.mubr.f32.mxu0 %v893
      %2068 = vmatmul.mubr.f32.gmra.mxu0 %v708
      %v2069 = vpop.f32.mrf.mxu0
      %v2070 = vadd.f32 %v1685, %v2069
      %v2071 = vpop.f32.mrf.mxu0
      %2072 = vmatprep.mubr.f32.mxu0 %v892
      %2073 = vmatmul.mubr.f32.gmra.mxu0 %v709
      %v2074 = vpop.f32.mrf.mxu0
      %v2075 = vadd.f32 %v1690, %v2074
      %v2076 = vpop.f32.mrf.mxu0
      %2077 = vmatprep.mubr.f32.mxu0 %v891
      %2078 = vmatmul.mubr.f32.gmra.mxu0 %v710
      %v2079 = vpop.f32.mrf.mxu0
      %v2080 = vadd.f32 %v1695, %v2079
      %v2081 = vpop.f32.mrf.mxu0
      %2082 = vmatprep.mubr.f32.mxu0 %v890
      %2083 = vmatmul.mubr.f32.gmra.mxu0 %v711
      %v2084 = vpop.f32.mrf.mxu0
      %v2085 = vadd.f32 %v1700, %v2084
      %v2086 = vpop.f32.mrf.mxu0
      %2087 = vmatprep.mubr.f32.mxu0 %v889
      %2088 = vmatmul.mubr.f32.gmra.mxu0 %v712
      %v2089 = vpop.f32.mrf.mxu0
      %v2090 = vadd.f32 %v1705, %v2089
      %v2091 = vpop.f32.mrf.mxu0
      %2092 = vmatprep.mubr.f32.mxu0 %v888
      %2093 = vmatmul.mubr.f32.gmra.mxu0 %v713
      %v2094 = vpop.f32.mrf.mxu0
      %v2095 = vadd.f32 %v1710, %v2094
      %v2096 = vpop.f32.mrf.mxu0
      %2097 = vmatprep.mubr.f32.mxu0 %v887
      %2098 = vmatmul.mubr.f32.gmra.mxu0 %v714
      %v2099 = vpop.f32.mrf.mxu0
      %v2100 = vadd.f32 %v1715, %v2099
      %v2101 = vpop.f32.mrf.mxu0
      %2102 = vmatprep.mubr.f32.mxu0 %v886
      %2103 = vmatmul.mubr.f32.gmra.mxu0 %v715
      %v2104 = vpop.f32.mrf.mxu0
      %v2105 = vadd.f32 %v1720, %v2104
      %v2106 = vpop.f32.mrf.mxu0
      %2107 = vmatprep.mubr.f32.mxu0 %v885
      %2108 = vmatmul.mubr.f32.gmra.mxu0 %v716
      %v2109 = vpop.f32.mrf.mxu0
      %v2110 = vadd.f32 %v1725, %v2109
      %v2111 = vpop.f32.mrf.mxu0
      %2112 = vmatprep.mubr.f32.mxu0 %v884
      %2113 = vmatmul.mubr.f32.gmra.mxu0 %v717
      %v2114 = vpop.f32.mrf.mxu0
      %v2115 = vadd.f32 %v1730, %v2114
      %v2116 = vpop.f32.mrf.mxu0
      %2117 = vmatprep.mubr.f32.mxu0 %v883
      %2118 = vmatmul.mubr.f32.gmra.mxu0 %v718
      %v2119 = vpop.f32.mrf.mxu0
      %v2120 = vadd.f32 %v1735, %v2119
      %v2121 = vpop.f32.mrf.mxu0
      %2122 = vmatprep.mubr.f32.mxu0 %v882
      %2123 = vmatmul.mubr.f32.gmra.mxu0 %v719
      %v2124 = vpop.f32.mrf.mxu0
      %v2125 = vadd.f32 %v1740, %v2124
      %v2126 = vpop.f32.mrf.mxu0
      %2127 = vmatprep.mubr.f32.mxu0 %v881
      %2128 = vmatmul.mubr.f32.gmra.mxu0 %v720
      %v2129 = vpop.f32.mrf.mxu0
      %v2130 = vadd.f32 %v1745, %v2129
      %v2131 = vpop.f32.mrf.mxu0
      %2132 = vmatprep.mubr.f32.mxu0 %v880
      %2133 = vmatmul.mubr.f32.gmra.mxu0 %v721
      %v2134 = vpop.f32.mrf.mxu0
      %v2135 = vadd.f32 %v1750, %v2134
      %v2136 = vpop.f32.mrf.mxu0
      %2137 = vmatprep.mubr.f32.mxu0 %v879
      %2138 = vmatmul.mubr.f32.gmra.mxu0 %v722
      %v2139 = vpop.f32.mrf.mxu0
      %v2140 = vadd.f32 %v1755, %v2139
      %v2141 = vpop.f32.mrf.mxu0
      %2142 = vmatprep.mubr.f32.mxu0 %v878
      %2143 = vmatmul.mubr.f32.gmra.mxu0 %v723
      %v2144 = vpop.f32.mrf.mxu0
      %v2145 = vadd.f32 %v1760, %v2144
      %v2146 = vpop.f32.mrf.mxu0
      %2147 = vmatprep.mubr.f32.mxu0 %v877
      %2148 = vmatmul.mubr.f32.gmra.mxu0 %v724
      %v2149 = vpop.f32.mrf.mxu0
      %v2150 = vadd.f32 %v1765, %v2149
      %v2151 = vpop.f32.mrf.mxu0
      %2152 = vmatprep.mubr.f32.mxu0 %v876
      %2153 = vmatmul.mubr.f32.gmra.mxu0 %v725
      %v2154 = vpop.f32.mrf.mxu0
      %v2155 = vadd.f32 %v1770, %v2154
      %v2156 = vpop.f32.mrf.mxu0
      %2157 = vmatprep.mubr.f32.mxu0 %v875
      %2158 = vmatmul.mubr.f32.gmra.mxu0 %v726
      %v2159 = vpop.f32.mrf.mxu0
      %v2160 = vadd.f32 %v1775, %v2159
      %v2161 = vpop.f32.mrf.mxu0
      %2162 = vmatprep.mubr.f32.mxu0 %v874
      %2163 = vmatmul.mubr.f32.gmra.mxu0 %v727
      %v2164 = vpop.f32.mrf.mxu0
      %v2165 = vadd.f32 %v1780, %v2164
      %v2166 = vpop.f32.mrf.mxu0
      %2167 = vmatprep.mubr.f32.mxu0 %v873
      %2168 = vmatmul.mubr.f32.gmra.mxu0 %v728
      %v2169 = vpop.f32.mrf.mxu0
      %v2170 = vadd.f32 %v1785, %v2169
      %v2171 = vpop.f32.mrf.mxu0
      %2172 = vmatprep.mubr.f32.mxu0 %v872
      %2173 = vmatmul.mubr.f32.gmra.mxu0 %v729
      %v2174 = vpop.f32.mrf.mxu0
      %v2175 = vadd.f32 %v1790, %v2174
      %v2176 = vpop.f32.mrf.mxu0
      %2177 = vmatprep.mubr.f32.mxu0 %v871
      %2178 = vmatmul.mubr.f32.gmra.mxu0 %v730
      %v2179 = vpop.f32.mrf.mxu0
      %v2180 = vadd.f32 %v1795, %v2179
      %v2181 = vpop.f32.mrf.mxu0
      %2182 = vmatprep.mubr.f32.mxu0 %v870
      %2183 = vmatmul.mubr.f32.gmra.mxu0 %v731
      %v2184 = vpop.f32.mrf.mxu0
      %v2185 = vadd.f32 %v1800, %v2184
      %v2186 = vpop.f32.mrf.mxu0
      %2187 = vmatprep.mubr.f32.mxu0 %v869
      %2188 = vmatmul.mubr.f32.gmra.mxu0 %v732
      %v2189 = vpop.f32.mrf.mxu0
      %v2190 = vadd.f32 %v1805, %v2189
      %v2191 = vpop.f32.mrf.mxu0
      %2192 = vmatprep.mubr.f32.mxu0 %v868
      %2193 = vmatmul.mubr.f32.gmra.mxu0 %v733
      %v2194 = vpop.f32.mrf.mxu0
      %v2195 = vadd.f32 %v1810, %v2194
      %v2196 = vpop.f32.mrf.mxu0
      %2197 = vmatprep.mubr.f32.mxu0 %v867
      %2198 = vmatmul.mubr.f32.gmra.mxu0 %v734
      %v2199 = vpop.f32.mrf.mxu0
      %v2200 = vadd.f32 %v1815, %v2199
      %v2201 = vpop.f32.mrf.mxu0
      %2202 = vmatprep.mubr.f32.mxu0 %v866
      %2203 = vmatmul.mubr.f32.gmra.mxu0 %v735
      %v2204 = vpop.f32.mrf.mxu0
      %v2205 = vadd.f32 %v1820, %v2204
      %v2206 = vpop.f32.mrf.mxu0
      %2207 = vmatprep.mubr.f32.mxu0 %v865
      %2208 = vmatmul.mubr.f32.gmra.mxu0 %v736
      %v2209 = vpop.f32.mrf.mxu0
      %v2210 = vadd.f32 %v1825, %v2209
      %v2211 = vpop.f32.mrf.mxu0
      %2212 = vmatprep.mubr.f32.mxu0 %v864
      %2213 = vmatmul.mubr.f32.gmra.mxu0 %v737
      %v2214 = vpop.f32.mrf.mxu0
      %v2215 = vadd.f32 %v1830, %v2214
      %v2216 = vpop.f32.mrf.mxu0
      %2217 = vmatprep.mubr.f32.mxu0 %v863
      %2218 = vmatmul.mubr.f32.gmra.mxu0 %v738
      %v2219 = vpop.f32.mrf.mxu0
      %v2220 = vadd.f32 %v1835, %v2219
      %v2221 = vpop.f32.mrf.mxu0
      %2222 = vmatprep.mubr.f32.mxu0 %v862
      %2223 = vmatmul.mubr.f32.gmra.mxu0 %v739
      %v2224 = vpop.f32.mrf.mxu0
      %v2225 = vadd.f32 %v1840, %v2224
      %v2226 = vpop.f32.mrf.mxu0
      %2227 = vmatprep.mubr.f32.mxu0 %v861
      %2228 = vmatmul.mubr.f32.gmra.mxu0 %v740
      %v2229 = vpop.f32.mrf.mxu0
      %v2230 = vadd.f32 %v1845, %v2229
      %v2231 = vpop.f32.mrf.mxu0
      %2232 = vmatprep.mubr.f32.mxu0 %v860
      %2233 = vmatmul.mubr.f32.gmra.mxu0 %v741
      %v2234 = vpop.f32.mrf.mxu0
      %v2235 = vadd.f32 %v1850, %v2234
      %v2236 = vpop.f32.mrf.mxu0
      %2237 = vmatprep.mubr.f32.mxu0 %v859
      %2238 = vmatmul.mubr.f32.gmra.mxu0 %v742
      %v2239 = vpop.f32.mrf.mxu0
      %v2240 = vadd.f32 %v1855, %v2239
      %v2241 = vpop.f32.mrf.mxu0
      %2242 = vmatprep.mubr.f32.mxu0 %v858
      %2243 = vmatmul.mubr.f32.gmra.mxu0 %v743
      %v2244 = vpop.f32.mrf.mxu0
      %v2245 = vadd.f32 %v1860, %v2244
      %v2246 = vpop.f32.mrf.mxu0
      %2247 = vmatprep.mubr.f32.mxu0 %v857
      %2248 = vmatmul.mubr.f32.gmra.mxu0 %v744
      %v2249 = vpop.f32.mrf.mxu0
      %v2250 = vadd.f32 %v1865, %v2249
      %v2251 = vpop.f32.mrf.mxu0
      %2252 = vmatprep.mubr.f32.mxu0 %v856
      %2253 = vmatmul.mubr.f32.gmra.mxu0 %v745
      %v2254 = vpop.f32.mrf.mxu0
      %v2255 = vadd.f32 %v1870, %v2254
      %v2256 = vpop.f32.mrf.mxu0
      %2257 = vmatprep.mubr.f32.mxu0 %v855
      %2258 = vmatmul.mubr.f32.gmra.mxu0 %v746
      %v2259 = vpop.f32.mrf.mxu0
      %v2260 = vadd.f32 %v1875, %v2259
      %v2261 = vpop.f32.mrf.mxu0
      %2262 = vmatprep.mubr.f32.mxu0 %v854
      %2263 = vmatmul.mubr.f32.gmra.mxu0 %v747
      %v2264 = vpop.f32.mrf.mxu0
      %v2265 = vadd.f32 %v1880, %v2264
      %v2266 = vpop.f32.mrf.mxu0
      %2267 = vmatprep.mubr.f32.mxu0 %v853
      %2268 = vmatmul.mubr.f32.gmra.mxu0 %v748
      %v2269 = vpop.f32.mrf.mxu0
      %v2270 = vadd.f32 %v1885, %v2269
      %v2271 = vpop.f32.mrf.mxu0
      %2272 = vmatprep.mubr.f32.mxu0 %v852
      %2273 = vmatmul.mubr.f32.gmra.mxu0 %v749
      %v2274 = vpop.f32.mrf.mxu0
      %v2275 = vadd.f32 %v1890, %v2274
      %v2276 = vpop.f32.mrf.mxu0
      %2277 = vmatprep.mubr.f32.mxu0 %v851
      %2278 = vmatmul.mubr.f32.gmra.mxu0 %v750
      %v2279 = vpop.f32.mrf.mxu0
      %v2280 = vadd.f32 %v1895, %v2279
      %v2281 = vpop.f32.mrf.mxu0
      %2282 = vmatprep.mubr.f32.mxu0 %v850
      %2283 = vmatmul.mubr.f32.gmra.mxu0 %v751
      %v2284 = vpop.f32.mrf.mxu0
      %v2285 = vadd.f32 %v1900, %v2284
      %v2286 = vpop.f32.mrf.mxu0
      %2287 = vmatprep.mubr.f32.mxu0 %v849
      %2288 = vmatmul.mubr.f32.gmra.mxu0 %v752
      %v2289 = vpop.f32.mrf.mxu0
      %v2290 = vadd.f32 %v1905, %v2289
      %v2291 = vpop.f32.mrf.mxu0
      %2292 = vmatprep.mubr.f32.mxu0 %v848
      %2293 = vmatmul.mubr.f32.gmra.mxu0 %v753
      %v2294 = vpop.f32.mrf.mxu0
      %v2295 = vadd.f32 %v1910, %v2294
      %v2296 = vpop.f32.mrf.mxu0
      %2297 = vmatprep.mubr.f32.mxu0 %v847
      %2298 = vmatmul.mubr.f32.gmra.mxu0 %v754
      %v2299 = vpop.f32.mrf.mxu0
      %v2300 = vadd.f32 %v1915, %v2299
      %v2301 = vpop.f32.mrf.mxu0
      %2302 = vmatprep.mubr.f32.mxu0 %v846
      %2303 = vmatmul.mubr.f32.gmra.mxu0 %v755
      %v2304 = vpop.f32.mrf.mxu0
      %v2305 = vadd.f32 %v1920, %v2304
      %v2306 = vpop.f32.mrf.mxu0
      %2307 = vdwg.mxu0
      %2308 = vmatprep.subr.mxu0 0.0
      %2309 = vmatpush1.msra.mxu0 %v1103
      %2310 = vmatprep.subr.mxu0 0.0
      %2311 = vmatpush1.msra.mxu0 %v1102
      %2312 = vmatprep.subr.mxu0 0.0
      %2313 = vmatpush1.msra.mxu0 %v1101
      %2314 = vmatprep.subr.mxu0 0.0
      %2315 = vmatpush1.msra.mxu0 %v1100
      %2316 = vmatprep.subr.mxu0 0.0
      %2317 = vmatpush1.msra.mxu0 %v1099
      %2318 = vmatprep.subr.mxu0 0.0
      %2319 = vmatpush1.msra.mxu0 %v1098
      %2320 = vmatprep.subr.mxu0 0.0
      %2321 = vmatpush1.msra.mxu0 %v1097
      %2322 = vmatprep.subr.mxu0 0.0
      %2323 = vmatpush1.msra.mxu0 %v1096
      %2324 = vmatprep.subr.mxu0 0.0
      %2325 = vmatpush1.msra.mxu0 %v1095
      %2326 = vmatprep.subr.mxu0 0.0
      %2327 = vmatpush1.msra.mxu0 %v1094
      %2328 = vmatprep.subr.mxu0 0.0
      %2329 = vmatpush1.msra.mxu0 %v1093
      %2330 = vmatprep.subr.mxu0 0.0
      %2331 = vmatpush1.msra.mxu0 %v1092
      %2332 = vmatprep.subr.mxu0 0.0
      %2333 = vmatpush1.msra.mxu0 %v1091
      %2334 = vmatprep.subr.mxu0 0.0
      %2335 = vmatpush1.msra.mxu0 %v1090
      %2336 = vmatprep.subr.mxu0 0.0
      %2337 = vmatpush1.msra.mxu0 %v1089
      %2338 = vmatprep.subr.mxu0 0.0
      %2339 = vmatpush1.msra.mxu0 %v1088
      %2340 = vmatprep.subr.mxu0 0.0
      %2341 = vmatpush2.msra.mxu0 0.0
      %2342 = vmatprep.subr.mxu0 0.0
      %2343 = vmatpush2.msra.mxu0 0.0
      %2344 = vmatprep.subr.mxu0 0.0
      %2345 = vmatpush2.msra.mxu0 0.0
      %2346 = vmatprep.subr.mxu0 0.0
      %2347 = vmatpush2.msra.mxu0 0.0
      %2348 = vmatprep.subr.mxu0 0.0
      %2349 = vmatpush2.msra.mxu0 0.0
      %2350 = vmatprep.subr.mxu0 0.0
      %2351 = vmatpush2.msra.mxu0 0.0
      %2352 = vmatprep.subr.mxu0 0.0
      %2353 = vmatpush2.msra.mxu0 0.0
      %2354 = vmatprep.subr.mxu0 0.0
      %2355 = vmatpush2.msra.mxu0 0.0
      %2356 = vmatprep.subr.mxu0 0.0
      %2357 = vmatpush2.msra.mxu0 0.0
      %2358 = vmatprep.subr.mxu0 0.0
      %2359 = vmatpush2.msra.mxu0 0.0
      %2360 = vmatprep.subr.mxu0 0.0
      %2361 = vmatpush2.msra.mxu0 0.0
      %2362 = vmatprep.subr.mxu0 0.0
      %2363 = vmatpush2.msra.mxu0 0.0
      %2364 = vmatprep.subr.mxu0 0.0
      %2365 = vmatpush2.msra.mxu0 0.0
      %2366 = vmatprep.subr.mxu0 0.0
      %2367 = vmatpush2.msra.mxu0 0.0
      %2368 = vmatprep.subr.mxu0 0.0
      %2369 = vmatpush2.msra.mxu0 0.0
      %2370 = vmatprep.subr.mxu0 0.0
      %2371 = vmatpush2.msra.mxu0 0.0
      %2372 = vmatprep.mubr.f32.mxu0 0.0
      %2373 = vmatmul.mubr.f32.gmra.mxu0 %v1054
      %v2374 = vpop.f32.mrf.mxu0
      %v2375 = vadd.f32 %v1990, %v2374
      %v2376 = vpop.f32.mrf.mxu0
      %2377 = vmatprep.mubr.f32.mxu0 0.0
      %2378 = vmatmul.mubr.f32.gmra.mxu0 %v1053
      %v2379 = vpop.f32.mrf.mxu0
      %v2380 = vadd.f32 %v1995, %v2379
      %v2381 = vpop.f32.mrf.mxu0
      %2382 = vmatprep.mubr.f32.mxu0 0.0
      %2383 = vmatmul.mubr.f32.gmra.mxu0 %v1052
      %v2384 = vpop.f32.mrf.mxu0
      %v2385 = vadd.f32 %v2000, %v2384
      %v2386 = vpop.f32.mrf.mxu0
      %2387 = vmatprep.mubr.f32.mxu0 0.0
      %2388 = vmatmul.mubr.f32.gmra.mxu0 %v1051
      %v2389 = vpop.f32.mrf.mxu0
      %v2390 = vadd.f32 %v2005, %v2389
      %v2391 = vpop.f32.mrf.mxu0
      %2392 = vmatprep.mubr.f32.mxu0 0.0
      %2393 = vmatmul.mubr.f32.gmra.mxu0 %v1050
      %v2394 = vpop.f32.mrf.mxu0
      %v2395 = vadd.f32 %v2010, %v2394
      %v2396 = vpop.f32.mrf.mxu0
      %2397 = vmatprep.mubr.f32.mxu0 0.0
      %2398 = vmatmul.mubr.f32.gmra.mxu0 %v1049
      %v2399 = vpop.f32.mrf.mxu0
      %v2400 = vadd.f32 %v2015, %v2399
      %v2401 = vpop.f32.mrf.mxu0
      %2402 = vmatprep.mubr.f32.mxu0 0.0
      %2403 = vmatmul.mubr.f32.gmra.mxu0 %v1048
      %v2404 = vpop.f32.mrf.mxu0
      %v2405 = vadd.f32 %v2020, %v2404
      %v2406 = vpop.f32.mrf.mxu0
      %2407 = vmatprep.mubr.f32.mxu0 0.0
      %2408 = vmatmul.mubr.f32.gmra.mxu0 %v1047
      %v2409 = vpop.f32.mrf.mxu0
      %v2410 = vadd.f32 %v2025, %v2409
      %v2411 = vpop.f32.mrf.mxu0
      %2412 = vmatprep.mubr.f32.mxu0 0.0
      %2413 = vmatmul.mubr.f32.gmra.mxu0 %v1046
      %v2414 = vpop.f32.mrf.mxu0
      %v2415 = vadd.f32 %v2030, %v2414
      %v2416 = vpop.f32.mrf.mxu0
      %2417 = vmatprep.mubr.f32.mxu0 0.0
      %2418 = vmatmul.mubr.f32.gmra.mxu0 %v1045
      %v2419 = vpop.f32.mrf.mxu0
      %v2420 = vadd.f32 %v2035, %v2419
      %v2421 = vpop.f32.mrf.mxu0
      %2422 = vmatprep.mubr.f32.mxu0 0.0
      %2423 = vmatmul.mubr.f32.gmra.mxu0 %v1044
      %v2424 = vpop.f32.mrf.mxu0
      %v2425 = vadd.f32 %v2040, %v2424
      %v2426 = vpop.f32.mrf.mxu0
      %2427 = vmatprep.mubr.f32.mxu0 0.0
      %2428 = vmatmul.mubr.f32.gmra.mxu0 %v1043
      %v2429 = vpop.f32.mrf.mxu0
      %v2430 = vadd.f32 %v2045, %v2429
      %v2431 = vpop.f32.mrf.mxu0
      %2432 = vmatprep.mubr.f32.mxu0 0.0
      %2433 = vmatmul.mubr.f32.gmra.mxu0 %v1042
      %v2434 = vpop.f32.mrf.mxu0
      %v2435 = vadd.f32 %v2050, %v2434
      %v2436 = vpop.f32.mrf.mxu0
      %2437 = vmatprep.mubr.f32.mxu0 0.0
      %2438 = vmatmul.mubr.f32.gmra.mxu0 %v1041
      %v2439 = vpop.f32.mrf.mxu0
      %v2440 = vadd.f32 %v2055, %v2439
      %v2441 = vpop.f32.mrf.mxu0
      %2442 = vmatprep.mubr.f32.mxu0 0.0
      %2443 = vmatmul.mubr.f32.gmra.mxu0 %v1040
      %v2444 = vpop.f32.mrf.mxu0
      %v2445 = vadd.f32 %v2060, %v2444
      %v2446 = vpop.f32.mrf.mxu0
      %2447 = vmatprep.mubr.f32.mxu0 0.0
      %2448 = vmatmul.mubr.f32.gmra.mxu0 %v1039
      %v2449 = vpop.f32.mrf.mxu0
      %v2450 = vadd.f32 %v2065, %v2449
      %v2451 = vpop.f32.mrf.mxu0
      %2452 = vmatprep.mubr.f32.mxu0 0.0
      %2453 = vmatmul.mubr.f32.gmra.mxu0 %v1038
      %v2454 = vpop.f32.mrf.mxu0
      %v2455 = vadd.f32 %v2070, %v2454
      %v2456 = vpop.f32.mrf.mxu0
      %2457 = vmatprep.mubr.f32.mxu0 0.0
      %2458 = vmatmul.mubr.f32.gmra.mxu0 %v1037
      %v2459 = vpop.f32.mrf.mxu0
      %v2460 = vadd.f32 %v2075, %v2459
      %v2461 = vpop.f32.mrf.mxu0
      %2462 = vmatprep.mubr.f32.mxu0 0.0
      %2463 = vmatmul.mubr.f32.gmra.mxu0 %v1036
      %v2464 = vpop.f32.mrf.mxu0
      %v2465 = vadd.f32 %v2080, %v2464
      %v2466 = vpop.f32.mrf.mxu0
      %2467 = vmatprep.mubr.f32.mxu0 0.0
      %2468 = vmatmul.mubr.f32.gmra.mxu0 %v1035
      %v2469 = vpop.f32.mrf.mxu0
      %v2470 = vadd.f32 %v2085, %v2469
      %v2471 = vpop.f32.mrf.mxu0
      %2472 = vmatprep.mubr.f32.mxu0 0.0
      %2473 = vmatmul.mubr.f32.gmra.mxu0 %v1034
      %v2474 = vpop.f32.mrf.mxu0
      %v2475 = vadd.f32 %v2090, %v2474
      %v2476 = vpop.f32.mrf.mxu0
      %2477 = vmatprep.mubr.f32.mxu0 0.0
      %2478 = vmatmul.mubr.f32.gmra.mxu0 %v1033
      %v2479 = vpop.f32.mrf.mxu0
      %v2480 = vadd.f32 %v2095, %v2479
      %v2481 = vpop.f32.mrf.mxu0
      %2482 = vmatprep.mubr.f32.mxu0 0.0
      %2483 = vmatmul.mubr.f32.gmra.mxu0 %v1032
      %v2484 = vpop.f32.mrf.mxu0
      %v2485 = vadd.f32 %v2100, %v2484
      %v2486 = vpop.f32.mrf.mxu0
      %2487 = vmatprep.mubr.f32.mxu0 0.0
      %2488 = vmatmul.mubr.f32.gmra.mxu0 %v1031
      %v2489 = vpop.f32.mrf.mxu0
      %v2490 = vadd.f32 %v2105, %v2489
      %v2491 = vpop.f32.mrf.mxu0
      %2492 = vmatprep.mubr.f32.mxu0 0.0
      %2493 = vmatmul.mubr.f32.gmra.mxu0 %v1030
      %v2494 = vpop.f32.mrf.mxu0
      %v2495 = vadd.f32 %v2110, %v2494
      %v2496 = vpop.f32.mrf.mxu0
      %2497 = vmatprep.mubr.f32.mxu0 0.0
      %2498 = vmatmul.mubr.f32.gmra.mxu0 %v1029
      %v2499 = vpop.f32.mrf.mxu0
      %v2500 = vadd.f32 %v2115, %v2499
      %v2501 = vpop.f32.mrf.mxu0
      %2502 = vmatprep.mubr.f32.mxu0 0.0
      %2503 = vmatmul.mubr.f32.gmra.mxu0 %v1028
      %v2504 = vpop.f32.mrf.mxu0
      %v2505 = vadd.f32 %v2120, %v2504
      %v2506 = vpop.f32.mrf.mxu0
      %2507 = vmatprep.mubr.f32.mxu0 0.0
      %2508 = vmatmul.mubr.f32.gmra.mxu0 %v1027
      %v2509 = vpop.f32.mrf.mxu0
      %v2510 = vadd.f32 %v2125, %v2509
      %v2511 = vpop.f32.mrf.mxu0
      %2512 = vmatprep.mubr.f32.mxu0 0.0
      %2513 = vmatmul.mubr.f32.gmra.mxu0 %v1026
      %v2514 = vpop.f32.mrf.mxu0
      %v2515 = vadd.f32 %v2130, %v2514
      %v2516 = vpop.f32.mrf.mxu0
      %2517 = vmatprep.mubr.f32.mxu0 0.0
      %2518 = vmatmul.mubr.f32.gmra.mxu0 %v1025
      %v2519 = vpop.f32.mrf.mxu0
      %v2520 = vadd.f32 %v2135, %v2519
      %v2521 = vpop.f32.mrf.mxu0
      %2522 = vmatprep.mubr.f32.mxu0 0.0
      %2523 = vmatmul.mubr.f32.gmra.mxu0 %v1024
      %v2524 = vpop.f32.mrf.mxu0
      %v2525 = vadd.f32 %v2140, %v2524
      %v2526 = vpop.f32.mrf.mxu0
      %2527 = vmatprep.mubr.f32.mxu0 0.0
      %2528 = vmatmul.mubr.f32.gmra.mxu0 %v1023
      %v2529 = vpop.f32.mrf.mxu0
      %v2530 = vadd.f32 %v2145, %v2529
      %v2531 = vpop.f32.mrf.mxu0
      %2532 = vmatprep.mubr.f32.mxu0 0.0
      %2533 = vmatmul.mubr.f32.gmra.mxu0 %v1022
      %v2534 = vpop.f32.mrf.mxu0
      %v2535 = vadd.f32 %v2150, %v2534
      %v2536 = vpop.f32.mrf.mxu0
      %2537 = vmatprep.mubr.f32.mxu0 0.0
      %2538 = vmatmul.mubr.f32.gmra.mxu0 %v1021
      %v2539 = vpop.f32.mrf.mxu0
      %v2540 = vadd.f32 %v2155, %v2539
      %v2541 = vpop.f32.mrf.mxu0
      %2542 = vmatprep.mubr.f32.mxu0 0.0
      %2543 = vmatmul.mubr.f32.gmra.mxu0 %v1020
      %v2544 = vpop.f32.mrf.mxu0
      %v2545 = vadd.f32 %v2160, %v2544
      %v2546 = vpop.f32.mrf.mxu0
      %2547 = vmatprep.mubr.f32.mxu0 0.0
      %2548 = vmatmul.mubr.f32.gmra.mxu0 %v1019
      %v2549 = vpop.f32.mrf.mxu0
      %v2550 = vadd.f32 %v2165, %v2549
      %v2551 = vpop.f32.mrf.mxu0
      %2552 = vmatprep.mubr.f32.mxu0 0.0
      %2553 = vmatmul.mubr.f32.gmra.mxu0 %v1018
      %v2554 = vpop.f32.mrf.mxu0
      %v2555 = vadd.f32 %v2170, %v2554
      %v2556 = vpop.f32.mrf.mxu0
      %2557 = vmatprep.mubr.f32.mxu0 0.0
      %2558 = vmatmul.mubr.f32.gmra.mxu0 %v1017
      %v2559 = vpop.f32.mrf.mxu0
      %v2560 = vadd.f32 %v2175, %v2559
      %v2561 = vpop.f32.mrf.mxu0
      %2562 = vmatprep.mubr.f32.mxu0 0.0
      %2563 = vmatmul.mubr.f32.gmra.mxu0 %v1016
      %v2564 = vpop.f32.mrf.mxu0
      %v2565 = vadd.f32 %v2180, %v2564
      %v2566 = vpop.f32.mrf.mxu0
      %2567 = vmatprep.mubr.f32.mxu0 0.0
      %2568 = vmatmul.mubr.f32.gmra.mxu0 %v1015
      %v2569 = vpop.f32.mrf.mxu0
      %v2570 = vadd.f32 %v2185, %v2569
      %v2571 = vpop.f32.mrf.mxu0
      %2572 = vmatprep.mubr.f32.mxu0 0.0
      %2573 = vmatmul.mubr.f32.gmra.mxu0 %v1014
      %v2574 = vpop.f32.mrf.mxu0
      %v2575 = vadd.f32 %v2190, %v2574
      %v2576 = vpop.f32.mrf.mxu0
      %2577 = vmatprep.mubr.f32.mxu0 0.0
      %2578 = vmatmul.mubr.f32.gmra.mxu0 %v1013
      %v2579 = vpop.f32.mrf.mxu0
      %v2580 = vadd.f32 %v2195, %v2579
      %v2581 = vpop.f32.mrf.mxu0
      %2582 = vmatprep.mubr.f32.mxu0 0.0
      %2583 = vmatmul.mubr.f32.gmra.mxu0 %v1012
      %v2584 = vpop.f32.mrf.mxu0
      %v2585 = vadd.f32 %v2200, %v2584
      %v2586 = vpop.f32.mrf.mxu0
      %2587 = vmatprep.mubr.f32.mxu0 0.0
      %2588 = vmatmul.mubr.f32.gmra.mxu0 %v1011
      %v2589 = vpop.f32.mrf.mxu0
      %v2590 = vadd.f32 %v2205, %v2589
      %v2591 = vpop.f32.mrf.mxu0
      %2592 = vmatprep.mubr.f32.mxu0 0.0
      %2593 = vmatmul.mubr.f32.gmra.mxu0 %v1010
      %v2594 = vpop.f32.mrf.mxu0
      %v2595 = vadd.f32 %v2210, %v2594
      %v2596 = vpop.f32.mrf.mxu0
      %2597 = vmatprep.mubr.f32.mxu0 0.0
      %2598 = vmatmul.mubr.f32.gmra.mxu0 %v1009
      %v2599 = vpop.f32.mrf.mxu0
      %v2600 = vadd.f32 %v2215, %v2599
      %v2601 = vpop.f32.mrf.mxu0
      %2602 = vmatprep.mubr.f32.mxu0 0.0
      %2603 = vmatmul.mubr.f32.gmra.mxu0 %v1008
      %v2604 = vpop.f32.mrf.mxu0
      %v2605 = vadd.f32 %v2220, %v2604
      %v2606 = vpop.f32.mrf.mxu0
      %2607 = vmatprep.mubr.f32.mxu0 0.0
      %2608 = vmatmul.mubr.f32.gmra.mxu0 %v1007
      %v2609 = vpop.f32.mrf.mxu0
      %v2610 = vadd.f32 %v2225, %v2609
      %v2611 = vpop.f32.mrf.mxu0
      %2612 = vmatprep.mubr.f32.mxu0 0.0
      %2613 = vmatmul.mubr.f32.gmra.mxu0 %v1006
      %v2614 = vpop.f32.mrf.mxu0
      %v2615 = vadd.f32 %v2230, %v2614
      %v2616 = vpop.f32.mrf.mxu0
      %2617 = vmatprep.mubr.f32.mxu0 0.0
      %2618 = vmatmul.mubr.f32.gmra.mxu0 %v1005
      %v2619 = vpop.f32.mrf.mxu0
      %v2620 = vadd.f32 %v2235, %v2619
      %v2621 = vpop.f32.mrf.mxu0
      %2622 = vmatprep.mubr.f32.mxu0 0.0
      %2623 = vmatmul.mubr.f32.gmra.mxu0 %v1004
      %v2624 = vpop.f32.mrf.mxu0
      %v2625 = vadd.f32 %v2240, %v2624
      %v2626 = vpop.f32.mrf.mxu0
      %2627 = vmatprep.mubr.f32.mxu0 0.0
      %2628 = vmatmul.mubr.f32.gmra.mxu0 %v1003
      %v2629 = vpop.f32.mrf.mxu0
      %v2630 = vadd.f32 %v2245, %v2629
      %v2631 = vpop.f32.mrf.mxu0
      %2632 = vmatprep.mubr.f32.mxu0 0.0
      %2633 = vmatmul.mubr.f32.gmra.mxu0 %v1002
      %v2634 = vpop.f32.mrf.mxu0
      %v2635 = vadd.f32 %v2250, %v2634
      %v2636 = vpop.f32.mrf.mxu0
      %2637 = vmatprep.mubr.f32.mxu0 0.0
      %2638 = vmatmul.mubr.f32.gmra.mxu0 %v1001
      %v2639 = vpop.f32.mrf.mxu0
      %v2640 = vadd.f32 %v2255, %v2639
      %v2641 = vpop.f32.mrf.mxu0
      %2642 = vmatprep.mubr.f32.mxu0 0.0
      %2643 = vmatmul.mubr.f32.gmra.mxu0 %v1000
      %v2644 = vpop.f32.mrf.mxu0
      %v2645 = vadd.f32 %v2260, %v2644
      %v2646 = vpop.f32.mrf.mxu0
      %2647 = vmatprep.mubr.f32.mxu0 0.0
      %2648 = vmatmul.mubr.f32.gmra.mxu0 %v999
      %v2649 = vpop.f32.mrf.mxu0
      %v2650 = vadd.f32 %v2265, %v2649
      %v2651 = vpop.f32.mrf.mxu0
      %2652 = vmatprep.mubr.f32.mxu0 0.0
      %2653 = vmatmul.mubr.f32.gmra.mxu0 %v998
      %v2654 = vpop.f32.mrf.mxu0
      %v2655 = vadd.f32 %v2270, %v2654
      %v2656 = vpop.f32.mrf.mxu0
      %2657 = vmatprep.mubr.f32.mxu0 0.0
      %2658 = vmatmul.mubr.f32.gmra.mxu0 %v997
      %v2659 = vpop.f32.mrf.mxu0
      %v2660 = vadd.f32 %v2275, %v2659
      %v2661 = vpop.f32.mrf.mxu0
      %2662 = vmatprep.mubr.f32.mxu0 0.0
      %2663 = vmatmul.mubr.f32.gmra.mxu0 %v996
      %v2664 = vpop.f32.mrf.mxu0
      %v2665 = vadd.f32 %v2280, %v2664
      %v2666 = vpop.f32.mrf.mxu0
      %2667 = vmatprep.mubr.f32.mxu0 0.0
      %2668 = vmatmul.mubr.f32.gmra.mxu0 %v995
      %v2669 = vpop.f32.mrf.mxu0
      %v2670 = vadd.f32 %v2285, %v2669
      %v2671 = vpop.f32.mrf.mxu0
      %2672 = vmatprep.mubr.f32.mxu0 0.0
      %2673 = vmatmul.mubr.f32.gmra.mxu0 %v994
      %v2674 = vpop.f32.mrf.mxu0
      %v2675 = vadd.f32 %v2290, %v2674
      %v2676 = vpop.f32.mrf.mxu0
      %2677 = vmatprep.mubr.f32.mxu0 0.0
      %2678 = vmatmul.mubr.f32.gmra.mxu0 %v993
      %v2679 = vpop.f32.mrf.mxu0
      %v2680 = vadd.f32 %v2295, %v2679
      %v2681 = vpop.f32.mrf.mxu0
      %2682 = vmatprep.mubr.f32.mxu0 0.0
      %2683 = vmatmul.mubr.f32.gmra.mxu0 %v992
      %v2684 = vpop.f32.mrf.mxu0
      %v2685 = vadd.f32 %v2300, %v2684
      %v2686 = vpop.f32.mrf.mxu0
      %2687 = vmatprep.mubr.f32.mxu0 0.0
      %2688 = vmatmul.mubr.f32.gmra.mxu0 %v991
      %v2689 = vpop.f32.mrf.mxu0
      %v2690 = vadd.f32 %v2305, %v2689
      %v2691 = vpop.f32.mrf.mxu0
      %2692 = vdwg.mxu0
      %s2693 = scalar_lea.vmem %s3, 768
      %v2694 = vld [vmem:[%s2693] sm:$0xff]
      %v2695 = vld [vmem:[%s2693 + $0x8] sm:$0xff]
      %v2696 = vld [vmem:[%s2693 + $0x10] sm:$0xff]
      %v2697 = vld [vmem:[%s2693 + $0x18] sm:$0xff]
      %v2698 = vld [vmem:[%s2693 + $0x20] sm:$0xff]
      %v2699 = vld [vmem:[%s2693 + $0x28] sm:$0xff]
      %v2700 = vld [vmem:[%s2693 + $0x30] sm:$0xff]
      %v2701 = vld [vmem:[%s2693 + $0x38] sm:$0xff]
      %v2702 = vld [vmem:[%s2693 + $0x40] sm:$0xff]
      %v2703 = vld [vmem:[%s2693 + $0x48] sm:$0xff]
      %v2704 = vld [vmem:[%s2693 + $0x50] sm:$0xff]
      %v2705 = vld [vmem:[%s2693 + $0x58] sm:$0xff]
      %v2706 = vld [vmem:[%s2693 + $0x60] sm:$0xff]
      %v2707 = vld [vmem:[%s2693 + $0x68] sm:$0xff]
      %v2708 = vld [vmem:[%s2693 + $0x70] sm:$0xff]
      %v2709 = vld [vmem:[%s2693 + $0x78] sm:$0xff]
      %v2710 = vld [vmem:[%s2693 + $0x80] sm:$0xff]
      %v2711 = vld [vmem:[%s2693 + $0x88] sm:$0xff]
      %v2712 = vld [vmem:[%s2693 + $0x90] sm:$0xff]
      %v2713 = vld [vmem:[%s2693 + $0x98] sm:$0xff]
      %v2714 = vld [vmem:[%s2693 + $0xa0] sm:$0xff]
      %v2715 = vld [vmem:[%s2693 + $0xa8] sm:$0xff]
      %v2716 = vld [vmem:[%s2693 + $0xb0] sm:$0xff]
      %v2717 = vld [vmem:[%s2693 + $0xb8] sm:$0xff]
      %v2718 = vld [vmem:[%s2693 + $0xc0] sm:$0xff]
      %v2719 = vld [vmem:[%s2693 + $0xc8] sm:$0xff]
      %v2720 = vld [vmem:[%s2693 + $0xd0] sm:$0xff]
      %v2721 = vld [vmem:[%s2693 + $0xd8] sm:$0xff]
      %v2722 = vld [vmem:[%s2693 + $0xe0] sm:$0xff]
      %v2723 = vld [vmem:[%s2693 + $0xe8] sm:$0xff]
      %v2724 = vld [vmem:[%s2693 + $0xf0] sm:$0xff]
      %v2725 = vld [vmem:[%s2693 + $0xf8] sm:$0xff]
      %v2726 = vld [vmem:[%s2693 + $0x100] sm:$0xff]
      %v2727 = vld [vmem:[%s2693 + $0x108] sm:$0xff]
      %v2728 = vld [vmem:[%s2693 + $0x110] sm:$0xff]
      %v2729 = vld [vmem:[%s2693 + $0x118] sm:$0xff]
      %v2730 = vld [vmem:[%s2693 + $0x120] sm:$0xff]
      %v2731 = vld [vmem:[%s2693 + $0x128] sm:$0xff]
      %v2732 = vld [vmem:[%s2693 + $0x130] sm:$0xff]
      %v2733 = vld [vmem:[%s2693 + $0x138] sm:$0xff]
      %v2734 = vld [vmem:[%s2693 + $0x140] sm:$0xff]
      %v2735 = vld [vmem:[%s2693 + $0x148] sm:$0xff]
      %v2736 = vld [vmem:[%s2693 + $0x150] sm:$0xff]
      %v2737 = vld [vmem:[%s2693 + $0x158] sm:$0xff]
      %v2738 = vld [vmem:[%s2693 + $0x160] sm:$0xff]
      %v2739 = vld [vmem:[%s2693 + $0x168] sm:$0xff]
      %v2740 = vld [vmem:[%s2693 + $0x170] sm:$0xff]
      %v2741 = vld [vmem:[%s2693 + $0x178] sm:$0xff]
      %2742 = vmatprep.subr.mxu0 0.0
      %2743 = vmatpush1.msra.mxu0 %v2709
      %2744 = vmatprep.subr.mxu0 0.0
      %2745 = vmatpush1.msra.mxu0 %v2708
      %2746 = vmatprep.subr.mxu0 0.0
      %2747 = vmatpush1.msra.mxu0 %v2707
      %2748 = vmatprep.subr.mxu0 0.0
      %2749 = vmatpush1.msra.mxu0 %v2706
      %2750 = vmatprep.subr.mxu0 0.0
      %2751 = vmatpush1.msra.mxu0 %v2705
      %2752 = vmatprep.subr.mxu0 0.0
      %2753 = vmatpush1.msra.mxu0 %v2704
      %2754 = vmatprep.subr.mxu0 0.0
      %2755 = vmatpush1.msra.mxu0 %v2703
      %2756 = vmatprep.subr.mxu0 0.0
      %2757 = vmatpush1.msra.mxu0 %v2702
      %2758 = vmatprep.subr.mxu0 0.0
      %2759 = vmatpush1.msra.mxu0 %v2701
      %2760 = vmatprep.subr.mxu0 0.0
      %2761 = vmatpush1.msra.mxu0 %v2700
      %2762 = vmatprep.subr.mxu0 0.0
      %2763 = vmatpush1.msra.mxu0 %v2699
      %2764 = vmatprep.subr.mxu0 0.0
      %2765 = vmatpush1.msra.mxu0 %v2698
      %2766 = vmatprep.subr.mxu0 0.0
      %2767 = vmatpush1.msra.mxu0 %v2697
      %2768 = vmatprep.subr.mxu0 0.0
      %2769 = vmatpush1.msra.mxu0 %v2696
      %2770 = vmatprep.subr.mxu0 0.0
      %2771 = vmatpush1.msra.mxu0 %v2695
      %2772 = vmatprep.subr.mxu0 0.0
      %2773 = vmatpush1.msra.mxu0 %v2694
      %2774 = vmatprep.subr.mxu0 0.0
      %2775 = vmatpush2.msra.mxu0 %v2725
      %2776 = vmatprep.subr.mxu0 0.0
      %2777 = vmatpush2.msra.mxu0 %v2724
      %2778 = vmatprep.subr.mxu0 0.0
      %2779 = vmatpush2.msra.mxu0 %v2723
      %2780 = vmatprep.subr.mxu0 0.0
      %2781 = vmatpush2.msra.mxu0 %v2722
      %2782 = vmatprep.subr.mxu0 0.0
      %2783 = vmatpush2.msra.mxu0 %v2721
      %2784 = vmatprep.subr.mxu0 0.0
      %2785 = vmatpush2.msra.mxu0 %v2720
      %2786 = vmatprep.subr.mxu0 0.0
      %2787 = vmatpush2.msra.mxu0 %v2719
      %2788 = vmatprep.subr.mxu0 0.0
      %2789 = vmatpush2.msra.mxu0 %v2718
      %2790 = vmatprep.subr.mxu0 0.0
      %2791 = vmatpush2.msra.mxu0 %v2717
      %2792 = vmatprep.subr.mxu0 0.0
      %2793 = vmatpush2.msra.mxu0 %v2716
      %2794 = vmatprep.subr.mxu0 0.0
      %2795 = vmatpush2.msra.mxu0 %v2715
      %2796 = vmatprep.subr.mxu0 0.0
      %2797 = vmatpush2.msra.mxu0 %v2714
      %2798 = vmatprep.subr.mxu0 0.0
      %2799 = vmatpush2.msra.mxu0 %v2713
      %2800 = vmatprep.subr.mxu0 0.0
      %2801 = vmatpush2.msra.mxu0 %v2712
      %2802 = vmatprep.subr.mxu0 0.0
      %2803 = vmatpush2.msra.mxu0 %v2711
      %2804 = vmatprep.subr.mxu0 0.0
      %2805 = vmatpush2.msra.mxu0 %v2710
      %2806 = vmatprep.mubr.f32.mxu0 %v901
      %2807 = vmatmul.mubr.f32.gmra.mxu0 %v700
      %v2808 = vpop.f32.mrf.mxu0
      %v2809 = vadd.f32 0.0, %v2808
      %v2810 = vpop.f32.mrf.mxu0
      %2811 = vmatprep.mubr.f32.mxu0 %v900
      %2812 = vmatmul.mubr.f32.gmra.mxu0 %v701
      %v2813 = vpop.f32.mrf.mxu0
      %v2814 = vadd.f32 0.0, %v2813
      %v2815 = vpop.f32.mrf.mxu0
      %2816 = vmatprep.mubr.f32.mxu0 %v899
      %2817 = vmatmul.mubr.f32.gmra.mxu0 %v702
      %v2818 = vpop.f32.mrf.mxu0
      %v2819 = vadd.f32 0.0, %v2818
      %v2820 = vpop.f32.mrf.mxu0
      %2821 = vmatprep.mubr.f32.mxu0 %v898
      %2822 = vmatmul.mubr.f32.gmra.mxu0 %v703
      %v2823 = vpop.f32.mrf.mxu0
      %v2824 = vadd.f32 0.0, %v2823
      %v2825 = vpop.f32.mrf.mxu0
      %2826 = vmatprep.mubr.f32.mxu0 %v897
      %2827 = vmatmul.mubr.f32.gmra.mxu0 %v704
      %v2828 = vpop.f32.mrf.mxu0
      %v2829 = vadd.f32 0.0, %v2828
      %v2830 = vpop.f32.mrf.mxu0
      %2831 = vmatprep.mubr.f32.mxu0 %v896
      %2832 = vmatmul.mubr.f32.gmra.mxu0 %v705
      %v2833 = vpop.f32.mrf.mxu0
      %v2834 = vadd.f32 0.0, %v2833
      %v2835 = vpop.f32.mrf.mxu0
      %2836 = vmatprep.mubr.f32.mxu0 %v895
      %2837 = vmatmul.mubr.f32.gmra.mxu0 %v706
      %v2838 = vpop.f32.mrf.mxu0
      %v2839 = vadd.f32 0.0, %v2838
      %v2840 = vpop.f32.mrf.mxu0
      %2841 = vmatprep.mubr.f32.mxu0 %v894
      %2842 = vmatmul.mubr.f32.gmra.mxu0 %v707
      %v2843 = vpop.f32.mrf.mxu0
      %v2844 = vadd.f32 0.0, %v2843
      %v2845 = vpop.f32.mrf.mxu0
      %2846 = vmatprep.mubr.f32.mxu0 %v893
      %2847 = vmatmul.mubr.f32.gmra.mxu0 %v708
      %v2848 = vpop.f32.mrf.mxu0
      %v2849 = vadd.f32 0.0, %v2848
      %v2850 = vpop.f32.mrf.mxu0
      %2851 = vmatprep.mubr.f32.mxu0 %v892
      %2852 = vmatmul.mubr.f32.gmra.mxu0 %v709
      %v2853 = vpop.f32.mrf.mxu0
      %v2854 = vadd.f32 0.0, %v2853
      %v2855 = vpop.f32.mrf.mxu0
      %2856 = vmatprep.mubr.f32.mxu0 %v891
      %2857 = vmatmul.mubr.f32.gmra.mxu0 %v710
      %v2858 = vpop.f32.mrf.mxu0
      %v2859 = vadd.f32 0.0, %v2858
      %v2860 = vpop.f32.mrf.mxu0
      %2861 = vmatprep.mubr.f32.mxu0 %v890
      %2862 = vmatmul.mubr.f32.gmra.mxu0 %v711
      %v2863 = vpop.f32.mrf.mxu0
      %v2864 = vadd.f32 0.0, %v2863
      %v2865 = vpop.f32.mrf.mxu0
      %2866 = vmatprep.mubr.f32.mxu0 %v889
      %2867 = vmatmul.mubr.f32.gmra.mxu0 %v712
      %v2868 = vpop.f32.mrf.mxu0
      %v2869 = vadd.f32 0.0, %v2868
      %v2870 = vpop.f32.mrf.mxu0
      %2871 = vmatprep.mubr.f32.mxu0 %v888
      %2872 = vmatmul.mubr.f32.gmra.mxu0 %v713
      %v2873 = vpop.f32.mrf.mxu0
      %v2874 = vadd.f32 0.0, %v2873
      %v2875 = vpop.f32.mrf.mxu0
      %2876 = vmatprep.mubr.f32.mxu0 %v887
      %2877 = vmatmul.mubr.f32.gmra.mxu0 %v714
      %v2878 = vpop.f32.mrf.mxu0
      %v2879 = vadd.f32 0.0, %v2878
      %v2880 = vpop.f32.mrf.mxu0
      %2881 = vmatprep.mubr.f32.mxu0 %v886
      %2882 = vmatmul.mubr.f32.gmra.mxu0 %v715
      %v2883 = vpop.f32.mrf.mxu0
      %v2884 = vadd.f32 0.0, %v2883
      %v2885 = vpop.f32.mrf.mxu0
      %2886 = vmatprep.mubr.f32.mxu0 %v885
      %2887 = vmatmul.mubr.f32.gmra.mxu0 %v716
      %v2888 = vpop.f32.mrf.mxu0
      %v2889 = vadd.f32 0.0, %v2888
      %v2890 = vpop.f32.mrf.mxu0
      %2891 = vmatprep.mubr.f32.mxu0 %v884
      %2892 = vmatmul.mubr.f32.gmra.mxu0 %v717
      %v2893 = vpop.f32.mrf.mxu0
      %v2894 = vadd.f32 0.0, %v2893
      %v2895 = vpop.f32.mrf.mxu0
      %2896 = vmatprep.mubr.f32.mxu0 %v883
      %2897 = vmatmul.mubr.f32.gmra.mxu0 %v718
      %v2898 = vpop.f32.mrf.mxu0
      %v2899 = vadd.f32 0.0, %v2898
      %v2900 = vpop.f32.mrf.mxu0
      %2901 = vmatprep.mubr.f32.mxu0 %v882
      %2902 = vmatmul.mubr.f32.gmra.mxu0 %v719
      %v2903 = vpop.f32.mrf.mxu0
      %v2904 = vadd.f32 0.0, %v2903
      %v2905 = vpop.f32.mrf.mxu0
      %2906 = vmatprep.mubr.f32.mxu0 %v881
      %2907 = vmatmul.mubr.f32.gmra.mxu0 %v720
      %v2908 = vpop.f32.mrf.mxu0
      %v2909 = vadd.f32 0.0, %v2908
      %v2910 = vpop.f32.mrf.mxu0
      %2911 = vmatprep.mubr.f32.mxu0 %v880
      %2912 = vmatmul.mubr.f32.gmra.mxu0 %v721
      %v2913 = vpop.f32.mrf.mxu0
      %v2914 = vadd.f32 0.0, %v2913
      %v2915 = vpop.f32.mrf.mxu0
      %2916 = vmatprep.mubr.f32.mxu0 %v879
      %2917 = vmatmul.mubr.f32.gmra.mxu0 %v722
      %v2918 = vpop.f32.mrf.mxu0
      %v2919 = vadd.f32 0.0, %v2918
      %v2920 = vpop.f32.mrf.mxu0
      %2921 = vmatprep.mubr.f32.mxu0 %v878
      %2922 = vmatmul.mubr.f32.gmra.mxu0 %v723
      %v2923 = vpop.f32.mrf.mxu0
      %v2924 = vadd.f32 0.0, %v2923
      %v2925 = vpop.f32.mrf.mxu0
      %2926 = vmatprep.mubr.f32.mxu0 %v877
      %2927 = vmatmul.mubr.f32.gmra.mxu0 %v724
      %v2928 = vpop.f32.mrf.mxu0
      %v2929 = vadd.f32 0.0, %v2928
      %v2930 = vpop.f32.mrf.mxu0
      %2931 = vmatprep.mubr.f32.mxu0 %v876
      %2932 = vmatmul.mubr.f32.gmra.mxu0 %v725
      %v2933 = vpop.f32.mrf.mxu0
      %v2934 = vadd.f32 0.0, %v2933
      %v2935 = vpop.f32.mrf.mxu0
      %2936 = vmatprep.mubr.f32.mxu0 %v875
      %2937 = vmatmul.mubr.f32.gmra.mxu0 %v726
      %v2938 = vpop.f32.mrf.mxu0
      %v2939 = vadd.f32 0.0, %v2938
      %v2940 = vpop.f32.mrf.mxu0
      %2941 = vmatprep.mubr.f32.mxu0 %v874
      %2942 = vmatmul.mubr.f32.gmra.mxu0 %v727
      %v2943 = vpop.f32.mrf.mxu0
      %v2944 = vadd.f32 0.0, %v2943
      %v2945 = vpop.f32.mrf.mxu0
      %2946 = vmatprep.mubr.f32.mxu0 %v873
      %2947 = vmatmul.mubr.f32.gmra.mxu0 %v728
      %v2948 = vpop.f32.mrf.mxu0
      %v2949 = vadd.f32 0.0, %v2948
      %v2950 = vpop.f32.mrf.mxu0
      %2951 = vmatprep.mubr.f32.mxu0 %v872
      %2952 = vmatmul.mubr.f32.gmra.mxu0 %v729
      %v2953 = vpop.f32.mrf.mxu0
      %v2954 = vadd.f32 0.0, %v2953
      %v2955 = vpop.f32.mrf.mxu0
      %2956 = vmatprep.mubr.f32.mxu0 %v871
      %2957 = vmatmul.mubr.f32.gmra.mxu0 %v730
      %v2958 = vpop.f32.mrf.mxu0
      %v2959 = vadd.f32 0.0, %v2958
      %v2960 = vpop.f32.mrf.mxu0
      %2961 = vmatprep.mubr.f32.mxu0 %v870
      %2962 = vmatmul.mubr.f32.gmra.mxu0 %v731
      %v2963 = vpop.f32.mrf.mxu0
      %v2964 = vadd.f32 0.0, %v2963
      %v2965 = vpop.f32.mrf.mxu0
      %2966 = vmatprep.mubr.f32.mxu0 %v869
      %2967 = vmatmul.mubr.f32.gmra.mxu0 %v732
      %v2968 = vpop.f32.mrf.mxu0
      %v2969 = vadd.f32 0.0, %v2968
      %v2970 = vpop.f32.mrf.mxu0
      %2971 = vmatprep.mubr.f32.mxu0 %v868
      %2972 = vmatmul.mubr.f32.gmra.mxu0 %v733
      %v2973 = vpop.f32.mrf.mxu0
      %v2974 = vadd.f32 0.0, %v2973
      %v2975 = vpop.f32.mrf.mxu0
      %2976 = vmatprep.mubr.f32.mxu0 %v867
      %2977 = vmatmul.mubr.f32.gmra.mxu0 %v734
      %v2978 = vpop.f32.mrf.mxu0
      %v2979 = vadd.f32 0.0, %v2978
      %v2980 = vpop.f32.mrf.mxu0
      %2981 = vmatprep.mubr.f32.mxu0 %v866
      %2982 = vmatmul.mubr.f32.gmra.mxu0 %v735
      %v2983 = vpop.f32.mrf.mxu0
      %v2984 = vadd.f32 0.0, %v2983
      %v2985 = vpop.f32.mrf.mxu0
      %2986 = vmatprep.mubr.f32.mxu0 %v865
      %2987 = vmatmul.mubr.f32.gmra.mxu0 %v736
      %v2988 = vpop.f32.mrf.mxu0
      %v2989 = vadd.f32 0.0, %v2988
      %v2990 = vpop.f32.mrf.mxu0
      %2991 = vmatprep.mubr.f32.mxu0 %v864
      %2992 = vmatmul.mubr.f32.gmra.mxu0 %v737
      %v2993 = vpop.f32.mrf.mxu0
      %v2994 = vadd.f32 0.0, %v2993
      %v2995 = vpop.f32.mrf.mxu0
      %2996 = vmatprep.mubr.f32.mxu0 %v863
      %2997 = vmatmul.mubr.f32.gmra.mxu0 %v738
      %v2998 = vpop.f32.mrf.mxu0
      %v2999 = vadd.f32 0.0, %v2998
      %v3000 = vpop.f32.mrf.mxu0
      %3001 = vmatprep.mubr.f32.mxu0 %v862
      %3002 = vmatmul.mubr.f32.gmra.mxu0 %v739
      %v3003 = vpop.f32.mrf.mxu0
      %v3004 = vadd.f32 0.0, %v3003
      %v3005 = vpop.f32.mrf.mxu0
      %3006 = vmatprep.mubr.f32.mxu0 %v861
      %3007 = vmatmul.mubr.f32.gmra.mxu0 %v740
      %v3008 = vpop.f32.mrf.mxu0
      %v3009 = vadd.f32 0.0, %v3008
      %v3010 = vpop.f32.mrf.mxu0
      %3011 = vmatprep.mubr.f32.mxu0 %v860
      %3012 = vmatmul.mubr.f32.gmra.mxu0 %v741
      %v3013 = vpop.f32.mrf.mxu0
      %v3014 = vadd.f32 0.0, %v3013
      %v3015 = vpop.f32.mrf.mxu0
      %3016 = vmatprep.mubr.f32.mxu0 %v859
      %3017 = vmatmul.mubr.f32.gmra.mxu0 %v742
      %v3018 = vpop.f32.mrf.mxu0
      %v3019 = vadd.f32 0.0, %v3018
      %v3020 = vpop.f32.mrf.mxu0
      %3021 = vmatprep.mubr.f32.mxu0 %v858
      %3022 = vmatmul.mubr.f32.gmra.mxu0 %v743
      %v3023 = vpop.f32.mrf.mxu0
      %v3024 = vadd.f32 0.0, %v3023
      %v3025 = vpop.f32.mrf.mxu0
      %3026 = vmatprep.mubr.f32.mxu0 %v857
      %3027 = vmatmul.mubr.f32.gmra.mxu0 %v744
      %v3028 = vpop.f32.mrf.mxu0
      %v3029 = vadd.f32 0.0, %v3028
      %v3030 = vpop.f32.mrf.mxu0
      %3031 = vmatprep.mubr.f32.mxu0 %v856
      %3032 = vmatmul.mubr.f32.gmra.mxu0 %v745
      %v3033 = vpop.f32.mrf.mxu0
      %v3034 = vadd.f32 0.0, %v3033
      %v3035 = vpop.f32.mrf.mxu0
      %3036 = vmatprep.mubr.f32.mxu0 %v855
      %3037 = vmatmul.mubr.f32.gmra.mxu0 %v746
      %v3038 = vpop.f32.mrf.mxu0
      %v3039 = vadd.f32 0.0, %v3038
      %v3040 = vpop.f32.mrf.mxu0
      %3041 = vmatprep.mubr.f32.mxu0 %v854
      %3042 = vmatmul.mubr.f32.gmra.mxu0 %v747
      %v3043 = vpop.f32.mrf.mxu0
      %v3044 = vadd.f32 0.0, %v3043
      %v3045 = vpop.f32.mrf.mxu0
      %3046 = vmatprep.mubr.f32.mxu0 %v853
      %3047 = vmatmul.mubr.f32.gmra.mxu0 %v748
      %v3048 = vpop.f32.mrf.mxu0
      %v3049 = vadd.f32 0.0, %v3048
      %v3050 = vpop.f32.mrf.mxu0
      %3051 = vmatprep.mubr.f32.mxu0 %v852
      %3052 = vmatmul.mubr.f32.gmra.mxu0 %v749
      %v3053 = vpop.f32.mrf.mxu0
      %v3054 = vadd.f32 0.0, %v3053
      %v3055 = vpop.f32.mrf.mxu0
      %3056 = vmatprep.mubr.f32.mxu0 %v851
      %3057 = vmatmul.mubr.f32.gmra.mxu0 %v750
      %v3058 = vpop.f32.mrf.mxu0
      %v3059 = vadd.f32 0.0, %v3058
      %v3060 = vpop.f32.mrf.mxu0
      %3061 = vmatprep.mubr.f32.mxu0 %v850
      %3062 = vmatmul.mubr.f32.gmra.mxu0 %v751
      %v3063 = vpop.f32.mrf.mxu0
      %v3064 = vadd.f32 0.0, %v3063
      %v3065 = vpop.f32.mrf.mxu0
      %3066 = vmatprep.mubr.f32.mxu0 %v849
      %3067 = vmatmul.mubr.f32.gmra.mxu0 %v752
      %v3068 = vpop.f32.mrf.mxu0
      %v3069 = vadd.f32 0.0, %v3068
      %v3070 = vpop.f32.mrf.mxu0
      %3071 = vmatprep.mubr.f32.mxu0 %v848
      %3072 = vmatmul.mubr.f32.gmra.mxu0 %v753
      %v3073 = vpop.f32.mrf.mxu0
      %v3074 = vadd.f32 0.0, %v3073
      %v3075 = vpop.f32.mrf.mxu0
      %3076 = vmatprep.mubr.f32.mxu0 %v847
      %3077 = vmatmul.mubr.f32.gmra.mxu0 %v754
      %v3078 = vpop.f32.mrf.mxu0
      %v3079 = vadd.f32 0.0, %v3078
      %v3080 = vpop.f32.mrf.mxu0
      %3081 = vmatprep.mubr.f32.mxu0 %v846
      %3082 = vmatmul.mubr.f32.gmra.mxu0 %v755
      %v3083 = vpop.f32.mrf.mxu0
      %v3084 = vadd.f32 0.0, %v3083
      %v3085 = vpop.f32.mrf.mxu0
      %3086 = vmatprep.mubr.f32.mxu0 %v845
      %3087 = vmatmul.mubr.f32.gmra.mxu0 %v756
      %v3088 = vpop.f32.mrf.mxu0
      %v3089 = vadd.f32 0.0, %v3088
      %v3090 = vpop.f32.mrf.mxu0
      %3091 = vmatprep.mubr.f32.mxu0 %v844
      %3092 = vmatmul.mubr.f32.gmra.mxu0 %v757
      %v3093 = vpop.f32.mrf.mxu0
      %v3094 = vadd.f32 0.0, %v3093
      %v3095 = vpop.f32.mrf.mxu0
      %3096 = vmatprep.mubr.f32.mxu0 %v843
      %3097 = vmatmul.mubr.f32.gmra.mxu0 %v758
      %v3098 = vpop.f32.mrf.mxu0
      %v3099 = vadd.f32 0.0, %v3098
      %v3100 = vpop.f32.mrf.mxu0
      %3101 = vmatprep.mubr.f32.mxu0 %v842
      %3102 = vmatmul.mubr.f32.gmra.mxu0 %v759
      %v3103 = vpop.f32.mrf.mxu0
      %v3104 = vadd.f32 0.0, %v3103
      %v3105 = vpop.f32.mrf.mxu0
      %3106 = vmatprep.mubr.f32.mxu0 %v841
      %3107 = vmatmul.mubr.f32.gmra.mxu0 %v760
      %v3108 = vpop.f32.mrf.mxu0
      %v3109 = vadd.f32 0.0, %v3108
      %v3110 = vpop.f32.mrf.mxu0
      %3111 = vmatprep.mubr.f32.mxu0 %v840
      %3112 = vmatmul.mubr.f32.gmra.mxu0 %v761
      %v3113 = vpop.f32.mrf.mxu0
      %v3114 = vadd.f32 0.0, %v3113
      %v3115 = vpop.f32.mrf.mxu0
      %3116 = vmatprep.mubr.f32.mxu0 %v839
      %3117 = vmatmul.mubr.f32.gmra.mxu0 %v762
      %v3118 = vpop.f32.mrf.mxu0
      %v3119 = vadd.f32 0.0, %v3118
      %v3120 = vpop.f32.mrf.mxu0
      %3121 = vmatprep.mubr.f32.mxu0 %v910
      %3122 = vmatmul.mubr.f32.gmra.mxu0 %v763
      %v3123 = vpop.f32.mrf.mxu0
      %v3124 = vadd.f32 0.0, %v3123
      %v3125 = vpop.f32.mrf.mxu0
      %3126 = vdwg.mxu0
      %3127 = vmatprep.subr.mxu0 0.0
      %3128 = vmatpush1.msra.mxu0 %v2741
      %3129 = vmatprep.subr.mxu0 0.0
      %3130 = vmatpush1.msra.mxu0 %v2740
      %3131 = vmatprep.subr.mxu0 0.0
      %3132 = vmatpush1.msra.mxu0 %v2739
      %3133 = vmatprep.subr.mxu0 0.0
      %3134 = vmatpush1.msra.mxu0 %v2738
      %3135 = vmatprep.subr.mxu0 0.0
      %3136 = vmatpush1.msra.mxu0 %v2737
      %3137 = vmatprep.subr.mxu0 0.0
      %3138 = vmatpush1.msra.mxu0 %v2736
      %3139 = vmatprep.subr.mxu0 0.0
      %3140 = vmatpush1.msra.mxu0 %v2735
      %3141 = vmatprep.subr.mxu0 0.0
      %3142 = vmatpush1.msra.mxu0 %v2734
      %3143 = vmatprep.subr.mxu0 0.0
      %3144 = vmatpush1.msra.mxu0 %v2733
      %3145 = vmatprep.subr.mxu0 0.0
      %3146 = vmatpush1.msra.mxu0 %v2732
      %3147 = vmatprep.subr.mxu0 0.0
      %3148 = vmatpush1.msra.mxu0 %v2731
      %3149 = vmatprep.subr.mxu0 0.0
      %3150 = vmatpush1.msra.mxu0 %v2730
      %3151 = vmatprep.subr.mxu0 0.0
      %3152 = vmatpush1.msra.mxu0 %v2729
      %3153 = vmatprep.subr.mxu0 0.0
      %3154 = vmatpush1.msra.mxu0 %v2728
      %3155 = vmatprep.subr.mxu0 0.0
      %3156 = vmatpush1.msra.mxu0 %v2727
      %3157 = vmatprep.subr.mxu0 0.0
      %3158 = vmatpush1.msra.mxu0 %v2726
      %3159 = vmatprep.subr.mxu0 0.0
      %3160 = vmatpush2.msra.mxu0 0.0
      %3161 = vmatprep.subr.mxu0 0.0
      %3162 = vmatpush2.msra.mxu0 0.0
      %3163 = vmatprep.subr.mxu0 0.0
      %3164 = vmatpush2.msra.mxu0 0.0
      %3165 = vmatprep.subr.mxu0 0.0
      %3166 = vmatpush2.msra.mxu0 0.0
      %3167 = vmatprep.subr.mxu0 0.0
      %3168 = vmatpush2.msra.mxu0 0.0
      %3169 = vmatprep.subr.mxu0 0.0
      %3170 = vmatpush2.msra.mxu0 0.0
      %3171 = vmatprep.subr.mxu0 0.0
      %3172 = vmatpush2.msra.mxu0 0.0
      %3173 = vmatprep.subr.mxu0 0.0
      %3174 = vmatpush2.msra.mxu0 0.0
      %3175 = vmatprep.subr.mxu0 0.0
      %3176 = vmatpush2.msra.mxu0 0.0
      %3177 = vmatprep.subr.mxu0 0.0
      %3178 = vmatpush2.msra.mxu0 0.0
      %3179 = vmatprep.subr.mxu0 0.0
      %3180 = vmatpush2.msra.mxu0 0.0
      %3181 = vmatprep.subr.mxu0 0.0
      %3182 = vmatpush2.msra.mxu0 0.0
      %3183 = vmatprep.subr.mxu0 0.0
      %3184 = vmatpush2.msra.mxu0 0.0
      %3185 = vmatprep.subr.mxu0 0.0
      %3186 = vmatpush2.msra.mxu0 0.0
      %3187 = vmatprep.subr.mxu0 0.0
      %3188 = vmatpush2.msra.mxu0 0.0
      %3189 = vmatprep.subr.mxu0 0.0
      %3190 = vmatpush2.msra.mxu0 0.0
      %3191 = vmatprep.mubr.f32.mxu0 0.0
      %3192 = vmatmul.mubr.f32.gmra.mxu0 %v1046
      %v3193 = vpop.f32.mrf.mxu0
      %v3194 = vadd.f32 %v2809, %v3193
      %v3195 = vpop.f32.mrf.mxu0
      %3196 = vmatprep.mubr.f32.mxu0 0.0
      %3197 = vmatmul.mubr.f32.gmra.mxu0 %v1045
      %v3198 = vpop.f32.mrf.mxu0
      %v3199 = vadd.f32 %v2814, %v3198
      %v3200 = vpop.f32.mrf.mxu0
      %3201 = vmatprep.mubr.f32.mxu0 0.0
      %3202 = vmatmul.mubr.f32.gmra.mxu0 %v1044
      %v3203 = vpop.f32.mrf.mxu0
      %v3204 = vadd.f32 %v2819, %v3203
      %v3205 = vpop.f32.mrf.mxu0
      %3206 = vmatprep.mubr.f32.mxu0 0.0
      %3207 = vmatmul.mubr.f32.gmra.mxu0 %v1043
      %v3208 = vpop.f32.mrf.mxu0
      %v3209 = vadd.f32 %v2824, %v3208
      %v3210 = vpop.f32.mrf.mxu0
      %3211 = vmatprep.mubr.f32.mxu0 0.0
      %3212 = vmatmul.mubr.f32.gmra.mxu0 %v1042
      %v3213 = vpop.f32.mrf.mxu0
      %v3214 = vadd.f32 %v2829, %v3213
      %v3215 = vpop.f32.mrf.mxu0
      %3216 = vmatprep.mubr.f32.mxu0 0.0
      %3217 = vmatmul.mubr.f32.gmra.mxu0 %v1041
      %v3218 = vpop.f32.mrf.mxu0
      %v3219 = vadd.f32 %v2834, %v3218
      %v3220 = vpop.f32.mrf.mxu0
      %3221 = vmatprep.mubr.f32.mxu0 0.0
      %3222 = vmatmul.mubr.f32.gmra.mxu0 %v1040
      %v3223 = vpop.f32.mrf.mxu0
      %v3224 = vadd.f32 %v2839, %v3223
      %v3225 = vpop.f32.mrf.mxu0
      %3226 = vmatprep.mubr.f32.mxu0 0.0
      %3227 = vmatmul.mubr.f32.gmra.mxu0 %v1039
      %v3228 = vpop.f32.mrf.mxu0
      %v3229 = vadd.f32 %v2844, %v3228
      %v3230 = vpop.f32.mrf.mxu0
      %3231 = vmatprep.mubr.f32.mxu0 0.0
      %3232 = vmatmul.mubr.f32.gmra.mxu0 %v1038
      %v3233 = vpop.f32.mrf.mxu0
      %v3234 = vadd.f32 %v2849, %v3233
      %v3235 = vpop.f32.mrf.mxu0
      %3236 = vmatprep.mubr.f32.mxu0 0.0
      %3237 = vmatmul.mubr.f32.gmra.mxu0 %v1037
      %v3238 = vpop.f32.mrf.mxu0
      %v3239 = vadd.f32 %v2854, %v3238
      %v3240 = vpop.f32.mrf.mxu0
      %3241 = vmatprep.mubr.f32.mxu0 0.0
      %3242 = vmatmul.mubr.f32.gmra.mxu0 %v1036
      %v3243 = vpop.f32.mrf.mxu0
      %v3244 = vadd.f32 %v2859, %v3243
      %v3245 = vpop.f32.mrf.mxu0
      %3246 = vmatprep.mubr.f32.mxu0 0.0
      %3247 = vmatmul.mubr.f32.gmra.mxu0 %v1035
      %v3248 = vpop.f32.mrf.mxu0
      %v3249 = vadd.f32 %v2864, %v3248
      %v3250 = vpop.f32.mrf.mxu0
      %3251 = vmatprep.mubr.f32.mxu0 0.0
      %3252 = vmatmul.mubr.f32.gmra.mxu0 %v1034
      %v3253 = vpop.f32.mrf.mxu0
      %v3254 = vadd.f32 %v2869, %v3253
      %v3255 = vpop.f32.mrf.mxu0
      %3256 = vmatprep.mubr.f32.mxu0 0.0
      %3257 = vmatmul.mubr.f32.gmra.mxu0 %v1033
      %v3258 = vpop.f32.mrf.mxu0
      %v3259 = vadd.f32 %v2874, %v3258
      %v3260 = vpop.f32.mrf.mxu0
      %3261 = vmatprep.mubr.f32.mxu0 0.0
      %3262 = vmatmul.mubr.f32.gmra.mxu0 %v1032
      %v3263 = vpop.f32.mrf.mxu0
      %v3264 = vadd.f32 %v2879, %v3263
      %v3265 = vpop.f32.mrf.mxu0
      %3266 = vmatprep.mubr.f32.mxu0 0.0
      %3267 = vmatmul.mubr.f32.gmra.mxu0 %v1031
      %v3268 = vpop.f32.mrf.mxu0
      %v3269 = vadd.f32 %v2884, %v3268
      %v3270 = vpop.f32.mrf.mxu0
      %3271 = vmatprep.mubr.f32.mxu0 0.0
      %3272 = vmatmul.mubr.f32.gmra.mxu0 %v1030
      %v3273 = vpop.f32.mrf.mxu0
      %v3274 = vadd.f32 %v2889, %v3273
      %v3275 = vpop.f32.mrf.mxu0
      %3276 = vmatprep.mubr.f32.mxu0 0.0
      %3277 = vmatmul.mubr.f32.gmra.mxu0 %v1029
      %v3278 = vpop.f32.mrf.mxu0
      %v3279 = vadd.f32 %v2894, %v3278
      %v3280 = vpop.f32.mrf.mxu0
      %3281 = vmatprep.mubr.f32.mxu0 0.0
      %3282 = vmatmul.mubr.f32.gmra.mxu0 %v1028
      %v3283 = vpop.f32.mrf.mxu0
      %v3284 = vadd.f32 %v2899, %v3283
      %v3285 = vpop.f32.mrf.mxu0
      %3286 = vmatprep.mubr.f32.mxu0 0.0
      %3287 = vmatmul.mubr.f32.gmra.mxu0 %v1027
      %v3288 = vpop.f32.mrf.mxu0
      %v3289 = vadd.f32 %v2904, %v3288
      %v3290 = vpop.f32.mrf.mxu0
      %3291 = vmatprep.mubr.f32.mxu0 0.0
      %3292 = vmatmul.mubr.f32.gmra.mxu0 %v1026
      %v3293 = vpop.f32.mrf.mxu0
      %v3294 = vadd.f32 %v2909, %v3293
      %v3295 = vpop.f32.mrf.mxu0
      %3296 = vmatprep.mubr.f32.mxu0 0.0
      %3297 = vmatmul.mubr.f32.gmra.mxu0 %v1025
      %v3298 = vpop.f32.mrf.mxu0
      %v3299 = vadd.f32 %v2914, %v3298
      %v3300 = vpop.f32.mrf.mxu0
      %3301 = vmatprep.mubr.f32.mxu0 0.0
      %3302 = vmatmul.mubr.f32.gmra.mxu0 %v1024
      %v3303 = vpop.f32.mrf.mxu0
      %v3304 = vadd.f32 %v2919, %v3303
      %v3305 = vpop.f32.mrf.mxu0
      %3306 = vmatprep.mubr.f32.mxu0 0.0
      %3307 = vmatmul.mubr.f32.gmra.mxu0 %v1023
      %v3308 = vpop.f32.mrf.mxu0
      %v3309 = vadd.f32 %v2924, %v3308
      %v3310 = vpop.f32.mrf.mxu0
      %3311 = vmatprep.mubr.f32.mxu0 0.0
      %3312 = vmatmul.mubr.f32.gmra.mxu0 %v1022
      %v3313 = vpop.f32.mrf.mxu0
      %v3314 = vadd.f32 %v2929, %v3313
      %v3315 = vpop.f32.mrf.mxu0
      %3316 = vmatprep.mubr.f32.mxu0 0.0
      %3317 = vmatmul.mubr.f32.gmra.mxu0 %v1021
      %v3318 = vpop.f32.mrf.mxu0
      %v3319 = vadd.f32 %v2934, %v3318
      %v3320 = vpop.f32.mrf.mxu0
      %3321 = vmatprep.mubr.f32.mxu0 0.0
      %3322 = vmatmul.mubr.f32.gmra.mxu0 %v1020
      %v3323 = vpop.f32.mrf.mxu0
      %v3324 = vadd.f32 %v2939, %v3323
      %v3325 = vpop.f32.mrf.mxu0
      %3326 = vmatprep.mubr.f32.mxu0 0.0
      %3327 = vmatmul.mubr.f32.gmra.mxu0 %v1019
      %v3328 = vpop.f32.mrf.mxu0
      %v3329 = vadd.f32 %v2944, %v3328
      %v3330 = vpop.f32.mrf.mxu0
      %3331 = vmatprep.mubr.f32.mxu0 0.0
      %3332 = vmatmul.mubr.f32.gmra.mxu0 %v1018
      %v3333 = vpop.f32.mrf.mxu0
      %v3334 = vadd.f32 %v2949, %v3333
      %v3335 = vpop.f32.mrf.mxu0
      %3336 = vmatprep.mubr.f32.mxu0 0.0
      %3337 = vmatmul.mubr.f32.gmra.mxu0 %v1017
      %v3338 = vpop.f32.mrf.mxu0
      %v3339 = vadd.f32 %v2954, %v3338
      %v3340 = vpop.f32.mrf.mxu0
      %3341 = vmatprep.mubr.f32.mxu0 0.0
      %3342 = vmatmul.mubr.f32.gmra.mxu0 %v1016
      %v3343 = vpop.f32.mrf.mxu0
      %v3344 = vadd.f32 %v2959, %v3343
      %v3345 = vpop.f32.mrf.mxu0
      %3346 = vmatprep.mubr.f32.mxu0 0.0
      %3347 = vmatmul.mubr.f32.gmra.mxu0 %v1015
      %v3348 = vpop.f32.mrf.mxu0
      %v3349 = vadd.f32 %v2964, %v3348
      %v3350 = vpop.f32.mrf.mxu0
      %3351 = vmatprep.mubr.f32.mxu0 0.0
      %3352 = vmatmul.mubr.f32.gmra.mxu0 %v1014
      %v3353 = vpop.f32.mrf.mxu0
      %v3354 = vadd.f32 %v2969, %v3353
      %v3355 = vpop.f32.mrf.mxu0
      %3356 = vmatprep.mubr.f32.mxu0 0.0
      %3357 = vmatmul.mubr.f32.gmra.mxu0 %v1013
      %v3358 = vpop.f32.mrf.mxu0
      %v3359 = vadd.f32 %v2974, %v3358
      %v3360 = vpop.f32.mrf.mxu0
      %3361 = vmatprep.mubr.f32.mxu0 0.0
      %3362 = vmatmul.mubr.f32.gmra.mxu0 %v1012
      %v3363 = vpop.f32.mrf.mxu0
      %v3364 = vadd.f32 %v2979, %v3363
      %v3365 = vpop.f32.mrf.mxu0
      %3366 = vmatprep.mubr.f32.mxu0 0.0
      %3367 = vmatmul.mubr.f32.gmra.mxu0 %v1011
      %v3368 = vpop.f32.mrf.mxu0
      %v3369 = vadd.f32 %v2984, %v3368
      %v3370 = vpop.f32.mrf.mxu0
      %3371 = vmatprep.mubr.f32.mxu0 0.0
      %3372 = vmatmul.mubr.f32.gmra.mxu0 %v1010
      %v3373 = vpop.f32.mrf.mxu0
      %v3374 = vadd.f32 %v2989, %v3373
      %v3375 = vpop.f32.mrf.mxu0
      %3376 = vmatprep.mubr.f32.mxu0 0.0
      %3377 = vmatmul.mubr.f32.gmra.mxu0 %v1009
      %v3378 = vpop.f32.mrf.mxu0
      %v3379 = vadd.f32 %v2994, %v3378
      %v3380 = vpop.f32.mrf.mxu0
      %3381 = vmatprep.mubr.f32.mxu0 0.0
      %3382 = vmatmul.mubr.f32.gmra.mxu0 %v1008
      %v3383 = vpop.f32.mrf.mxu0
      %v3384 = vadd.f32 %v2999, %v3383
      %v3385 = vpop.f32.mrf.mxu0
      %3386 = vmatprep.mubr.f32.mxu0 0.0
      %3387 = vmatmul.mubr.f32.gmra.mxu0 %v1007
      %v3388 = vpop.f32.mrf.mxu0
      %v3389 = vadd.f32 %v3004, %v3388
      %v3390 = vpop.f32.mrf.mxu0
      %3391 = vmatprep.mubr.f32.mxu0 0.0
      %3392 = vmatmul.mubr.f32.gmra.mxu0 %v1006
      %v3393 = vpop.f32.mrf.mxu0
      %v3394 = vadd.f32 %v3009, %v3393
      %v3395 = vpop.f32.mrf.mxu0
      %3396 = vmatprep.mubr.f32.mxu0 0.0
      %3397 = vmatmul.mubr.f32.gmra.mxu0 %v1005
      %v3398 = vpop.f32.mrf.mxu0
      %v3399 = vadd.f32 %v3014, %v3398
      %v3400 = vpop.f32.mrf.mxu0
      %3401 = vmatprep.mubr.f32.mxu0 0.0
      %3402 = vmatmul.mubr.f32.gmra.mxu0 %v1004
      %v3403 = vpop.f32.mrf.mxu0
      %v3404 = vadd.f32 %v3019, %v3403
      %v3405 = vpop.f32.mrf.mxu0
      %3406 = vmatprep.mubr.f32.mxu0 0.0
      %3407 = vmatmul.mubr.f32.gmra.mxu0 %v1003
      %v3408 = vpop.f32.mrf.mxu0
      %v3409 = vadd.f32 %v3024, %v3408
      %v3410 = vpop.f32.mrf.mxu0
      %3411 = vmatprep.mubr.f32.mxu0 0.0
      %3412 = vmatmul.mubr.f32.gmra.mxu0 %v1002
      %v3413 = vpop.f32.mrf.mxu0
      %v3414 = vadd.f32 %v3029, %v3413
      %v3415 = vpop.f32.mrf.mxu0
      %3416 = vmatprep.mubr.f32.mxu0 0.0
      %3417 = vmatmul.mubr.f32.gmra.mxu0 %v1001
      %v3418 = vpop.f32.mrf.mxu0
      %v3419 = vadd.f32 %v3034, %v3418
      %v3420 = vpop.f32.mrf.mxu0
      %3421 = vmatprep.mubr.f32.mxu0 0.0
      %3422 = vmatmul.mubr.f32.gmra.mxu0 %v1000
      %v3423 = vpop.f32.mrf.mxu0
      %v3424 = vadd.f32 %v3039, %v3423
      %v3425 = vpop.f32.mrf.mxu0
      %3426 = vmatprep.mubr.f32.mxu0 0.0
      %3427 = vmatmul.mubr.f32.gmra.mxu0 %v999
      %v3428 = vpop.f32.mrf.mxu0
      %v3429 = vadd.f32 %v3044, %v3428
      %v3430 = vpop.f32.mrf.mxu0
      %3431 = vmatprep.mubr.f32.mxu0 0.0
      %3432 = vmatmul.mubr.f32.gmra.mxu0 %v998
      %v3433 = vpop.f32.mrf.mxu0
      %v3434 = vadd.f32 %v3049, %v3433
      %v3435 = vpop.f32.mrf.mxu0
      %3436 = vmatprep.mubr.f32.mxu0 0.0
      %3437 = vmatmul.mubr.f32.gmra.mxu0 %v997
      %v3438 = vpop.f32.mrf.mxu0
      %v3439 = vadd.f32 %v3054, %v3438
      %v3440 = vpop.f32.mrf.mxu0
      %3441 = vmatprep.mubr.f32.mxu0 0.0
      %3442 = vmatmul.mubr.f32.gmra.mxu0 %v996
      %v3443 = vpop.f32.mrf.mxu0
      %v3444 = vadd.f32 %v3059, %v3443
      %v3445 = vpop.f32.mrf.mxu0
      %3446 = vmatprep.mubr.f32.mxu0 0.0
      %3447 = vmatmul.mubr.f32.gmra.mxu0 %v995
      %v3448 = vpop.f32.mrf.mxu0
      %v3449 = vadd.f32 %v3064, %v3448
      %v3450 = vpop.f32.mrf.mxu0
      %3451 = vmatprep.mubr.f32.mxu0 0.0
      %3452 = vmatmul.mubr.f32.gmra.mxu0 %v994
      %v3453 = vpop.f32.mrf.mxu0
      %v3454 = vadd.f32 %v3069, %v3453
      %v3455 = vpop.f32.mrf.mxu0
      %3456 = vmatprep.mubr.f32.mxu0 0.0
      %3457 = vmatmul.mubr.f32.gmra.mxu0 %v993
      %v3458 = vpop.f32.mrf.mxu0
      %v3459 = vadd.f32 %v3074, %v3458
      %v3460 = vpop.f32.mrf.mxu0
      %3461 = vmatprep.mubr.f32.mxu0 0.0
      %3462 = vmatmul.mubr.f32.gmra.mxu0 %v992
      %v3463 = vpop.f32.mrf.mxu0
      %v3464 = vadd.f32 %v3079, %v3463
      %v3465 = vpop.f32.mrf.mxu0
      %3466 = vmatprep.mubr.f32.mxu0 0.0
      %3467 = vmatmul.mubr.f32.gmra.mxu0 %v991
      %v3468 = vpop.f32.mrf.mxu0
      %v3469 = vadd.f32 %v3084, %v3468
      %v3470 = vpop.f32.mrf.mxu0
      %3471 = vmatprep.mubr.f32.mxu0 0.0
      %3472 = vmatmul.mubr.f32.gmra.mxu0 %v990
      %v3473 = vpop.f32.mrf.mxu0
      %v3474 = vadd.f32 %v3089, %v3473
      %v3475 = vpop.f32.mrf.mxu0
      %3476 = vmatprep.mubr.f32.mxu0 0.0
      %3477 = vmatmul.mubr.f32.gmra.mxu0 %v989
      %v3478 = vpop.f32.mrf.mxu0
      %v3479 = vadd.f32 %v3094, %v3478
      %v3480 = vpop.f32.mrf.mxu0
      %3481 = vmatprep.mubr.f32.mxu0 0.0
      %3482 = vmatmul.mubr.f32.gmra.mxu0 %v988
      %v3483 = vpop.f32.mrf.mxu0
      %v3484 = vadd.f32 %v3099, %v3483
      %v3485 = vpop.f32.mrf.mxu0
      %3486 = vmatprep.mubr.f32.mxu0 0.0
      %3487 = vmatmul.mubr.f32.gmra.mxu0 %v987
      %v3488 = vpop.f32.mrf.mxu0
      %v3489 = vadd.f32 %v3104, %v3488
      %v3490 = vpop.f32.mrf.mxu0
      %3491 = vmatprep.mubr.f32.mxu0 0.0
      %3492 = vmatmul.mubr.f32.gmra.mxu0 %v986
      %v3493 = vpop.f32.mrf.mxu0
      %v3494 = vadd.f32 %v3109, %v3493
      %v3495 = vpop.f32.mrf.mxu0
      %3496 = vmatprep.mubr.f32.mxu0 0.0
      %3497 = vmatmul.mubr.f32.gmra.mxu0 %v985
      %v3498 = vpop.f32.mrf.mxu0
      %v3499 = vadd.f32 %v3114, %v3498
      %v3500 = vpop.f32.mrf.mxu0
      %3501 = vmatprep.mubr.f32.mxu0 0.0
      %3502 = vmatmul.mubr.f32.gmra.mxu0 %v984
      %v3503 = vpop.f32.mrf.mxu0
      %v3504 = vadd.f32 %v3119, %v3503
      %v3505 = vpop.f32.mrf.mxu0
      %3506 = vmatprep.mubr.f32.mxu0 0.0
      %3507 = vmatmul.mubr.f32.gmra.mxu0 %v1055
      %v3508 = vpop.f32.mrf.mxu0
      %v3509 = vadd.f32 %v3124, %v3508
      %v3510 = vpop.f32.mrf.mxu0
      %3511 = vdwg.mxu0
      %v3512 = vadd.f32 %v2375, %v3194
      %v3513 = vadd.f32 %v2380, %v3199
      %v3514 = vadd.f32 %v2385, %v3204
      %v3515 = vadd.f32 %v2390, %v3209
      %v3516 = vadd.f32 %v2395, %v3214
      %v3517 = vadd.f32 %v2400, %v3219
      %v3518 = vadd.f32 %v2405, %v3224
      %v3519 = vadd.f32 %v2410, %v3229
      %v3520 = vadd.f32 %v2415, %v3234
      %v3521 = vadd.f32 %v2420, %v3239
      %v3522 = vadd.f32 %v2425, %v3244
      %v3523 = vadd.f32 %v2430, %v3249
      %v3524 = vadd.f32 %v2435, %v3254
      %v3525 = vadd.f32 %v2440, %v3259
      %v3526 = vadd.f32 %v2445, %v3264
      %v3527 = vadd.f32 %v2450, %v3269
      %v3528 = vadd.f32 %v2455, %v3274
      %v3529 = vadd.f32 %v2460, %v3279
      %v3530 = vadd.f32 %v2465, %v3284
      %v3531 = vadd.f32 %v2470, %v3289
      %v3532 = vadd.f32 %v2475, %v3294
      %v3533 = vadd.f32 %v2480, %v3299
      %v3534 = vadd.f32 %v2485, %v3304
      %v3535 = vadd.f32 %v2490, %v3309
      %v3536 = vadd.f32 %v2495, %v3314
      %v3537 = vadd.f32 %v2500, %v3319
      %v3538 = vadd.f32 %v2505, %v3324
      %v3539 = vadd.f32 %v2510, %v3329
      %v3540 = vadd.f32 %v2515, %v3334
      %v3541 = vadd.f32 %v2520, %v3339
      %v3542 = vadd.f32 %v2525, %v3344
      %v3543 = vadd.f32 %v2530, %v3349
      %v3544 = vadd.f32 %v2535, %v3354
      %v3545 = vadd.f32 %v2540, %v3359
      %v3546 = vadd.f32 %v2545, %v3364
      %v3547 = vadd.f32 %v2550, %v3369
      %v3548 = vadd.f32 %v2555, %v3374
      %v3549 = vadd.f32 %v2560, %v3379
      %v3550 = vadd.f32 %v2565, %v3384
      %v3551 = vadd.f32 %v2570, %v3389
      %v3552 = vadd.f32 %v2575, %v3394
      %v3553 = vadd.f32 %v2580, %v3399
      %v3554 = vadd.f32 %v2585, %v3404
      %v3555 = vadd.f32 %v2590, %v3409
      %v3556 = vadd.f32 %v2595, %v3414
      %v3557 = vadd.f32 %v2600, %v3419
      %v3558 = vadd.f32 %v2605, %v3424
      %v3559 = vadd.f32 %v2610, %v3429
      %v3560 = vadd.f32 %v2615, %v3434
      %v3561 = vadd.f32 %v2620, %v3439
      %v3562 = vadd.f32 %v2625, %v3444
      %v3563 = vadd.f32 %v2630, %v3449
      %v3564 = vadd.f32 %v2635, %v3454
      %v3565 = vadd.f32 %v2640, %v3459
      %v3566 = vadd.f32 %v2645, %v3464
      %v3567 = vadd.f32 %v2650, %v3469
      %v3568 = vadd.f32 %v2655, %v3474
      %v3569 = vadd.f32 %v2660, %v3479
      %v3570 = vadd.f32 %v2665, %v3484
      %v3571 = vadd.f32 %v2670, %v3489
      %v3572 = vadd.f32 %v2675, %v3494
      %v3573 = vadd.f32 %v2680, %v3499
      %v3574 = vadd.f32 %v2685, %v3504
      %v3575 = vadd.f32 %v2690, %v3509
      %v3576 = vmul.f32 %v3512, %v3512
      %v3577 = vmul.f32 %v3513, %v3513
      %v3578 = vmul.f32 %v3514, %v3514
      %v3579 = vmul.f32 %v3515, %v3515
      %v3580 = vmul.f32 %v3516, %v3516
      %v3581 = vmul.f32 %v3517, %v3517
      %v3582 = vmul.f32 %v3518, %v3518
      %v3583 = vmul.f32 %v3519, %v3519
      %v3584 = vmul.f32 %v3520, %v3520
      %v3585 = vmul.f32 %v3521, %v3521
      %v3586 = vmul.f32 %v3522, %v3522
      %v3587 = vmul.f32 %v3523, %v3523
      %v3588 = vmul.f32 %v3524, %v3524
      %v3589 = vmul.f32 %v3525, %v3525
      %v3590 = vmul.f32 %v3526, %v3526
      %v3591 = vmul.f32 %v3527, %v3527
      %v3592 = vmul.f32 %v3528, %v3528
      %v3593 = vmul.f32 %v3529, %v3529
      %v3594 = vmul.f32 %v3530, %v3530
      %v3595 = vmul.f32 %v3531, %v3531
      %v3596 = vmul.f32 %v3532, %v3532
      %v3597 = vmul.f32 %v3533, %v3533
      %v3598 = vmul.f32 %v3534, %v3534
      %v3599 = vmul.f32 %v3535, %v3535
      %v3600 = vmul.f32 %v3536, %v3536
      %v3601 = vmul.f32 %v3537, %v3537
      %v3602 = vmul.f32 %v3538, %v3538
      %v3603 = vmul.f32 %v3539, %v3539
      %v3604 = vmul.f32 %v3540, %v3540
      %v3605 = vmul.f32 %v3541, %v3541
      %v3606 = vmul.f32 %v3542, %v3542
      %v3607 = vmul.f32 %v3543, %v3543
      %v3608 = vmul.f32 %v3544, %v3544
      %v3609 = vmul.f32 %v3545, %v3545
      %v3610 = vmul.f32 %v3546, %v3546
      %v3611 = vmul.f32 %v3547, %v3547
      %v3612 = vmul.f32 %v3548, %v3548
      %v3613 = vmul.f32 %v3549, %v3549
      %v3614 = vmul.f32 %v3550, %v3550
      %v3615 = vmul.f32 %v3551, %v3551
      %v3616 = vmul.f32 %v3552, %v3552
      %v3617 = vmul.f32 %v3553, %v3553
      %v3618 = vmul.f32 %v3554, %v3554
      %v3619 = vmul.f32 %v3555, %v3555
      %v3620 = vmul.f32 %v3556, %v3556
      %v3621 = vmul.f32 %v3557, %v3557
      %v3622 = vmul.f32 %v3558, %v3558
      %v3623 = vmul.f32 %v3559, %v3559
      %v3624 = vmul.f32 %v3560, %v3560
      %v3625 = vmul.f32 %v3561, %v3561
      %v3626 = vmul.f32 %v3562, %v3562
      %v3627 = vmul.f32 %v3563, %v3563
      %v3628 = vmul.f32 %v3564, %v3564
      %v3629 = vmul.f32 %v3565, %v3565
      %v3630 = vmul.f32 %v3566, %v3566
      %v3631 = vmul.f32 %v3567, %v3567
      %v3632 = vmul.f32 %v3568, %v3568
      %v3633 = vmul.f32 %v3569, %v3569
      %v3634 = vmul.f32 %v3570, %v3570
      %v3635 = vmul.f32 %v3571, %v3571
      %v3636 = vmul.f32 %v3572, %v3572
      %v3637 = vmul.f32 %v3573, %v3573
      %v3638 = vmul.f32 %v3574, %v3574
      %v3639 = vmul.f32 %v3575, %v3575
      %v3640 = vld [vmem:[%s4] sm:$0xff]
      %v3641 = vld [vmem:[%s4 + $0x8] sm:$0xff]
      %v3642 = vld [vmem:[%s4 + $0x10] sm:$0xff]
      %v3643 = vld [vmem:[%s4 + $0x18] sm:$0xff]
      %v3644 = vld [vmem:[%s4 + $0x20] sm:$0xff]
      %v3645 = vld [vmem:[%s4 + $0x28] sm:$0xff]
      %v3646 = vld [vmem:[%s4 + $0x30] sm:$0xff]
      %v3647 = vld [vmem:[%s4 + $0x38] sm:$0xff]
      %v3648 = vld [vmem:[%s4 + $0x40] sm:$0xff]
      %v3649 = vld [vmem:[%s4 + $0x48] sm:$0xff]
      %v3650 = vld [vmem:[%s4 + $0x50] sm:$0xff]
      %v3651 = vld [vmem:[%s4 + $0x58] sm:$0xff]
      %v3652 = vld [vmem:[%s4 + $0x60] sm:$0xff]
      %v3653 = vld [vmem:[%s4 + $0x68] sm:$0xff]
      %v3654 = vld [vmem:[%s4 + $0x70] sm:$0xff]
      %v3655 = vld [vmem:[%s4 + $0x78] sm:$0xff]
      %v3656 = vld [vmem:[%s5] sm:$0x1]
      %v3658 = vlaneseq
      %v3659 = vshrl.u32 %v3658, 7
      %v3660 = vsub.s32 0, %v3659
      %v3661 = vrot.slane %v3656, %v3660
      %3663 = vmatprep.subr.mxu0 0.0
      %3664 = vmatpush1.msra.mxu0 %v3655
      %3665 = vmatprep.subr.mxu0 0.0
      %3666 = vmatpush1.msra.mxu0 %v3654
      %3667 = vmatprep.subr.mxu0 0.0
      %3668 = vmatpush1.msra.mxu0 %v3653
      %3669 = vmatprep.subr.mxu0 0.0
      %3670 = vmatpush1.msra.mxu0 %v3652
      %3671 = vmatprep.subr.mxu0 0.0
      %3672 = vmatpush1.msra.mxu0 %v3651
      %3673 = vmatprep.subr.mxu0 0.0
      %3674 = vmatpush1.msra.mxu0 %v3650
      %3675 = vmatprep.subr.mxu0 0.0
      %3676 = vmatpush1.msra.mxu0 %v3649
      %3677 = vmatprep.subr.mxu0 0.0
      %3678 = vmatpush1.msra.mxu0 %v3648
      %3679 = vmatprep.subr.mxu0 0.0
      %3680 = vmatpush1.msra.mxu0 %v3647
      %3681 = vmatprep.subr.mxu0 0.0
      %3682 = vmatpush1.msra.mxu0 %v3646
      %3683 = vmatprep.subr.mxu0 0.0
      %3684 = vmatpush1.msra.mxu0 %v3645
      %3685 = vmatprep.subr.mxu0 0.0
      %3686 = vmatpush1.msra.mxu0 %v3644
      %3687 = vmatprep.subr.mxu0 0.0
      %3688 = vmatpush1.msra.mxu0 %v3643
      %3689 = vmatprep.subr.mxu0 0.0
      %3690 = vmatpush1.msra.mxu0 %v3642
      %3691 = vmatprep.subr.mxu0 0.0
      %3692 = vmatpush1.msra.mxu0 %v3641
      %3693 = vmatprep.subr.mxu0 0.0
      %3694 = vmatpush1.msra.mxu0 %v3640
      %3695 = vmatprep.subr.mxu0 0.0
      %3696 = vmatpush2.msra.mxu0 0.0
      %3697 = vmatprep.subr.mxu0 0.0
      %3698 = vmatpush2.msra.mxu0 0.0
      %3699 = vmatprep.subr.mxu0 0.0
      %3700 = vmatpush2.msra.mxu0 0.0
      %3701 = vmatprep.subr.mxu0 0.0
      %3702 = vmatpush2.msra.mxu0 0.0
      %3703 = vmatprep.subr.mxu0 0.0
      %3704 = vmatpush2.msra.mxu0 0.0
      %3705 = vmatprep.subr.mxu0 0.0
      %3706 = vmatpush2.msra.mxu0 0.0
      %3707 = vmatprep.subr.mxu0 0.0
      %3708 = vmatpush2.msra.mxu0 0.0
      %3709 = vmatprep.subr.mxu0 0.0
      %3710 = vmatpush2.msra.mxu0 0.0
      %3711 = vmatprep.subr.mxu0 0.0
      %3712 = vmatpush2.msra.mxu0 0.0
      %3713 = vmatprep.subr.mxu0 0.0
      %3714 = vmatpush2.msra.mxu0 0.0
      %3715 = vmatprep.subr.mxu0 0.0
      %3716 = vmatpush2.msra.mxu0 0.0
      %3717 = vmatprep.subr.mxu0 0.0
      %3718 = vmatpush2.msra.mxu0 0.0
      %3719 = vmatprep.subr.mxu0 0.0
      %3720 = vmatpush2.msra.mxu0 0.0
      %3721 = vmatprep.subr.mxu0 0.0
      %3722 = vmatpush2.msra.mxu0 0.0
      %3723 = vmatprep.subr.mxu0 0.0
      %3724 = vmatpush2.msra.mxu0 0.0
      %3725 = vmatprep.subr.mxu0 0.0
      %3726 = vmatpush2.msra.mxu0 0.0
      %3727 = vmatprep.mubr.f32.mxu0 0.0
      %3728 = vmatmul.mubr.f32.gmra.mxu0 %v3576
      %v3729 = vpop.f32.mrf.mxu0
      %v3730 = vadd.f32 %v3661, %v3729
      %v3731 = vpop.f32.mrf.mxu0
      %3732 = vmatprep.mubr.f32.mxu0 0.0
      %3733 = vmatmul.mubr.f32.gmra.mxu0 %v3577
      %v3734 = vpop.f32.mrf.mxu0
      %v3735 = vadd.f32 %v3661, %v3734
      %v3736 = vpop.f32.mrf.mxu0
      %3737 = vmatprep.mubr.f32.mxu0 0.0
      %3738 = vmatmul.mubr.f32.gmra.mxu0 %v3578
      %v3739 = vpop.f32.mrf.mxu0
      %v3740 = vadd.f32 %v3661, %v3739
      %v3741 = vpop.f32.mrf.mxu0
      %3742 = vmatprep.mubr.f32.mxu0 0.0
      %3743 = vmatmul.mubr.f32.gmra.mxu0 %v3579
      %v3744 = vpop.f32.mrf.mxu0
      %v3745 = vadd.f32 %v3661, %v3744
      %v3746 = vpop.f32.mrf.mxu0
      %3747 = vmatprep.mubr.f32.mxu0 0.0
      %3748 = vmatmul.mubr.f32.gmra.mxu0 %v3580
      %v3749 = vpop.f32.mrf.mxu0
      %v3750 = vadd.f32 %v3661, %v3749
      %v3751 = vpop.f32.mrf.mxu0
      %3752 = vmatprep.mubr.f32.mxu0 0.0
      %3753 = vmatmul.mubr.f32.gmra.mxu0 %v3581
      %v3754 = vpop.f32.mrf.mxu0
      %v3755 = vadd.f32 %v3661, %v3754
      %v3756 = vpop.f32.mrf.mxu0
      %3757 = vmatprep.mubr.f32.mxu0 0.0
      %3758 = vmatmul.mubr.f32.gmra.mxu0 %v3582
      %v3759 = vpop.f32.mrf.mxu0
      %v3760 = vadd.f32 %v3661, %v3759
      %v3761 = vpop.f32.mrf.mxu0
      %3762 = vmatprep.mubr.f32.mxu0 0.0
      %3763 = vmatmul.mubr.f32.gmra.mxu0 %v3583
      %v3764 = vpop.f32.mrf.mxu0
      %v3765 = vadd.f32 %v3661, %v3764
      %v3766 = vpop.f32.mrf.mxu0
      %3767 = vmatprep.mubr.f32.mxu0 0.0
      %3768 = vmatmul.mubr.f32.gmra.mxu0 %v3584
      %v3769 = vpop.f32.mrf.mxu0
      %v3770 = vadd.f32 %v3661, %v3769
      %v3771 = vpop.f32.mrf.mxu0
      %3772 = vmatprep.mubr.f32.mxu0 0.0
      %3773 = vmatmul.mubr.f32.gmra.mxu0 %v3585
      %v3774 = vpop.f32.mrf.mxu0
      %v3775 = vadd.f32 %v3661, %v3774
      %v3776 = vpop.f32.mrf.mxu0
      %3777 = vmatprep.mubr.f32.mxu0 0.0
      %3778 = vmatmul.mubr.f32.gmra.mxu0 %v3586
      %v3779 = vpop.f32.mrf.mxu0
      %v3780 = vadd.f32 %v3661, %v3779
      %v3781 = vpop.f32.mrf.mxu0
      %3782 = vmatprep.mubr.f32.mxu0 0.0
      %3783 = vmatmul.mubr.f32.gmra.mxu0 %v3587
      %v3784 = vpop.f32.mrf.mxu0
      %v3785 = vadd.f32 %v3661, %v3784
      %v3786 = vpop.f32.mrf.mxu0
      %3787 = vmatprep.mubr.f32.mxu0 0.0
      %3788 = vmatmul.mubr.f32.gmra.mxu0 %v3588
      %v3789 = vpop.f32.mrf.mxu0
      %v3790 = vadd.f32 %v3661, %v3789
      %v3791 = vpop.f32.mrf.mxu0
      %3792 = vmatprep.mubr.f32.mxu0 0.0
      %3793 = vmatmul.mubr.f32.gmra.mxu0 %v3589
      %v3794 = vpop.f32.mrf.mxu0
      %v3795 = vadd.f32 %v3661, %v3794
      %v3796 = vpop.f32.mrf.mxu0
      %3797 = vmatprep.mubr.f32.mxu0 0.0
      %3798 = vmatmul.mubr.f32.gmra.mxu0 %v3590
      %v3799 = vpop.f32.mrf.mxu0
      %v3800 = vadd.f32 %v3661, %v3799
      %v3801 = vpop.f32.mrf.mxu0
      %3802 = vmatprep.mubr.f32.mxu0 0.0
      %3803 = vmatmul.mubr.f32.gmra.mxu0 %v3591
      %v3804 = vpop.f32.mrf.mxu0
      %v3805 = vadd.f32 %v3661, %v3804
      %v3806 = vpop.f32.mrf.mxu0
      %3807 = vmatprep.mubr.f32.mxu0 0.0
      %3808 = vmatmul.mubr.f32.gmra.mxu0 %v3592
      %v3809 = vpop.f32.mrf.mxu0
      %v3810 = vadd.f32 %v3661, %v3809
      %v3811 = vpop.f32.mrf.mxu0
      %3812 = vmatprep.mubr.f32.mxu0 0.0
      %3813 = vmatmul.mubr.f32.gmra.mxu0 %v3593
      %v3814 = vpop.f32.mrf.mxu0
      %v3815 = vadd.f32 %v3661, %v3814
      %v3816 = vpop.f32.mrf.mxu0
      %3817 = vmatprep.mubr.f32.mxu0 0.0
      %3818 = vmatmul.mubr.f32.gmra.mxu0 %v3594
      %v3819 = vpop.f32.mrf.mxu0
      %v3820 = vadd.f32 %v3661, %v3819
      %v3821 = vpop.f32.mrf.mxu0
      %3822 = vmatprep.mubr.f32.mxu0 0.0
      %3823 = vmatmul.mubr.f32.gmra.mxu0 %v3595
      %v3824 = vpop.f32.mrf.mxu0
      %v3825 = vadd.f32 %v3661, %v3824
      %v3826 = vpop.f32.mrf.mxu0
      %3827 = vmatprep.mubr.f32.mxu0 0.0
      %3828 = vmatmul.mubr.f32.gmra.mxu0 %v3596
      %v3829 = vpop.f32.mrf.mxu0
      %v3830 = vadd.f32 %v3661, %v3829
      %v3831 = vpop.f32.mrf.mxu0
      %3832 = vmatprep.mubr.f32.mxu0 0.0
      %3833 = vmatmul.mubr.f32.gmra.mxu0 %v3597
      %v3834 = vpop.f32.mrf.mxu0
      %v3835 = vadd.f32 %v3661, %v3834
      %v3836 = vpop.f32.mrf.mxu0
      %3837 = vmatprep.mubr.f32.mxu0 0.0
      %3838 = vmatmul.mubr.f32.gmra.mxu0 %v3598
      %v3839 = vpop.f32.mrf.mxu0
      %v3840 = vadd.f32 %v3661, %v3839
      %v3841 = vpop.f32.mrf.mxu0
      %3842 = vmatprep.mubr.f32.mxu0 0.0
      %3843 = vmatmul.mubr.f32.gmra.mxu0 %v3599
      %v3844 = vpop.f32.mrf.mxu0
      %v3845 = vadd.f32 %v3661, %v3844
      %v3846 = vpop.f32.mrf.mxu0
      %3847 = vmatprep.mubr.f32.mxu0 0.0
      %3848 = vmatmul.mubr.f32.gmra.mxu0 %v3600
      %v3849 = vpop.f32.mrf.mxu0
      %v3850 = vadd.f32 %v3661, %v3849
      %v3851 = vpop.f32.mrf.mxu0
      %3852 = vmatprep.mubr.f32.mxu0 0.0
      %3853 = vmatmul.mubr.f32.gmra.mxu0 %v3601
      %v3854 = vpop.f32.mrf.mxu0
      %v3855 = vadd.f32 %v3661, %v3854
      %v3856 = vpop.f32.mrf.mxu0
      %3857 = vmatprep.mubr.f32.mxu0 0.0
      %3858 = vmatmul.mubr.f32.gmra.mxu0 %v3602
      %v3859 = vpop.f32.mrf.mxu0
      %v3860 = vadd.f32 %v3661, %v3859
      %v3861 = vpop.f32.mrf.mxu0
      %3862 = vmatprep.mubr.f32.mxu0 0.0
      %3863 = vmatmul.mubr.f32.gmra.mxu0 %v3603
      %v3864 = vpop.f32.mrf.mxu0
      %v3865 = vadd.f32 %v3661, %v3864
      %v3866 = vpop.f32.mrf.mxu0
      %3867 = vmatprep.mubr.f32.mxu0 0.0
      %3868 = vmatmul.mubr.f32.gmra.mxu0 %v3604
      %v3869 = vpop.f32.mrf.mxu0
      %v3870 = vadd.f32 %v3661, %v3869
      %v3871 = vpop.f32.mrf.mxu0
      %3872 = vmatprep.mubr.f32.mxu0 0.0
      %3873 = vmatmul.mubr.f32.gmra.mxu0 %v3605
      %v3874 = vpop.f32.mrf.mxu0
      %v3875 = vadd.f32 %v3661, %v3874
      %v3876 = vpop.f32.mrf.mxu0
      %3877 = vmatprep.mubr.f32.mxu0 0.0
      %3878 = vmatmul.mubr.f32.gmra.mxu0 %v3606
      %v3879 = vpop.f32.mrf.mxu0
      %v3880 = vadd.f32 %v3661, %v3879
      %v3881 = vpop.f32.mrf.mxu0
      %3882 = vmatprep.mubr.f32.mxu0 0.0
      %3883 = vmatmul.mubr.f32.gmra.mxu0 %v3607
      %v3884 = vpop.f32.mrf.mxu0
      %v3885 = vadd.f32 %v3661, %v3884
      %v3886 = vpop.f32.mrf.mxu0
      %3887 = vmatprep.mubr.f32.mxu0 0.0
      %3888 = vmatmul.mubr.f32.gmra.mxu0 %v3608
      %v3889 = vpop.f32.mrf.mxu0
      %v3890 = vadd.f32 %v3661, %v3889
      %v3891 = vpop.f32.mrf.mxu0
      %3892 = vmatprep.mubr.f32.mxu0 0.0
      %3893 = vmatmul.mubr.f32.gmra.mxu0 %v3609
      %v3894 = vpop.f32.mrf.mxu0
      %v3895 = vadd.f32 %v3661, %v3894
      %v3896 = vpop.f32.mrf.mxu0
      %3897 = vmatprep.mubr.f32.mxu0 0.0
      %3898 = vmatmul.mubr.f32.gmra.mxu0 %v3610
      %v3899 = vpop.f32.mrf.mxu0
      %v3900 = vadd.f32 %v3661, %v3899
      %v3901 = vpop.f32.mrf.mxu0
      %3902 = vmatprep.mubr.f32.mxu0 0.0
      %3903 = vmatmul.mubr.f32.gmra.mxu0 %v3611
      %v3904 = vpop.f32.mrf.mxu0
      %v3905 = vadd.f32 %v3661, %v3904
      %v3906 = vpop.f32.mrf.mxu0
      %3907 = vmatprep.mubr.f32.mxu0 0.0
      %3908 = vmatmul.mubr.f32.gmra.mxu0 %v3612
      %v3909 = vpop.f32.mrf.mxu0
      %v3910 = vadd.f32 %v3661, %v3909
      %v3911 = vpop.f32.mrf.mxu0
      %3912 = vmatprep.mubr.f32.mxu0 0.0
      %3913 = vmatmul.mubr.f32.gmra.mxu0 %v3613
      %v3914 = vpop.f32.mrf.mxu0
      %v3915 = vadd.f32 %v3661, %v3914
      %v3916 = vpop.f32.mrf.mxu0
      %3917 = vmatprep.mubr.f32.mxu0 0.0
      %3918 = vmatmul.mubr.f32.gmra.mxu0 %v3614
      %v3919 = vpop.f32.mrf.mxu0
      %v3920 = vadd.f32 %v3661, %v3919
      %v3921 = vpop.f32.mrf.mxu0
      %3922 = vmatprep.mubr.f32.mxu0 0.0
      %3923 = vmatmul.mubr.f32.gmra.mxu0 %v3615
      %v3924 = vpop.f32.mrf.mxu0
      %v3925 = vadd.f32 %v3661, %v3924
      %v3926 = vpop.f32.mrf.mxu0
      %3927 = vmatprep.mubr.f32.mxu0 0.0
      %3928 = vmatmul.mubr.f32.gmra.mxu0 %v3616
      %v3929 = vpop.f32.mrf.mxu0
      %v3930 = vadd.f32 %v3661, %v3929
      %v3931 = vpop.f32.mrf.mxu0
      %3932 = vmatprep.mubr.f32.mxu0 0.0
      %3933 = vmatmul.mubr.f32.gmra.mxu0 %v3617
      %v3934 = vpop.f32.mrf.mxu0
      %v3935 = vadd.f32 %v3661, %v3934
      %v3936 = vpop.f32.mrf.mxu0
      %3937 = vmatprep.mubr.f32.mxu0 0.0
      %3938 = vmatmul.mubr.f32.gmra.mxu0 %v3618
      %v3939 = vpop.f32.mrf.mxu0
      %v3940 = vadd.f32 %v3661, %v3939
      %v3941 = vpop.f32.mrf.mxu0
      %3942 = vmatprep.mubr.f32.mxu0 0.0
      %3943 = vmatmul.mubr.f32.gmra.mxu0 %v3619
      %v3944 = vpop.f32.mrf.mxu0
      %v3945 = vadd.f32 %v3661, %v3944
      %v3946 = vpop.f32.mrf.mxu0
      %3947 = vmatprep.mubr.f32.mxu0 0.0
      %3948 = vmatmul.mubr.f32.gmra.mxu0 %v3620
      %v3949 = vpop.f32.mrf.mxu0
      %v3950 = vadd.f32 %v3661, %v3949
      %v3951 = vpop.f32.mrf.mxu0
      %3952 = vmatprep.mubr.f32.mxu0 0.0
      %3953 = vmatmul.mubr.f32.gmra.mxu0 %v3621
      %v3954 = vpop.f32.mrf.mxu0
      %v3955 = vadd.f32 %v3661, %v3954
      %v3956 = vpop.f32.mrf.mxu0
      %3957 = vmatprep.mubr.f32.mxu0 0.0
      %3958 = vmatmul.mubr.f32.gmra.mxu0 %v3622
      %v3959 = vpop.f32.mrf.mxu0
      %v3960 = vadd.f32 %v3661, %v3959
      %v3961 = vpop.f32.mrf.mxu0
      %3962 = vmatprep.mubr.f32.mxu0 0.0
      %3963 = vmatmul.mubr.f32.gmra.mxu0 %v3623
      %v3964 = vpop.f32.mrf.mxu0
      %v3965 = vadd.f32 %v3661, %v3964
      %v3966 = vpop.f32.mrf.mxu0
      %3967 = vmatprep.mubr.f32.mxu0 0.0
      %3968 = vmatmul.mubr.f32.gmra.mxu0 %v3624
      %v3969 = vpop.f32.mrf.mxu0
      %v3970 = vadd.f32 %v3661, %v3969
      %v3971 = vpop.f32.mrf.mxu0
      %3972 = vmatprep.mubr.f32.mxu0 0.0
      %3973 = vmatmul.mubr.f32.gmra.mxu0 %v3625
      %v3974 = vpop.f32.mrf.mxu0
      %v3975 = vadd.f32 %v3661, %v3974
      %v3976 = vpop.f32.mrf.mxu0
      %3977 = vmatprep.mubr.f32.mxu0 0.0
      %3978 = vmatmul.mubr.f32.gmra.mxu0 %v3626
      %v3979 = vpop.f32.mrf.mxu0
      %v3980 = vadd.f32 %v3661, %v3979
      %v3981 = vpop.f32.mrf.mxu0
      %3982 = vmatprep.mubr.f32.mxu0 0.0
      %3983 = vmatmul.mubr.f32.gmra.mxu0 %v3627
      %v3984 = vpop.f32.mrf.mxu0
      %v3985 = vadd.f32 %v3661, %v3984
      %v3986 = vpop.f32.mrf.mxu0
      %3987 = vmatprep.mubr.f32.mxu0 0.0
      %3988 = vmatmul.mubr.f32.gmra.mxu0 %v3628
      %v3989 = vpop.f32.mrf.mxu0
      %v3990 = vadd.f32 %v3661, %v3989
      %v3991 = vpop.f32.mrf.mxu0
      %3992 = vmatprep.mubr.f32.mxu0 0.0
      %3993 = vmatmul.mubr.f32.gmra.mxu0 %v3629
      %v3994 = vpop.f32.mrf.mxu0
      %v3995 = vadd.f32 %v3661, %v3994
      %v3996 = vpop.f32.mrf.mxu0
      %3997 = vmatprep.mubr.f32.mxu0 0.0
      %3998 = vmatmul.mubr.f32.gmra.mxu0 %v3630
      %v3999 = vpop.f32.mrf.mxu0
      %v4000 = vadd.f32 %v3661, %v3999
      %v4001 = vpop.f32.mrf.mxu0
      %4002 = vmatprep.mubr.f32.mxu0 0.0
      %4003 = vmatmul.mubr.f32.gmra.mxu0 %v3631
      %v4004 = vpop.f32.mrf.mxu0
      %v4005 = vadd.f32 %v3661, %v4004
      %v4006 = vpop.f32.mrf.mxu0
      %4007 = vmatprep.mubr.f32.mxu0 0.0
      %4008 = vmatmul.mubr.f32.gmra.mxu0 %v3632
      %v4009 = vpop.f32.mrf.mxu0
      %v4010 = vadd.f32 %v3661, %v4009
      %v4011 = vpop.f32.mrf.mxu0
      %4012 = vmatprep.mubr.f32.mxu0 0.0
      %4013 = vmatmul.mubr.f32.gmra.mxu0 %v3633
      %v4014 = vpop.f32.mrf.mxu0
      %v4015 = vadd.f32 %v3661, %v4014
      %v4016 = vpop.f32.mrf.mxu0
      %4017 = vmatprep.mubr.f32.mxu0 0.0
      %4018 = vmatmul.mubr.f32.gmra.mxu0 %v3634
      %v4019 = vpop.f32.mrf.mxu0
      %v4020 = vadd.f32 %v3661, %v4019
      %v4021 = vpop.f32.mrf.mxu0
      %4022 = vmatprep.mubr.f32.mxu0 0.0
      %4023 = vmatmul.mubr.f32.gmra.mxu0 %v3635
      %v4024 = vpop.f32.mrf.mxu0
      %v4025 = vadd.f32 %v3661, %v4024
      %v4026 = vpop.f32.mrf.mxu0
      %4027 = vmatprep.mubr.f32.mxu0 0.0
      %4028 = vmatmul.mubr.f32.gmra.mxu0 %v3636
      %v4029 = vpop.f32.mrf.mxu0
      %v4030 = vadd.f32 %v3661, %v4029
      %v4031 = vpop.f32.mrf.mxu0
      %4032 = vmatprep.mubr.f32.mxu0 0.0
      %4033 = vmatmul.mubr.f32.gmra.mxu0 %v3637
      %v4034 = vpop.f32.mrf.mxu0
      %v4035 = vadd.f32 %v3661, %v4034
      %v4036 = vpop.f32.mrf.mxu0
      %4037 = vmatprep.mubr.f32.mxu0 0.0
      %4038 = vmatmul.mubr.f32.gmra.mxu0 %v3638
      %v4039 = vpop.f32.mrf.mxu0
      %v4040 = vadd.f32 %v3661, %v4039
      %v4041 = vpop.f32.mrf.mxu0
      %4042 = vmatprep.mubr.f32.mxu0 0.0
      %4043 = vmatmul.mubr.f32.gmra.mxu0 %v3639
      %v4044 = vpop.f32.mrf.mxu0
      %v4045 = vadd.f32 %v3661, %v4044
      %v4046 = vpop.f32.mrf.mxu0
      %4047 = vdwg.mxu0
      %v4048 = vrsqrt.pop %v3730
      %v4049 = vrsqrt.pop %v3735
      %v4050 = vrsqrt.pop %v3740
      %v4051 = vrsqrt.pop %v3745
      %v4052 = vrsqrt.pop %v3750
      %v4053 = vrsqrt.pop %v3755
      %v4054 = vrsqrt.pop %v3760
      %v4055 = vrsqrt.pop %v3765
      %v4056 = vrsqrt.pop %v3770
      %v4057 = vrsqrt.pop %v3775
      %v4058 = vrsqrt.pop %v3780
      %v4059 = vrsqrt.pop %v3785
      %v4060 = vrsqrt.pop %v3790
      %v4061 = vrsqrt.pop %v3795
      %v4062 = vrsqrt.pop %v3800
      %v4063 = vrsqrt.pop %v3805
      %v4064 = vrsqrt.pop %v3810
      %v4065 = vrsqrt.pop %v3815
      %v4066 = vrsqrt.pop %v3820
      %v4067 = vrsqrt.pop %v3825
      %v4068 = vrsqrt.pop %v3830
      %v4069 = vrsqrt.pop %v3835
      %v4070 = vrsqrt.pop %v3840
      %v4071 = vrsqrt.pop %v3845
      %v4072 = vrsqrt.pop %v3850
      %v4073 = vrsqrt.pop %v3855
      %v4074 = vrsqrt.pop %v3860
      %v4075 = vrsqrt.pop %v3865
      %v4076 = vrsqrt.pop %v3870
      %v4077 = vrsqrt.pop %v3875
      %v4078 = vrsqrt.pop %v3880
      %v4079 = vrsqrt.pop %v3885
      %v4080 = vrsqrt.pop %v3890
      %v4081 = vrsqrt.pop %v3895
      %v4082 = vrsqrt.pop %v3900
      %v4083 = vrsqrt.pop %v3905
      %v4084 = vrsqrt.pop %v3910
      %v4085 = vrsqrt.pop %v3915
      %v4086 = vrsqrt.pop %v3920
      %v4087 = vrsqrt.pop %v3925
      %v4088 = vrsqrt.pop %v3930
      %v4089 = vrsqrt.pop %v3935
      %v4090 = vrsqrt.pop %v3940
      %v4091 = vrsqrt.pop %v3945
      %v4092 = vrsqrt.pop %v3950
      %v4093 = vrsqrt.pop %v3955
      %v4094 = vrsqrt.pop %v3960
      %v4095 = vrsqrt.pop %v3965
      %v4096 = vrsqrt.pop %v3970
      %v4097 = vrsqrt.pop %v3975
      %v4098 = vrsqrt.pop %v3980
      %v4099 = vrsqrt.pop %v3985
      %v4100 = vrsqrt.pop %v3990
      %v4101 = vrsqrt.pop %v3995
      %v4102 = vrsqrt.pop %v4000
      %v4103 = vrsqrt.pop %v4005
      %v4104 = vrsqrt.pop %v4010
      %v4105 = vrsqrt.pop %v4015
      %v4106 = vrsqrt.pop %v4020
      %v4107 = vrsqrt.pop %v4025
      %v4108 = vrsqrt.pop %v4030
      %v4109 = vrsqrt.pop %v4035
      %v4110 = vrsqrt.pop %v4040
      %v4111 = vrsqrt.pop %v4045
      %v4112 = vmul.f32 %v3512, %v4048
      %v4113 = vmul.f32 %v3513, %v4049
      %v4114 = vmul.f32 %v3514, %v4050
      %v4115 = vmul.f32 %v3515, %v4051
      %v4116 = vmul.f32 %v3516, %v4052
      %v4117 = vmul.f32 %v3517, %v4053
      %v4118 = vmul.f32 %v3518, %v4054
      %v4119 = vmul.f32 %v3519, %v4055
      %v4120 = vmul.f32 %v3520, %v4056
      %v4121 = vmul.f32 %v3521, %v4057
      %v4122 = vmul.f32 %v3522, %v4058
      %v4123 = vmul.f32 %v3523, %v4059
      %v4124 = vmul.f32 %v3524, %v4060
      %v4125 = vmul.f32 %v3525, %v4061
      %v4126 = vmul.f32 %v3526, %v4062
      %v4127 = vmul.f32 %v3527, %v4063
      %v4128 = vmul.f32 %v3528, %v4064
      %v4129 = vmul.f32 %v3529, %v4065
      %v4130 = vmul.f32 %v3530, %v4066
      %v4131 = vmul.f32 %v3531, %v4067
      %v4132 = vmul.f32 %v3532, %v4068
      %v4133 = vmul.f32 %v3533, %v4069
      %v4134 = vmul.f32 %v3534, %v4070
      %v4135 = vmul.f32 %v3535, %v4071
      %v4136 = vmul.f32 %v3536, %v4072
      %v4137 = vmul.f32 %v3537, %v4073
      %v4138 = vmul.f32 %v3538, %v4074
      %v4139 = vmul.f32 %v3539, %v4075
      %v4140 = vmul.f32 %v3540, %v4076
      %v4141 = vmul.f32 %v3541, %v4077
      %v4142 = vmul.f32 %v3542, %v4078
      %v4143 = vmul.f32 %v3543, %v4079
      %v4144 = vmul.f32 %v3544, %v4080
      %v4145 = vmul.f32 %v3545, %v4081
      %v4146 = vmul.f32 %v3546, %v4082
      %v4147 = vmul.f32 %v3547, %v4083
      %v4148 = vmul.f32 %v3548, %v4084
      %v4149 = vmul.f32 %v3549, %v4085
      %v4150 = vmul.f32 %v3550, %v4086
      %v4151 = vmul.f32 %v3551, %v4087
      %v4152 = vmul.f32 %v3552, %v4088
      %v4153 = vmul.f32 %v3553, %v4089
      %v4154 = vmul.f32 %v3554, %v4090
      %v4155 = vmul.f32 %v3555, %v4091
      %v4156 = vmul.f32 %v3556, %v4092
      %v4157 = vmul.f32 %v3557, %v4093
      %v4158 = vmul.f32 %v3558, %v4094
      %v4159 = vmul.f32 %v3559, %v4095
      %v4160 = vmul.f32 %v3560, %v4096
      %v4161 = vmul.f32 %v3561, %v4097
      %v4162 = vmul.f32 %v3562, %v4098
      %v4163 = vmul.f32 %v3563, %v4099
      %v4164 = vmul.f32 %v3564, %v4100
      %v4165 = vmul.f32 %v3565, %v4101
      %v4166 = vmul.f32 %v3566, %v4102
      %v4167 = vmul.f32 %v3567, %v4103
      %v4168 = vmul.f32 %v3568, %v4104
      %v4169 = vmul.f32 %v3569, %v4105
      %v4170 = vmul.f32 %v3570, %v4106
      %v4171 = vmul.f32 %v3571, %v4107
      %v4172 = vmul.f32 %v3572, %v4108
      %v4173 = vmul.f32 %v3573, %v4109
      %v4174 = vmul.f32 %v3574, %v4110
      %v4175 = vmul.f32 %v3575, %v4111
      %vm4176 = vcmp.ge.f32.partialorder %v4112, 0.0
      %vm4177 = vcmp.ge.f32.partialorder %v4113, 0.0
      %vm4178 = vcmp.ge.f32.partialorder %v4114, 0.0
      %vm4179 = vcmp.ge.f32.partialorder %v4115, 0.0
      %vm4180 = vcmp.ge.f32.partialorder %v4116, 0.0
      %vm4181 = vcmp.ge.f32.partialorder %v4117, 0.0
      %vm4182 = vcmp.ge.f32.partialorder %v4118, 0.0
      %vm4183 = vcmp.ge.f32.partialorder %v4119, 0.0
      %vm4184 = vcmp.ge.f32.partialorder %v4120, 0.0
      %vm4185 = vcmp.ge.f32.partialorder %v4121, 0.0
      %vm4186 = vcmp.ge.f32.partialorder %v4122, 0.0
      %vm4187 = vcmp.ge.f32.partialorder %v4123, 0.0
      %vm4188 = vcmp.ge.f32.partialorder %v4124, 0.0
      %vm4189 = vcmp.ge.f32.partialorder %v4125, 0.0
      %vm4190 = vcmp.ge.f32.partialorder %v4126, 0.0
      %vm4191 = vcmp.ge.f32.partialorder %v4127, 0.0
      %vm4192 = vcmp.ge.f32.partialorder %v4128, 0.0
      %vm4193 = vcmp.ge.f32.partialorder %v4129, 0.0
      %vm4194 = vcmp.ge.f32.partialorder %v4130, 0.0
      %vm4195 = vcmp.ge.f32.partialorder %v4131, 0.0
      %vm4196 = vcmp.ge.f32.partialorder %v4132, 0.0
      %vm4197 = vcmp.ge.f32.partialorder %v4133, 0.0
      %vm4198 = vcmp.ge.f32.partialorder %v4134, 0.0
      %vm4199 = vcmp.ge.f32.partialorder %v4135, 0.0
      %vm4200 = vcmp.ge.f32.partialorder %v4136, 0.0
      %vm4201 = vcmp.ge.f32.partialorder %v4137, 0.0
      %vm4202 = vcmp.ge.f32.partialorder %v4138, 0.0
      %vm4203 = vcmp.ge.f32.partialorder %v4139, 0.0
      %vm4204 = vcmp.ge.f32.partialorder %v4140, 0.0
      %vm4205 = vcmp.ge.f32.partialorder %v4141, 0.0
      %vm4206 = vcmp.ge.f32.partialorder %v4142, 0.0
      %vm4207 = vcmp.ge.f32.partialorder %v4143, 0.0
      %vm4208 = vcmp.ge.f32.partialorder %v4144, 0.0
      %vm4209 = vcmp.ge.f32.partialorder %v4145, 0.0
      %vm4210 = vcmp.ge.f32.partialorder %v4146, 0.0
      %vm4211 = vcmp.ge.f32.partialorder %v4147, 0.0
      %vm4212 = vcmp.ge.f32.partialorder %v4148, 0.0
      %vm4213 = vcmp.ge.f32.partialorder %v4149, 0.0
      %vm4214 = vcmp.ge.f32.partialorder %v4150, 0.0
      %vm4215 = vcmp.ge.f32.partialorder %v4151, 0.0
      %vm4216 = vcmp.ge.f32.partialorder %v4152, 0.0
      %vm4217 = vcmp.ge.f32.partialorder %v4153, 0.0
      %vm4218 = vcmp.ge.f32.partialorder %v4154, 0.0
      %vm4219 = vcmp.ge.f32.partialorder %v4155, 0.0
      %vm4220 = vcmp.ge.f32.partialorder %v4156, 0.0
      %vm4221 = vcmp.ge.f32.partialorder %v4157, 0.0
      %vm4222 = vcmp.ge.f32.partialorder %v4158, 0.0
      %vm4223 = vcmp.ge.f32.partialorder %v4159, 0.0
      %vm4224 = vcmp.ge.f32.partialorder %v4160, 0.0
      %vm4225 = vcmp.ge.f32.partialorder %v4161, 0.0
      %vm4226 = vcmp.ge.f32.partialorder %v4162, 0.0
      %vm4227 = vcmp.ge.f32.partialorder %v4163, 0.0
      %vm4228 = vcmp.ge.f32.partialorder %v4164, 0.0
      %vm4229 = vcmp.ge.f32.partialorder %v4165, 0.0
      %vm4230 = vcmp.ge.f32.partialorder %v4166, 0.0
      %vm4231 = vcmp.ge.f32.partialorder %v4167, 0.0
      %vm4232 = vcmp.ge.f32.partialorder %v4168, 0.0
      %vm4233 = vcmp.ge.f32.partialorder %v4169, 0.0
      %vm4234 = vcmp.ge.f32.partialorder %v4170, 0.0
      %vm4235 = vcmp.ge.f32.partialorder %v4171, 0.0
      %vm4236 = vcmp.ge.f32.partialorder %v4172, 0.0
      %vm4237 = vcmp.ge.f32.partialorder %v4173, 0.0
      %vm4238 = vcmp.ge.f32.partialorder %v4174, 0.0
      %vm4239 = vcmp.ge.f32.partialorder %v4175, 0.0
      %v4240 = vstv %s529
      %v4241 = vmul.f32 %v4240, %v4112
      %v4242 = vmul.f32 %v4240, %v4113
      %v4243 = vmul.f32 %v4240, %v4114
      %v4244 = vmul.f32 %v4240, %v4115
      %v4245 = vmul.f32 %v4240, %v4116
      %v4246 = vmul.f32 %v4240, %v4117
      %v4247 = vmul.f32 %v4240, %v4118
      %v4248 = vmul.f32 %v4240, %v4119
      %v4249 = vmul.f32 %v4240, %v4120
      %v4250 = vmul.f32 %v4240, %v4121
      %v4251 = vmul.f32 %v4240, %v4122
      %v4252 = vmul.f32 %v4240, %v4123
      %v4253 = vmul.f32 %v4240, %v4124
      %v4254 = vmul.f32 %v4240, %v4125
      %v4255 = vmul.f32 %v4240, %v4126
      %v4256 = vmul.f32 %v4240, %v4127
      %v4257 = vmul.f32 %v4240, %v4128
      %v4258 = vmul.f32 %v4240, %v4129
      %v4259 = vmul.f32 %v4240, %v4130
      %v4260 = vmul.f32 %v4240, %v4131
      %v4261 = vmul.f32 %v4240, %v4132
      %v4262 = vmul.f32 %v4240, %v4133
      %v4263 = vmul.f32 %v4240, %v4134
      %v4264 = vmul.f32 %v4240, %v4135
      %v4265 = vmul.f32 %v4240, %v4136
      %v4266 = vmul.f32 %v4240, %v4137
      %v4267 = vmul.f32 %v4240, %v4138
      %v4268 = vmul.f32 %v4240, %v4139
      %v4269 = vmul.f32 %v4240, %v4140
      %v4270 = vmul.f32 %v4240, %v4141
      %v4271 = vmul.f32 %v4240, %v4142
      %v4272 = vmul.f32 %v4240, %v4143
      %v4273 = vmul.f32 %v4240, %v4144
      %v4274 = vmul.f32 %v4240, %v4145
      %v4275 = vmul.f32 %v4240, %v4146
      %v4276 = vmul.f32 %v4240, %v4147
      %v4277 = vmul.f32 %v4240, %v4148
      %v4278 = vmul.f32 %v4240, %v4149
      %v4279 = vmul.f32 %v4240, %v4150
      %v4280 = vmul.f32 %v4240, %v4151
      %v4281 = vmul.f32 %v4240, %v4152
      %v4282 = vmul.f32 %v4240, %v4153
      %v4283 = vmul.f32 %v4240, %v4154
      %v4284 = vmul.f32 %v4240, %v4155
      %v4285 = vmul.f32 %v4240, %v4156
      %v4286 = vmul.f32 %v4240, %v4157
      %v4287 = vmul.f32 %v4240, %v4158
      %v4288 = vmul.f32 %v4240, %v4159
      %v4289 = vmul.f32 %v4240, %v4160
      %v4290 = vmul.f32 %v4240, %v4161
      %v4291 = vmul.f32 %v4240, %v4162
      %v4292 = vmul.f32 %v4240, %v4163
      %v4293 = vmul.f32 %v4240, %v4164
      %v4294 = vmul.f32 %v4240, %v4165
      %v4295 = vmul.f32 %v4240, %v4166
      %v4296 = vmul.f32 %v4240, %v4167
      %v4297 = vmul.f32 %v4240, %v4168
      %v4298 = vmul.f32 %v4240, %v4169
      %v4299 = vmul.f32 %v4240, %v4170
      %v4300 = vmul.f32 %v4240, %v4171
      %v4301 = vmul.f32 %v4240, %v4172
      %v4302 = vmul.f32 %v4240, %v4173
      %v4303 = vmul.f32 %v4240, %v4174
      %v4304 = vmul.f32 %v4240, %v4175
      %v4305 = vsel %vm4176, %v4112, %v4241
      %v4306 = vsel %vm4177, %v4113, %v4242
      %v4307 = vsel %vm4178, %v4114, %v4243
      %v4308 = vsel %vm4179, %v4115, %v4244
      %v4309 = vsel %vm4180, %v4116, %v4245
      %v4310 = vsel %vm4181, %v4117, %v4246
      %v4311 = vsel %vm4182, %v4118, %v4247
      %v4312 = vsel %vm4183, %v4119, %v4248
      %v4313 = vsel %vm4184, %v4120, %v4249
      %v4314 = vsel %vm4185, %v4121, %v4250
      %v4315 = vsel %vm4186, %v4122, %v4251
      %v4316 = vsel %vm4187, %v4123, %v4252
      %v4317 = vsel %vm4188, %v4124, %v4253
      %v4318 = vsel %vm4189, %v4125, %v4254
      %v4319 = vsel %vm4190, %v4126, %v4255
      %v4320 = vsel %vm4191, %v4127, %v4256
      %v4321 = vsel %vm4192, %v4128, %v4257
      %v4322 = vsel %vm4193, %v4129, %v4258
      %v4323 = vsel %vm4194, %v4130, %v4259
      %v4324 = vsel %vm4195, %v4131, %v4260
      %v4325 = vsel %vm4196, %v4132, %v4261
      %v4326 = vsel %vm4197, %v4133, %v4262
      %v4327 = vsel %vm4198, %v4134, %v4263
      %v4328 = vsel %vm4199, %v4135, %v4264
      %v4329 = vsel %vm4200, %v4136, %v4265
      %v4330 = vsel %vm4201, %v4137, %v4266
      %v4331 = vsel %vm4202, %v4138, %v4267
      %v4332 = vsel %vm4203, %v4139, %v4268
      %v4333 = vsel %vm4204, %v4140, %v4269
      %v4334 = vsel %vm4205, %v4141, %v4270
      %v4335 = vsel %vm4206, %v4142, %v4271
      %v4336 = vsel %vm4207, %v4143, %v4272
      %v4337 = vsel %vm4208, %v4144, %v4273
      %v4338 = vsel %vm4209, %v4145, %v4274
      %v4339 = vsel %vm4210, %v4146, %v4275
      %v4340 = vsel %vm4211, %v4147, %v4276
      %v4341 = vsel %vm4212, %v4148, %v4277
      %v4342 = vsel %vm4213, %v4149, %v4278
      %v4343 = vsel %vm4214, %v4150, %v4279
      %v4344 = vsel %vm4215, %v4151, %v4280
      %v4345 = vsel %vm4216, %v4152, %v4281
      %v4346 = vsel %vm4217, %v4153, %v4282
      %v4347 = vsel %vm4218, %v4154, %v4283
      %v4348 = vsel %vm4219, %v4155, %v4284
      %v4349 = vsel %vm4220, %v4156, %v4285
      %v4350 = vsel %vm4221, %v4157, %v4286
      %v4351 = vsel %vm4222, %v4158, %v4287
      %v4352 = vsel %vm4223, %v4159, %v4288
      %v4353 = vsel %vm4224, %v4160, %v4289
      %v4354 = vsel %vm4225, %v4161, %v4290
      %v4355 = vsel %vm4226, %v4162, %v4291
      %v4356 = vsel %vm4227, %v4163, %v4292
      %v4357 = vsel %vm4228, %v4164, %v4293
      %v4358 = vsel %vm4229, %v4165, %v4294
      %v4359 = vsel %vm4230, %v4166, %v4295
      %v4360 = vsel %vm4231, %v4167, %v4296
      %v4361 = vsel %vm4232, %v4168, %v4297
      %v4362 = vsel %vm4233, %v4169, %v4298
      %v4363 = vsel %vm4234, %v4170, %v4299
      %v4364 = vsel %vm4235, %v4171, %v4300
      %v4365 = vsel %vm4236, %v4172, %v4301
      %v4366 = vsel %vm4237, %v4173, %v4302
      %v4367 = vsel %vm4238, %v4174, %v4303
      %v4368 = vsel %vm4239, %v4175, %v4304
      %v4369 = vld [vmem:[%s6] sm:$0xff]
      %v4370 = vld [vmem:[%s6 + $0x8] sm:$0xff]
      %v4371 = vld [vmem:[%s6 + $0x10] sm:$0xff]
      %v4372 = vld [vmem:[%s6 + $0x18] sm:$0xff]
      %v4373 = vld [vmem:[%s6 + $0x20] sm:$0xff]
      %v4374 = vld [vmem:[%s6 + $0x28] sm:$0xff]
      %v4375 = vld [vmem:[%s6 + $0x30] sm:$0xff]
      %v4376 = vld [vmem:[%s6 + $0x38] sm:$0xff]
      %v4377 = vld [vmem:[%s6 + $0x40] sm:$0xff]
      %v4378 = vld [vmem:[%s6 + $0x48] sm:$0xff]
      %v4379 = vld [vmem:[%s6 + $0x50] sm:$0xff]
      %v4380 = vld [vmem:[%s6 + $0x58] sm:$0xff]
      %v4381 = vld [vmem:[%s6 + $0x60] sm:$0xff]
      %v4382 = vld [vmem:[%s6 + $0x68] sm:$0xff]
      %v4383 = vld [vmem:[%s6 + $0x70] sm:$0xff]
      %v4384 = vld [vmem:[%s6 + $0x78] sm:$0xff]
      %4385 = vmatprep.subr.mxu0 0.0
      %4386 = vmatpush1.msra.mxu0 %v4384
      %4387 = vmatprep.subr.mxu0 0.0
      %4388 = vmatpush1.msra.mxu0 %v4383
      %4389 = vmatprep.subr.mxu0 0.0
      %4390 = vmatpush1.msra.mxu0 %v4382
      %4391 = vmatprep.subr.mxu0 0.0
      %4392 = vmatpush1.msra.mxu0 %v4381
      %4393 = vmatprep.subr.mxu0 0.0
      %4394 = vmatpush1.msra.mxu0 %v4380
      %4395 = vmatprep.subr.mxu0 0.0
      %4396 = vmatpush1.msra.mxu0 %v4379
      %4397 = vmatprep.subr.mxu0 0.0
      %4398 = vmatpush1.msra.mxu0 %v4378
      %4399 = vmatprep.subr.mxu0 0.0
      %4400 = vmatpush1.msra.mxu0 %v4377
      %4401 = vmatprep.subr.mxu0 0.0
      %4402 = vmatpush1.msra.mxu0 %v4376
      %4403 = vmatprep.subr.mxu0 0.0
      %4404 = vmatpush1.msra.mxu0 %v4375
      %4405 = vmatprep.subr.mxu0 0.0
      %4406 = vmatpush1.msra.mxu0 %v4374
      %4407 = vmatprep.subr.mxu0 0.0
      %4408 = vmatpush1.msra.mxu0 %v4373
      %4409 = vmatprep.subr.mxu0 0.0
      %4410 = vmatpush1.msra.mxu0 %v4372
      %4411 = vmatprep.subr.mxu0 0.0
      %4412 = vmatpush1.msra.mxu0 %v4371
      %4413 = vmatprep.subr.mxu0 0.0
      %4414 = vmatpush1.msra.mxu0 %v4370
      %4415 = vmatprep.subr.mxu0 0.0
      %4416 = vmatpush1.msra.mxu0 %v4369
      %4417 = vmatprep.subr.mxu0 0.0
      %4418 = vmatpush2.msra.mxu0 0.0
      %4419 = vmatprep.subr.mxu0 0.0
      %4420 = vmatpush2.msra.mxu0 0.0
      %4421 = vmatprep.subr.mxu0 0.0
      %4422 = vmatpush2.msra.mxu0 0.0
      %4423 = vmatprep.subr.mxu0 0.0
      %4424 = vmatpush2.msra.mxu0 0.0
      %4425 = vmatprep.subr.mxu0 0.0
      %4426 = vmatpush2.msra.mxu0 0.0
      %4427 = vmatprep.subr.mxu0 0.0
      %4428 = vmatpush2.msra.mxu0 0.0
      %4429 = vmatprep.subr.mxu0 0.0
      %4430 = vmatpush2.msra.mxu0 0.0
      %4431 = vmatprep.subr.mxu0 0.0
      %4432 = vmatpush2.msra.mxu0 0.0
      %4433 = vmatprep.subr.mxu0 0.0
      %4434 = vmatpush2.msra.mxu0 0.0
      %4435 = vmatprep.subr.mxu0 0.0
      %4436 = vmatpush2.msra.mxu0 0.0
      %4437 = vmatprep.subr.mxu0 0.0
      %4438 = vmatpush2.msra.mxu0 0.0
      %4439 = vmatprep.subr.mxu0 0.0
      %4440 = vmatpush2.msra.mxu0 0.0
      %4441 = vmatprep.subr.mxu0 0.0
      %4442 = vmatpush2.msra.mxu0 0.0
      %4443 = vmatprep.subr.mxu0 0.0
      %4444 = vmatpush2.msra.mxu0 0.0
      %4445 = vmatprep.subr.mxu0 0.0
      %4446 = vmatpush2.msra.mxu0 0.0
      %4447 = vmatprep.subr.mxu0 0.0
      %4448 = vmatpush2.msra.mxu0 0.0
      %4449 = vmatprep.mubr.f32.mxu0 0.0
      %4450 = vmatmul.mubr.f32.gmra.mxu0 %v4305
      %v4451 = vpop.f32.mrf.mxu0
      %v4452 = vadd.f32 0.0, %v4451
      %v4453 = vpop.f32.mrf.mxu0
      %4454 = vmatprep.mubr.f32.mxu0 0.0
      %4455 = vmatmul.mubr.f32.gmra.mxu0 %v4306
      %v4456 = vpop.f32.mrf.mxu0
      %v4457 = vadd.f32 0.0, %v4456
      %v4458 = vpop.f32.mrf.mxu0
      %4459 = vmatprep.mubr.f32.mxu0 0.0
      %4460 = vmatmul.mubr.f32.gmra.mxu0 %v4307
      %v4461 = vpop.f32.mrf.mxu0
      %v4462 = vadd.f32 0.0, %v4461
      %v4463 = vpop.f32.mrf.mxu0
      %4464 = vmatprep.mubr.f32.mxu0 0.0
      %4465 = vmatmul.mubr.f32.gmra.mxu0 %v4308
      %v4466 = vpop.f32.mrf.mxu0
      %v4467 = vadd.f32 0.0, %v4466
      %v4468 = vpop.f32.mrf.mxu0
      %4469 = vmatprep.mubr.f32.mxu0 0.0
      %4470 = vmatmul.mubr.f32.gmra.mxu0 %v4309
      %v4471 = vpop.f32.mrf.mxu0
      %v4472 = vadd.f32 0.0, %v4471
      %v4473 = vpop.f32.mrf.mxu0
      %4474 = vmatprep.mubr.f32.mxu0 0.0
      %4475 = vmatmul.mubr.f32.gmra.mxu0 %v4310
      %v4476 = vpop.f32.mrf.mxu0
      %v4477 = vadd.f32 0.0, %v4476
      %v4478 = vpop.f32.mrf.mxu0
      %4479 = vmatprep.mubr.f32.mxu0 0.0
      %4480 = vmatmul.mubr.f32.gmra.mxu0 %v4311
      %v4481 = vpop.f32.mrf.mxu0
      %v4482 = vadd.f32 0.0, %v4481
      %v4483 = vpop.f32.mrf.mxu0
      %4484 = vmatprep.mubr.f32.mxu0 0.0
      %4485 = vmatmul.mubr.f32.gmra.mxu0 %v4312
      %v4486 = vpop.f32.mrf.mxu0
      %v4487 = vadd.f32 0.0, %v4486
      %v4488 = vpop.f32.mrf.mxu0
      %4489 = vmatprep.mubr.f32.mxu0 0.0
      %4490 = vmatmul.mubr.f32.gmra.mxu0 %v4313
      %v4491 = vpop.f32.mrf.mxu0
      %v4492 = vadd.f32 0.0, %v4491
      %v4493 = vpop.f32.mrf.mxu0
      %4494 = vmatprep.mubr.f32.mxu0 0.0
      %4495 = vmatmul.mubr.f32.gmra.mxu0 %v4314
      %v4496 = vpop.f32.mrf.mxu0
      %v4497 = vadd.f32 0.0, %v4496
      %v4498 = vpop.f32.mrf.mxu0
      %4499 = vmatprep.mubr.f32.mxu0 0.0
      %4500 = vmatmul.mubr.f32.gmra.mxu0 %v4315
      %v4501 = vpop.f32.mrf.mxu0
      %v4502 = vadd.f32 0.0, %v4501
      %v4503 = vpop.f32.mrf.mxu0
      %4504 = vmatprep.mubr.f32.mxu0 0.0
      %4505 = vmatmul.mubr.f32.gmra.mxu0 %v4316
      %v4506 = vpop.f32.mrf.mxu0
      %v4507 = vadd.f32 0.0, %v4506
      %v4508 = vpop.f32.mrf.mxu0
      %4509 = vmatprep.mubr.f32.mxu0 0.0
      %4510 = vmatmul.mubr.f32.gmra.mxu0 %v4317
      %v4511 = vpop.f32.mrf.mxu0
      %v4512 = vadd.f32 0.0, %v4511
      %v4513 = vpop.f32.mrf.mxu0
      %4514 = vmatprep.mubr.f32.mxu0 0.0
      %4515 = vmatmul.mubr.f32.gmra.mxu0 %v4318
      %v4516 = vpop.f32.mrf.mxu0
      %v4517 = vadd.f32 0.0, %v4516
      %v4518 = vpop.f32.mrf.mxu0
      %4519 = vmatprep.mubr.f32.mxu0 0.0
      %4520 = vmatmul.mubr.f32.gmra.mxu0 %v4319
      %v4521 = vpop.f32.mrf.mxu0
      %v4522 = vadd.f32 0.0, %v4521
      %v4523 = vpop.f32.mrf.mxu0
      %4524 = vmatprep.mubr.f32.mxu0 0.0
      %4525 = vmatmul.mubr.f32.gmra.mxu0 %v4320
      %v4526 = vpop.f32.mrf.mxu0
      %v4527 = vadd.f32 0.0, %v4526
      %v4528 = vpop.f32.mrf.mxu0
      %4529 = vmatprep.mubr.f32.mxu0 0.0
      %4530 = vmatmul.mubr.f32.gmra.mxu0 %v4321
      %v4531 = vpop.f32.mrf.mxu0
      %v4532 = vadd.f32 0.0, %v4531
      %v4533 = vpop.f32.mrf.mxu0
      %4534 = vmatprep.mubr.f32.mxu0 0.0
      %4535 = vmatmul.mubr.f32.gmra.mxu0 %v4322
      %v4536 = vpop.f32.mrf.mxu0
      %v4537 = vadd.f32 0.0, %v4536
      %v4538 = vpop.f32.mrf.mxu0
      %4539 = vmatprep.mubr.f32.mxu0 0.0
      %4540 = vmatmul.mubr.f32.gmra.mxu0 %v4323
      %v4541 = vpop.f32.mrf.mxu0
      %v4542 = vadd.f32 0.0, %v4541
      %v4543 = vpop.f32.mrf.mxu0
      %4544 = vmatprep.mubr.f32.mxu0 0.0
      %4545 = vmatmul.mubr.f32.gmra.mxu0 %v4324
      %v4546 = vpop.f32.mrf.mxu0
      %v4547 = vadd.f32 0.0, %v4546
      %v4548 = vpop.f32.mrf.mxu0
      %4549 = vmatprep.mubr.f32.mxu0 0.0
      %4550 = vmatmul.mubr.f32.gmra.mxu0 %v4325
      %v4551 = vpop.f32.mrf.mxu0
      %v4552 = vadd.f32 0.0, %v4551
      %v4553 = vpop.f32.mrf.mxu0
      %4554 = vmatprep.mubr.f32.mxu0 0.0
      %4555 = vmatmul.mubr.f32.gmra.mxu0 %v4326
      %v4556 = vpop.f32.mrf.mxu0
      %v4557 = vadd.f32 0.0, %v4556
      %v4558 = vpop.f32.mrf.mxu0
      %4559 = vmatprep.mubr.f32.mxu0 0.0
      %4560 = vmatmul.mubr.f32.gmra.mxu0 %v4327
      %v4561 = vpop.f32.mrf.mxu0
      %v4562 = vadd.f32 0.0, %v4561
      %v4563 = vpop.f32.mrf.mxu0
      %4564 = vmatprep.mubr.f32.mxu0 0.0
      %4565 = vmatmul.mubr.f32.gmra.mxu0 %v4328
      %v4566 = vpop.f32.mrf.mxu0
      %v4567 = vadd.f32 0.0, %v4566
      %v4568 = vpop.f32.mrf.mxu0
      %4569 = vmatprep.mubr.f32.mxu0 0.0
      %4570 = vmatmul.mubr.f32.gmra.mxu0 %v4329
      %v4571 = vpop.f32.mrf.mxu0
      %v4572 = vadd.f32 0.0, %v4571
      %v4573 = vpop.f32.mrf.mxu0
      %4574 = vmatprep.mubr.f32.mxu0 0.0
      %4575 = vmatmul.mubr.f32.gmra.mxu0 %v4330
      %v4576 = vpop.f32.mrf.mxu0
      %v4577 = vadd.f32 0.0, %v4576
      %v4578 = vpop.f32.mrf.mxu0
      %4579 = vmatprep.mubr.f32.mxu0 0.0
      %4580 = vmatmul.mubr.f32.gmra.mxu0 %v4331
      %v4581 = vpop.f32.mrf.mxu0
      %v4582 = vadd.f32 0.0, %v4581
      %v4583 = vpop.f32.mrf.mxu0
      %4584 = vmatprep.mubr.f32.mxu0 0.0
      %4585 = vmatmul.mubr.f32.gmra.mxu0 %v4332
      %v4586 = vpop.f32.mrf.mxu0
      %v4587 = vadd.f32 0.0, %v4586
      %v4588 = vpop.f32.mrf.mxu0
      %4589 = vmatprep.mubr.f32.mxu0 0.0
      %4590 = vmatmul.mubr.f32.gmra.mxu0 %v4333
      %v4591 = vpop.f32.mrf.mxu0
      %v4592 = vadd.f32 0.0, %v4591
      %v4593 = vpop.f32.mrf.mxu0
      %4594 = vmatprep.mubr.f32.mxu0 0.0
      %4595 = vmatmul.mubr.f32.gmra.mxu0 %v4334
      %v4596 = vpop.f32.mrf.mxu0
      %v4597 = vadd.f32 0.0, %v4596
      %v4598 = vpop.f32.mrf.mxu0
      %4599 = vmatprep.mubr.f32.mxu0 0.0
      %4600 = vmatmul.mubr.f32.gmra.mxu0 %v4335
      %v4601 = vpop.f32.mrf.mxu0
      %v4602 = vadd.f32 0.0, %v4601
      %v4603 = vpop.f32.mrf.mxu0
      %4604 = vmatprep.mubr.f32.mxu0 0.0
      %4605 = vmatmul.mubr.f32.gmra.mxu0 %v4336
      %v4606 = vpop.f32.mrf.mxu0
      %v4607 = vadd.f32 0.0, %v4606
      %v4608 = vpop.f32.mrf.mxu0
      %4609 = vmatprep.mubr.f32.mxu0 0.0
      %4610 = vmatmul.mubr.f32.gmra.mxu0 %v4337
      %v4611 = vpop.f32.mrf.mxu0
      %v4612 = vadd.f32 0.0, %v4611
      %v4613 = vpop.f32.mrf.mxu0
      %4614 = vmatprep.mubr.f32.mxu0 0.0
      %4615 = vmatmul.mubr.f32.gmra.mxu0 %v4338
      %v4616 = vpop.f32.mrf.mxu0
      %v4617 = vadd.f32 0.0, %v4616
      %v4618 = vpop.f32.mrf.mxu0
      %4619 = vmatprep.mubr.f32.mxu0 0.0
      %4620 = vmatmul.mubr.f32.gmra.mxu0 %v4339
      %v4621 = vpop.f32.mrf.mxu0
      %v4622 = vadd.f32 0.0, %v4621
      %v4623 = vpop.f32.mrf.mxu0
      %4624 = vmatprep.mubr.f32.mxu0 0.0
      %4625 = vmatmul.mubr.f32.gmra.mxu0 %v4340
      %v4626 = vpop.f32.mrf.mxu0
      %v4627 = vadd.f32 0.0, %v4626
      %v4628 = vpop.f32.mrf.mxu0
      %4629 = vmatprep.mubr.f32.mxu0 0.0
      %4630 = vmatmul.mubr.f32.gmra.mxu0 %v4341
      %v4631 = vpop.f32.mrf.mxu0
      %v4632 = vadd.f32 0.0, %v4631
      %v4633 = vpop.f32.mrf.mxu0
      %4634 = vmatprep.mubr.f32.mxu0 0.0
      %4635 = vmatmul.mubr.f32.gmra.mxu0 %v4342
      %v4636 = vpop.f32.mrf.mxu0
      %v4637 = vadd.f32 0.0, %v4636
      %v4638 = vpop.f32.mrf.mxu0
      %4639 = vmatprep.mubr.f32.mxu0 0.0
      %4640 = vmatmul.mubr.f32.gmra.mxu0 %v4343
      %v4641 = vpop.f32.mrf.mxu0
      %v4642 = vadd.f32 0.0, %v4641
      %v4643 = vpop.f32.mrf.mxu0
      %4644 = vmatprep.mubr.f32.mxu0 0.0
      %4645 = vmatmul.mubr.f32.gmra.mxu0 %v4344
      %v4646 = vpop.f32.mrf.mxu0
      %v4647 = vadd.f32 0.0, %v4646
      %v4648 = vpop.f32.mrf.mxu0
      %4649 = vmatprep.mubr.f32.mxu0 0.0
      %4650 = vmatmul.mubr.f32.gmra.mxu0 %v4345
      %v4651 = vpop.f32.mrf.mxu0
      %v4652 = vadd.f32 0.0, %v4651
      %v4653 = vpop.f32.mrf.mxu0
      %4654 = vmatprep.mubr.f32.mxu0 0.0
      %4655 = vmatmul.mubr.f32.gmra.mxu0 %v4346
      %v4656 = vpop.f32.mrf.mxu0
      %v4657 = vadd.f32 0.0, %v4656
      %v4658 = vpop.f32.mrf.mxu0
      %4659 = vmatprep.mubr.f32.mxu0 0.0
      %4660 = vmatmul.mubr.f32.gmra.mxu0 %v4347
      %v4661 = vpop.f32.mrf.mxu0
      %v4662 = vadd.f32 0.0, %v4661
      %v4663 = vpop.f32.mrf.mxu0
      %4664 = vmatprep.mubr.f32.mxu0 0.0
      %4665 = vmatmul.mubr.f32.gmra.mxu0 %v4348
      %v4666 = vpop.f32.mrf.mxu0
      %v4667 = vadd.f32 0.0, %v4666
      %v4668 = vpop.f32.mrf.mxu0
      %4669 = vmatprep.mubr.f32.mxu0 0.0
      %4670 = vmatmul.mubr.f32.gmra.mxu0 %v4349
      %v4671 = vpop.f32.mrf.mxu0
      %v4672 = vadd.f32 0.0, %v4671
      %v4673 = vpop.f32.mrf.mxu0
      %4674 = vmatprep.mubr.f32.mxu0 0.0
      %4675 = vmatmul.mubr.f32.gmra.mxu0 %v4350
      %v4676 = vpop.f32.mrf.mxu0
      %v4677 = vadd.f32 0.0, %v4676
      %v4678 = vpop.f32.mrf.mxu0
      %4679 = vmatprep.mubr.f32.mxu0 0.0
      %4680 = vmatmul.mubr.f32.gmra.mxu0 %v4351
      %v4681 = vpop.f32.mrf.mxu0
      %v4682 = vadd.f32 0.0, %v4681
      %v4683 = vpop.f32.mrf.mxu0
      %4684 = vmatprep.mubr.f32.mxu0 0.0
      %4685 = vmatmul.mubr.f32.gmra.mxu0 %v4352
      %v4686 = vpop.f32.mrf.mxu0
      %v4687 = vadd.f32 0.0, %v4686
      %v4688 = vpop.f32.mrf.mxu0
      %4689 = vmatprep.mubr.f32.mxu0 0.0
      %4690 = vmatmul.mubr.f32.gmra.mxu0 %v4353
      %v4691 = vpop.f32.mrf.mxu0
      %v4692 = vadd.f32 0.0, %v4691
      %v4693 = vpop.f32.mrf.mxu0
      %4694 = vmatprep.mubr.f32.mxu0 0.0
      %4695 = vmatmul.mubr.f32.gmra.mxu0 %v4354
      %v4696 = vpop.f32.mrf.mxu0
      %v4697 = vadd.f32 0.0, %v4696
      %v4698 = vpop.f32.mrf.mxu0
      %4699 = vmatprep.mubr.f32.mxu0 0.0
      %4700 = vmatmul.mubr.f32.gmra.mxu0 %v4355
      %v4701 = vpop.f32.mrf.mxu0
      %v4702 = vadd.f32 0.0, %v4701
      %v4703 = vpop.f32.mrf.mxu0
      %4704 = vmatprep.mubr.f32.mxu0 0.0
      %4705 = vmatmul.mubr.f32.gmra.mxu0 %v4356
      %v4706 = vpop.f32.mrf.mxu0
      %v4707 = vadd.f32 0.0, %v4706
      %v4708 = vpop.f32.mrf.mxu0
      %4709 = vmatprep.mubr.f32.mxu0 0.0
      %4710 = vmatmul.mubr.f32.gmra.mxu0 %v4357
      %v4711 = vpop.f32.mrf.mxu0
      %v4712 = vadd.f32 0.0, %v4711
      %v4713 = vpop.f32.mrf.mxu0
      %4714 = vmatprep.mubr.f32.mxu0 0.0
      %4715 = vmatmul.mubr.f32.gmra.mxu0 %v4358
      %v4716 = vpop.f32.mrf.mxu0
      %v4717 = vadd.f32 0.0, %v4716
      %v4718 = vpop.f32.mrf.mxu0
      %4719 = vmatprep.mubr.f32.mxu0 0.0
      %4720 = vmatmul.mubr.f32.gmra.mxu0 %v4359
      %v4721 = vpop.f32.mrf.mxu0
      %v4722 = vadd.f32 0.0, %v4721
      %v4723 = vpop.f32.mrf.mxu0
      %4724 = vmatprep.mubr.f32.mxu0 0.0
      %4725 = vmatmul.mubr.f32.gmra.mxu0 %v4360
      %v4726 = vpop.f32.mrf.mxu0
      %v4727 = vadd.f32 0.0, %v4726
      %v4728 = vpop.f32.mrf.mxu0
      %4729 = vmatprep.mubr.f32.mxu0 0.0
      %4730 = vmatmul.mubr.f32.gmra.mxu0 %v4361
      %v4731 = vpop.f32.mrf.mxu0
      %v4732 = vadd.f32 0.0, %v4731
      %v4733 = vpop.f32.mrf.mxu0
      %4734 = vmatprep.mubr.f32.mxu0 0.0
      %4735 = vmatmul.mubr.f32.gmra.mxu0 %v4362
      %v4736 = vpop.f32.mrf.mxu0
      %v4737 = vadd.f32 0.0, %v4736
      %v4738 = vpop.f32.mrf.mxu0
      %4739 = vmatprep.mubr.f32.mxu0 0.0
      %4740 = vmatmul.mubr.f32.gmra.mxu0 %v4363
      %v4741 = vpop.f32.mrf.mxu0
      %v4742 = vadd.f32 0.0, %v4741
      %v4743 = vpop.f32.mrf.mxu0
      %4744 = vmatprep.mubr.f32.mxu0 0.0
      %4745 = vmatmul.mubr.f32.gmra.mxu0 %v4364
      %v4746 = vpop.f32.mrf.mxu0
      %v4747 = vadd.f32 0.0, %v4746
      %v4748 = vpop.f32.mrf.mxu0
      %4749 = vmatprep.mubr.f32.mxu0 0.0
      %4750 = vmatmul.mubr.f32.gmra.mxu0 %v4365
      %v4751 = vpop.f32.mrf.mxu0
      %v4752 = vadd.f32 0.0, %v4751
      %v4753 = vpop.f32.mrf.mxu0
      %4754 = vmatprep.mubr.f32.mxu0 0.0
      %4755 = vmatmul.mubr.f32.gmra.mxu0 %v4366
      %v4756 = vpop.f32.mrf.mxu0
      %v4757 = vadd.f32 0.0, %v4756
      %v4758 = vpop.f32.mrf.mxu0
      %4759 = vmatprep.mubr.f32.mxu0 0.0
      %4760 = vmatmul.mubr.f32.gmra.mxu0 %v4367
      %v4761 = vpop.f32.mrf.mxu0
      %v4762 = vadd.f32 0.0, %v4761
      %v4763 = vpop.f32.mrf.mxu0
      %4764 = vmatprep.mubr.f32.mxu0 0.0
      %4765 = vmatmul.mubr.f32.gmra.mxu0 %v4368
      %v4766 = vpop.f32.mrf.mxu0
      %v4767 = vadd.f32 0.0, %v4766
      %v4768 = vpop.f32.mrf.mxu0
      %4769 = vdwg.mxu0
      %v4770 = vmul.f32 %v4452, %v4452
      %v4771 = vmul.f32 %v4457, %v4457
      %v4772 = vmul.f32 %v4462, %v4462
      %v4773 = vmul.f32 %v4467, %v4467
      %v4774 = vmul.f32 %v4472, %v4472
      %v4775 = vmul.f32 %v4477, %v4477
      %v4776 = vmul.f32 %v4482, %v4482
      %v4777 = vmul.f32 %v4487, %v4487
      %v4778 = vmul.f32 %v4492, %v4492
      %v4779 = vmul.f32 %v4497, %v4497
      %v4780 = vmul.f32 %v4502, %v4502
      %v4781 = vmul.f32 %v4507, %v4507
      %v4782 = vmul.f32 %v4512, %v4512
      %v4783 = vmul.f32 %v4517, %v4517
      %v4784 = vmul.f32 %v4522, %v4522
      %v4785 = vmul.f32 %v4527, %v4527
      %v4786 = vmul.f32 %v4532, %v4532
      %v4787 = vmul.f32 %v4537, %v4537
      %v4788 = vmul.f32 %v4542, %v4542
      %v4789 = vmul.f32 %v4547, %v4547
      %v4790 = vmul.f32 %v4552, %v4552
      %v4791 = vmul.f32 %v4557, %v4557
      %v4792 = vmul.f32 %v4562, %v4562
      %v4793 = vmul.f32 %v4567, %v4567
      %v4794 = vmul.f32 %v4572, %v4572
      %v4795 = vmul.f32 %v4577, %v4577
      %v4796 = vmul.f32 %v4582, %v4582
      %v4797 = vmul.f32 %v4587, %v4587
      %v4798 = vmul.f32 %v4592, %v4592
      %v4799 = vmul.f32 %v4597, %v4597
      %v4800 = vmul.f32 %v4602, %v4602
      %v4801 = vmul.f32 %v4607, %v4607
      %v4802 = vmul.f32 %v4612, %v4612
      %v4803 = vmul.f32 %v4617, %v4617
      %v4804 = vmul.f32 %v4622, %v4622
      %v4805 = vmul.f32 %v4627, %v4627
      %v4806 = vmul.f32 %v4632, %v4632
      %v4807 = vmul.f32 %v4637, %v4637
      %v4808 = vmul.f32 %v4642, %v4642
      %v4809 = vmul.f32 %v4647, %v4647
      %v4810 = vmul.f32 %v4652, %v4652
      %v4811 = vmul.f32 %v4657, %v4657
      %v4812 = vmul.f32 %v4662, %v4662
      %v4813 = vmul.f32 %v4667, %v4667
      %v4814 = vmul.f32 %v4672, %v4672
      %v4815 = vmul.f32 %v4677, %v4677
      %v4816 = vmul.f32 %v4682, %v4682
      %v4817 = vmul.f32 %v4687, %v4687
      %v4818 = vmul.f32 %v4692, %v4692
      %v4819 = vmul.f32 %v4697, %v4697
      %v4820 = vmul.f32 %v4702, %v4702
      %v4821 = vmul.f32 %v4707, %v4707
      %v4822 = vmul.f32 %v4712, %v4712
      %v4823 = vmul.f32 %v4717, %v4717
      %v4824 = vmul.f32 %v4722, %v4722
      %v4825 = vmul.f32 %v4727, %v4727
      %v4826 = vmul.f32 %v4732, %v4732
      %v4827 = vmul.f32 %v4737, %v4737
      %v4828 = vmul.f32 %v4742, %v4742
      %v4829 = vmul.f32 %v4747, %v4747
      %v4830 = vmul.f32 %v4752, %v4752
      %v4831 = vmul.f32 %v4757, %v4757
      %v4832 = vmul.f32 %v4762, %v4762
      %v4833 = vmul.f32 %v4767, %v4767
      %v4834 = vld [vmem:[%s7] sm:$0xff]
      %v4835 = vld [vmem:[%s7 + $0x8] sm:$0xff]
      %v4836 = vld [vmem:[%s7 + $0x10] sm:$0xff]
      %v4837 = vld [vmem:[%s7 + $0x18] sm:$0xff]
      %v4838 = vld [vmem:[%s7 + $0x20] sm:$0xff]
      %v4839 = vld [vmem:[%s7 + $0x28] sm:$0xff]
      %v4840 = vld [vmem:[%s7 + $0x30] sm:$0xff]
      %v4841 = vld [vmem:[%s7 + $0x38] sm:$0xff]
      %v4842 = vld [vmem:[%s7 + $0x40] sm:$0xff]
      %v4843 = vld [vmem:[%s7 + $0x48] sm:$0xff]
      %v4844 = vld [vmem:[%s7 + $0x50] sm:$0xff]
      %v4845 = vld [vmem:[%s7 + $0x58] sm:$0xff]
      %v4846 = vld [vmem:[%s7 + $0x60] sm:$0xff]
      %v4847 = vld [vmem:[%s7 + $0x68] sm:$0xff]
      %v4848 = vld [vmem:[%s7 + $0x70] sm:$0xff]
      %v4849 = vld [vmem:[%s7 + $0x78] sm:$0xff]
      %v4850 = vld [vmem:[%s8] sm:$0x1]
      %v4852 = vlaneseq
      %v4853 = vshrl.u32 %v4852, 7
      %v4854 = vsub.s32 0, %v4853
      %v4855 = vrot.slane %v4850, %v4854
      %4857 = vmatprep.subr.mxu0 0.0
      %4858 = vmatpush1.msra.mxu0 %v4849
      %4859 = vmatprep.subr.mxu0 0.0
      %4860 = vmatpush1.msra.mxu0 %v4848
      %4861 = vmatprep.subr.mxu0 0.0
      %4862 = vmatpush1.msra.mxu0 %v4847
      %4863 = vmatprep.subr.mxu0 0.0
      %4864 = vmatpush1.msra.mxu0 %v4846
      %4865 = vmatprep.subr.mxu0 0.0
      %4866 = vmatpush1.msra.mxu0 %v4845
      %4867 = vmatprep.subr.mxu0 0.0
      %4868 = vmatpush1.msra.mxu0 %v4844
      %4869 = vmatprep.subr.mxu0 0.0
      %4870 = vmatpush1.msra.mxu0 %v4843
      %4871 = vmatprep.subr.mxu0 0.0
      %4872 = vmatpush1.msra.mxu0 %v4842
      %4873 = vmatprep.subr.mxu0 0.0
      %4874 = vmatpush1.msra.mxu0 %v4841
      %4875 = vmatprep.subr.mxu0 0.0
      %4876 = vmatpush1.msra.mxu0 %v4840
      %4877 = vmatprep.subr.mxu0 0.0
      %4878 = vmatpush1.msra.mxu0 %v4839
      %4879 = vmatprep.subr.mxu0 0.0
      %4880 = vmatpush1.msra.mxu0 %v4838
      %4881 = vmatprep.subr.mxu0 0.0
      %4882 = vmatpush1.msra.mxu0 %v4837
      %4883 = vmatprep.subr.mxu0 0.0
      %4884 = vmatpush1.msra.mxu0 %v4836
      %4885 = vmatprep.subr.mxu0 0.0
      %4886 = vmatpush1.msra.mxu0 %v4835
      %4887 = vmatprep.subr.mxu0 0.0
      %4888 = vmatpush1.msra.mxu0 %v4834
      %4889 = vmatprep.subr.mxu0 0.0
      %4890 = vmatpush2.msra.mxu0 0.0
      %4891 = vmatprep.subr.mxu0 0.0
      %4892 = vmatpush2.msra.mxu0 0.0
      %4893 = vmatprep.subr.mxu0 0.0
      %4894 = vmatpush2.msra.mxu0 0.0
      %4895 = vmatprep.subr.mxu0 0.0
      %4896 = vmatpush2.msra.mxu0 0.0
      %4897 = vmatprep.subr.mxu0 0.0
      %4898 = vmatpush2.msra.mxu0 0.0
      %4899 = vmatprep.subr.mxu0 0.0
      %4900 = vmatpush2.msra.mxu0 0.0
      %4901 = vmatprep.subr.mxu0 0.0
      %4902 = vmatpush2.msra.mxu0 0.0
      %4903 = vmatprep.subr.mxu0 0.0
      %4904 = vmatpush2.msra.mxu0 0.0
      %4905 = vmatprep.subr.mxu0 0.0
      %4906 = vmatpush2.msra.mxu0 0.0
      %4907 = vmatprep.subr.mxu0 0.0
      %4908 = vmatpush2.msra.mxu0 0.0
      %4909 = vmatprep.subr.mxu0 0.0
      %4910 = vmatpush2.msra.mxu0 0.0
      %4911 = vmatprep.subr.mxu0 0.0
      %4912 = vmatpush2.msra.mxu0 0.0
      %4913 = vmatprep.subr.mxu0 0.0
      %4914 = vmatpush2.msra.mxu0 0.0
      %4915 = vmatprep.subr.mxu0 0.0
      %4916 = vmatpush2.msra.mxu0 0.0
      %4917 = vmatprep.subr.mxu0 0.0
      %4918 = vmatpush2.msra.mxu0 0.0
      %4919 = vmatprep.subr.mxu0 0.0
      %4920 = vmatpush2.msra.mxu0 0.0
      %4921 = vmatprep.mubr.f32.mxu0 0.0
      %4922 = vmatmul.mubr.f32.gmra.mxu0 %v4770
      %v4923 = vpop.f32.mrf.mxu0
      %v4924 = vadd.f32 %v4855, %v4923
      %v4925 = vpop.f32.mrf.mxu0
      %4926 = vmatprep.mubr.f32.mxu0 0.0
      %4927 = vmatmul.mubr.f32.gmra.mxu0 %v4771
      %v4928 = vpop.f32.mrf.mxu0
      %v4929 = vadd.f32 %v4855, %v4928
      %v4930 = vpop.f32.mrf.mxu0
      %4931 = vmatprep.mubr.f32.mxu0 0.0
      %4932 = vmatmul.mubr.f32.gmra.mxu0 %v4772
      %v4933 = vpop.f32.mrf.mxu0
      %v4934 = vpop.f32.mrf.mxu0
      %4935 = vmatprep.mubr.f32.mxu0 0.0
      %4936 = vmatmul.mubr.f32.gmra.mxu0 %v4773
      %v4937 = vpop.f32.mrf.mxu0
      %v4938 = vpop.f32.mrf.mxu0
      %4939 = vmatprep.mubr.f32.mxu0 0.0
      %4940 = vmatmul.mubr.f32.gmra.mxu0 %v4774
      %v4941 = vpop.f32.mrf.mxu0
      %v4942 = vadd.f32 %v4855, %v4941
      %v4943 = vpop.f32.mrf.mxu0
      %4944 = vmatprep.mubr.f32.mxu0 0.0
      %4945 = vmatmul.mubr.f32.gmra.mxu0 %v4775
      %v4946 = vpop.f32.mrf.mxu0
      %v4947 = vadd.f32 %v4855, %v4946
      %v4948 = vpop.f32.mrf.mxu0
      %4949 = vmatprep.mubr.f32.mxu0 0.0
      %4950 = vmatmul.mubr.f32.gmra.mxu0 %v4776
      %v4951 = vpop.f32.mrf.mxu0
      %v4952 = vpop.f32.mrf.mxu0
      %4953 = vmatprep.mubr.f32.mxu0 0.0
      %4954 = vmatmul.mubr.f32.gmra.mxu0 %v4777
      %v4955 = vpop.f32.mrf.mxu0
      %v4956 = vpop.f32.mrf.mxu0
      %4957 = vmatprep.mubr.f32.mxu0 0.0
      %4958 = vmatmul.mubr.f32.gmra.mxu0 %v4778
      %v4959 = vpop.f32.mrf.mxu0
      %v4960 = vadd.f32 %v4855, %v4959
      %v4961 = vpop.f32.mrf.mxu0
      %4962 = vmatprep.mubr.f32.mxu0 0.0
      %4963 = vmatmul.mubr.f32.gmra.mxu0 %v4779
      %v4964 = vpop.f32.mrf.mxu0
      %v4965 = vadd.f32 %v4855, %v4964
      %v4966 = vpop.f32.mrf.mxu0
      %4967 = vmatprep.mubr.f32.mxu0 0.0
      %4968 = vmatmul.mubr.f32.gmra.mxu0 %v4780
      %v4969 = vpop.f32.mrf.mxu0
      %v4970 = vpop.f32.mrf.mxu0
      %4971 = vmatprep.mubr.f32.mxu0 0.0
      %4972 = vmatmul.mubr.f32.gmra.mxu0 %v4781
      %v4973 = vpop.f32.mrf.mxu0
      %v4974 = vpop.f32.mrf.mxu0
      %4975 = vmatprep.mubr.f32.mxu0 0.0
      %4976 = vmatmul.mubr.f32.gmra.mxu0 %v4782
      %v4977 = vpop.f32.mrf.mxu0
      %v4978 = vadd.f32 %v4855, %v4977
      %v4979 = vpop.f32.mrf.mxu0
      %4980 = vmatprep.mubr.f32.mxu0 0.0
      %4981 = vmatmul.mubr.f32.gmra.mxu0 %v4783
      %v4982 = vpop.f32.mrf.mxu0
      %v4983 = vadd.f32 %v4855, %v4982
      %v4984 = vpop.f32.mrf.mxu0
      %4985 = vmatprep.mubr.f32.mxu0 0.0
      %4986 = vmatmul.mubr.f32.gmra.mxu0 %v4784
      %v4987 = vpop.f32.mrf.mxu0
      %v4988 = vpop.f32.mrf.mxu0
      %4989 = vmatprep.mubr.f32.mxu0 0.0
      %4990 = vmatmul.mubr.f32.gmra.mxu0 %v4785
      %v4991 = vpop.f32.mrf.mxu0
      %v4992 = vpop.f32.mrf.mxu0
      %4993 = vmatprep.mubr.f32.mxu0 0.0
      %4994 = vmatmul.mubr.f32.gmra.mxu0 %v4786
      %v4995 = vpop.f32.mrf.mxu0
      %v4996 = vadd.f32 %v4855, %v4995
      %v4997 = vpop.f32.mrf.mxu0
      %4998 = vmatprep.mubr.f32.mxu0 0.0
      %4999 = vmatmul.mubr.f32.gmra.mxu0 %v4787
      %v5000 = vpop.f32.mrf.mxu0
      %v5001 = vadd.f32 %v4855, %v5000
      %v5002 = vpop.f32.mrf.mxu0
      %5003 = vmatprep.mubr.f32.mxu0 0.0
      %5004 = vmatmul.mubr.f32.gmra.mxu0 %v4788
      %v5005 = vpop.f32.mrf.mxu0
      %v5006 = vpop.f32.mrf.mxu0
      %5007 = vmatprep.mubr.f32.mxu0 0.0
      %5008 = vmatmul.mubr.f32.gmra.mxu0 %v4789
      %v5009 = vpop.f32.mrf.mxu0
      %v5010 = vpop.f32.mrf.mxu0
      %5011 = vmatprep.mubr.f32.mxu0 0.0
      %5012 = vmatmul.mubr.f32.gmra.mxu0 %v4790
      %v5013 = vpop.f32.mrf.mxu0
      %v5014 = vadd.f32 %v4855, %v5013
      %v5015 = vpop.f32.mrf.mxu0
      %5016 = vmatprep.mubr.f32.mxu0 0.0
      %5017 = vmatmul.mubr.f32.gmra.mxu0 %v4791
      %v5018 = vpop.f32.mrf.mxu0
      %v5019 = vadd.f32 %v4855, %v5018
      %v5020 = vpop.f32.mrf.mxu0
      %5021 = vmatprep.mubr.f32.mxu0 0.0
      %5022 = vmatmul.mubr.f32.gmra.mxu0 %v4792
      %v5023 = vpop.f32.mrf.mxu0
      %v5024 = vpop.f32.mrf.mxu0
      %5025 = vmatprep.mubr.f32.mxu0 0.0
      %5026 = vmatmul.mubr.f32.gmra.mxu0 %v4793
      %v5027 = vpop.f32.mrf.mxu0
      %v5028 = vpop.f32.mrf.mxu0
      %5029 = vmatprep.mubr.f32.mxu0 0.0
      %5030 = vmatmul.mubr.f32.gmra.mxu0 %v4794
      %v5031 = vpop.f32.mrf.mxu0
      %v5032 = vadd.f32 %v4855, %v5031
      %v5033 = vpop.f32.mrf.mxu0
      %5034 = vmatprep.mubr.f32.mxu0 0.0
      %5035 = vmatmul.mubr.f32.gmra.mxu0 %v4795
      %v5036 = vpop.f32.mrf.mxu0
      %v5037 = vadd.f32 %v4855, %v5036
      %v5038 = vpop.f32.mrf.mxu0
      %5039 = vmatprep.mubr.f32.mxu0 0.0
      %5040 = vmatmul.mubr.f32.gmra.mxu0 %v4796
      %v5041 = vpop.f32.mrf.mxu0
      %v5042 = vpop.f32.mrf.mxu0
      %5043 = vmatprep.mubr.f32.mxu0 0.0
      %5044 = vmatmul.mubr.f32.gmra.mxu0 %v4797
      %v5045 = vpop.f32.mrf.mxu0
      %v5046 = vpop.f32.mrf.mxu0
      %5047 = vmatprep.mubr.f32.mxu0 0.0
      %5048 = vmatmul.mubr.f32.gmra.mxu0 %v4798
      %v5049 = vpop.f32.mrf.mxu0
      %v5050 = vadd.f32 %v4855, %v5049
      %v5051 = vpop.f32.mrf.mxu0
      %5052 = vmatprep.mubr.f32.mxu0 0.0
      %5053 = vmatmul.mubr.f32.gmra.mxu0 %v4799
      %v5054 = vpop.f32.mrf.mxu0
      %v5055 = vadd.f32 %v4855, %v5054
      %v5056 = vpop.f32.mrf.mxu0
      %5057 = vmatprep.mubr.f32.mxu0 0.0
      %5058 = vmatmul.mubr.f32.gmra.mxu0 %v4800
      %v5059 = vpop.f32.mrf.mxu0
      %v5060 = vpop.f32.mrf.mxu0
      %5061 = vmatprep.mubr.f32.mxu0 0.0
      %5062 = vmatmul.mubr.f32.gmra.mxu0 %v4801
      %v5063 = vpop.f32.mrf.mxu0
      %v5064 = vpop.f32.mrf.mxu0
      %5065 = vmatprep.mubr.f32.mxu0 0.0
      %5066 = vmatmul.mubr.f32.gmra.mxu0 %v4802
      %v5067 = vpop.f32.mrf.mxu0
      %v5068 = vadd.f32 %v4855, %v5067
      %v5069 = vpop.f32.mrf.mxu0
      %5070 = vmatprep.mubr.f32.mxu0 0.0
      %5071 = vmatmul.mubr.f32.gmra.mxu0 %v4803
      %v5072 = vpop.f32.mrf.mxu0
      %v5073 = vadd.f32 %v4855, %v5072
      %v5074 = vpop.f32.mrf.mxu0
      %5075 = vmatprep.mubr.f32.mxu0 0.0
      %5076 = vmatmul.mubr.f32.gmra.mxu0 %v4804
      %v5077 = vpop.f32.mrf.mxu0
      %v5078 = vpop.f32.mrf.mxu0
      %5079 = vmatprep.mubr.f32.mxu0 0.0
      %5080 = vmatmul.mubr.f32.gmra.mxu0 %v4805
      %v5081 = vpop.f32.mrf.mxu0
      %v5082 = vpop.f32.mrf.mxu0
      %5083 = vmatprep.mubr.f32.mxu0 0.0
      %5084 = vmatmul.mubr.f32.gmra.mxu0 %v4806
      %v5085 = vpop.f32.mrf.mxu0
      %v5086 = vadd.f32 %v4855, %v5085
      %v5087 = vpop.f32.mrf.mxu0
      %5088 = vmatprep.mubr.f32.mxu0 0.0
      %5089 = vmatmul.mubr.f32.gmra.mxu0 %v4807
      %v5090 = vpop.f32.mrf.mxu0
      %v5091 = vadd.f32 %v4855, %v5090
      %v5092 = vpop.f32.mrf.mxu0
      %5093 = vmatprep.mubr.f32.mxu0 0.0
      %5094 = vmatmul.mubr.f32.gmra.mxu0 %v4808
      %v5095 = vpop.f32.mrf.mxu0
      %v5096 = vpop.f32.mrf.mxu0
      %5097 = vmatprep.mubr.f32.mxu0 0.0
      %5098 = vmatmul.mubr.f32.gmra.mxu0 %v4809
      %v5099 = vpop.f32.mrf.mxu0
      %v5100 = vpop.f32.mrf.mxu0
      %5101 = vmatprep.mubr.f32.mxu0 0.0
      %5102 = vmatmul.mubr.f32.gmra.mxu0 %v4810
      %v5103 = vpop.f32.mrf.mxu0
      %v5104 = vadd.f32 %v4855, %v5103
      %v5105 = vpop.f32.mrf.mxu0
      %5106 = vmatprep.mubr.f32.mxu0 0.0
      %5107 = vmatmul.mubr.f32.gmra.mxu0 %v4811
      %v5108 = vpop.f32.mrf.mxu0
      %v5109 = vadd.f32 %v4855, %v5108
      %v5110 = vpop.f32.mrf.mxu0
      %5111 = vmatprep.mubr.f32.mxu0 0.0
      %5112 = vmatmul.mubr.f32.gmra.mxu0 %v4812
      %v5113 = vpop.f32.mrf.mxu0
      %v5114 = vpop.f32.mrf.mxu0
      %5115 = vmatprep.mubr.f32.mxu0 0.0
      %5116 = vmatmul.mubr.f32.gmra.mxu0 %v4813
      %v5117 = vpop.f32.mrf.mxu0
      %v5118 = vpop.f32.mrf.mxu0
      %5119 = vmatprep.mubr.f32.mxu0 0.0
      %5120 = vmatmul.mubr.f32.gmra.mxu0 %v4814
      %v5121 = vpop.f32.mrf.mxu0
      %v5122 = vadd.f32 %v4855, %v5121
      %v5123 = vpop.f32.mrf.mxu0
      %5124 = vmatprep.mubr.f32.mxu0 0.0
      %5125 = vmatmul.mubr.f32.gmra.mxu0 %v4815
      %v5126 = vpop.f32.mrf.mxu0
      %v5127 = vadd.f32 %v4855, %v5126
      %v5128 = vpop.f32.mrf.mxu0
      %5129 = vmatprep.mubr.f32.mxu0 0.0
      %5130 = vmatmul.mubr.f32.gmra.mxu0 %v4816
      %v5131 = vpop.f32.mrf.mxu0
      %v5132 = vpop.f32.mrf.mxu0
      %5133 = vmatprep.mubr.f32.mxu0 0.0
      %5134 = vmatmul.mubr.f32.gmra.mxu0 %v4817
      %v5135 = vpop.f32.mrf.mxu0
      %v5136 = vpop.f32.mrf.mxu0
      %5137 = vmatprep.mubr.f32.mxu0 0.0
      %5138 = vmatmul.mubr.f32.gmra.mxu0 %v4818
      %v5139 = vpop.f32.mrf.mxu0
      %v5140 = vadd.f32 %v4855, %v5139
      %v5141 = vpop.f32.mrf.mxu0
      %5142 = vmatprep.mubr.f32.mxu0 0.0
      %5143 = vmatmul.mubr.f32.gmra.mxu0 %v4819
      %v5144 = vpop.f32.mrf.mxu0
      %v5145 = vadd.f32 %v4855, %v5144
      %v5146 = vpop.f32.mrf.mxu0
      %5147 = vmatprep.mubr.f32.mxu0 0.0
      %5148 = vmatmul.mubr.f32.gmra.mxu0 %v4820
      %v5149 = vpop.f32.mrf.mxu0
      %v5150 = vpop.f32.mrf.mxu0
      %5151 = vmatprep.mubr.f32.mxu0 0.0
      %5152 = vmatmul.mubr.f32.gmra.mxu0 %v4821
      %v5153 = vpop.f32.mrf.mxu0
      %v5154 = vpop.f32.mrf.mxu0
      %5155 = vmatprep.mubr.f32.mxu0 0.0
      %5156 = vmatmul.mubr.f32.gmra.mxu0 %v4822
      %v5157 = vpop.f32.mrf.mxu0
      %v5158 = vadd.f32 %v4855, %v5157
      %v5159 = vpop.f32.mrf.mxu0
      %5160 = vmatprep.mubr.f32.mxu0 0.0
      %5161 = vmatmul.mubr.f32.gmra.mxu0 %v4823
      %v5162 = vpop.f32.mrf.mxu0
      %v5163 = vadd.f32 %v4855, %v5162
      %v5164 = vpop.f32.mrf.mxu0
      %5165 = vmatprep.mubr.f32.mxu0 0.0
      %5166 = vmatmul.mubr.f32.gmra.mxu0 %v4824
      %v5167 = vpop.f32.mrf.mxu0
      %v5168 = vpop.f32.mrf.mxu0
      %5169 = vmatprep.mubr.f32.mxu0 0.0
      %5170 = vmatmul.mubr.f32.gmra.mxu0 %v4825
      %v5171 = vpop.f32.mrf.mxu0
      %v5172 = vpop.f32.mrf.mxu0
      %5173 = vmatprep.mubr.f32.mxu0 0.0
      %5174 = vmatmul.mubr.f32.gmra.mxu0 %v4826
      %v5175 = vpop.f32.mrf.mxu0
      %v5176 = vadd.f32 %v4855, %v5175
      %v5177 = vpop.f32.mrf.mxu0
      %5178 = vmatprep.mubr.f32.mxu0 0.0
      %5179 = vmatmul.mubr.f32.gmra.mxu0 %v4827
      %v5180 = vpop.f32.mrf.mxu0
      %v5181 = vadd.f32 %v4855, %v5180
      %v5182 = vpop.f32.mrf.mxu0
      %5183 = vmatprep.mubr.f32.mxu0 0.0
      %5184 = vmatmul.mubr.f32.gmra.mxu0 %v4828
      %v5185 = vpop.f32.mrf.mxu0
      %v5186 = vpop.f32.mrf.mxu0
      %5187 = vmatprep.mubr.f32.mxu0 0.0
      %5188 = vmatmul.mubr.f32.gmra.mxu0 %v4829
      %v5189 = vpop.f32.mrf.mxu0
      %v5190 = vpop.f32.mrf.mxu0
      %5191 = vmatprep.mubr.f32.mxu0 0.0
      %5192 = vmatmul.mubr.f32.gmra.mxu0 %v4830
      %v5193 = vpop.f32.mrf.mxu0
      %v5194 = vadd.f32 %v4855, %v5193
      %v5195 = vpop.f32.mrf.mxu0
      %5196 = vmatprep.mubr.f32.mxu0 0.0
      %5197 = vmatmul.mubr.f32.gmra.mxu0 %v4831
      %v5198 = vpop.f32.mrf.mxu0
      %v5199 = vadd.f32 %v4855, %v5198
      %v5200 = vpop.f32.mrf.mxu0
      %5201 = vmatprep.mubr.f32.mxu0 0.0
      %5202 = vmatmul.mubr.f32.gmra.mxu0 %v4832
      %v5203 = vpop.f32.mrf.mxu0
      %v5204 = vpop.f32.mrf.mxu0
      %5205 = vmatprep.mubr.f32.mxu0 0.0
      %5206 = vmatmul.mubr.f32.gmra.mxu0 %v4833
      %v5207 = vpop.f32.mrf.mxu0
      %v5208 = vpop.f32.mrf.mxu0
      %5209 = vdwg.mxu0
      %v5210 = vrsqrt.pop %v4924
      %v5211 = vrsqrt.pop %v4929
      %v5212 = vrsqrt.pop %v4942
      %v5213 = vrsqrt.pop %v4947
      %v5214 = vrsqrt.pop %v4960
      %v5215 = vrsqrt.pop %v4965
      %v5216 = vrsqrt.pop %v4978
      %v5217 = vrsqrt.pop %v4983
      %v5218 = vrsqrt.pop %v4996
      %v5219 = vrsqrt.pop %v5001
      %v5220 = vrsqrt.pop %v5014
      %v5221 = vrsqrt.pop %v5019
      %v5222 = vrsqrt.pop %v5032
      %v5223 = vrsqrt.pop %v5037
      %v5224 = vrsqrt.pop %v5050
      %v5225 = vrsqrt.pop %v5055
      %v5226 = vrsqrt.pop %v5068
      %v5227 = vrsqrt.pop %v5073
      %v5228 = vrsqrt.pop %v5086
      %v5229 = vrsqrt.pop %v5091
      %v5230 = vrsqrt.pop %v5104
      %v5231 = vrsqrt.pop %v5109
      %v5232 = vrsqrt.pop %v5122
      %v5233 = vrsqrt.pop %v5127
      %v5234 = vrsqrt.pop %v5140
      %v5235 = vrsqrt.pop %v5145
      %v5236 = vrsqrt.pop %v5158
      %v5237 = vrsqrt.pop %v5163
      %v5238 = vrsqrt.pop %v5176
      %v5239 = vrsqrt.pop %v5181
      %v5240 = vrsqrt.pop %v5194
      %v5241 = vrsqrt.pop %v5199
      %v5242 = vmul.f32 %v4452, %v5210
      %v5243 = vmul.f32 %v4457, %v5211
      %v5244 = vmul.f32 %v4472, %v5212
      %v5245 = vmul.f32 %v4477, %v5213
      %v5246 = vmul.f32 %v4492, %v5214
      %v5247 = vmul.f32 %v4497, %v5215
      %v5248 = vmul.f32 %v4512, %v5216
      %v5249 = vmul.f32 %v4517, %v5217
      %v5250 = vmul.f32 %v4532, %v5218
      %v5251 = vmul.f32 %v4537, %v5219
      %v5252 = vmul.f32 %v4552, %v5220
      %v5253 = vmul.f32 %v4557, %v5221
      %v5254 = vmul.f32 %v4572, %v5222
      %v5255 = vmul.f32 %v4577, %v5223
      %v5256 = vmul.f32 %v4592, %v5224
      %v5257 = vmul.f32 %v4597, %v5225
      %v5258 = vmul.f32 %v4612, %v5226
      %v5259 = vmul.f32 %v4617, %v5227
      %v5260 = vmul.f32 %v4632, %v5228
      %v5261 = vmul.f32 %v4637, %v5229
      %v5262 = vmul.f32 %v4652, %v5230
      %v5263 = vmul.f32 %v4657, %v5231
      %v5264 = vmul.f32 %v4672, %v5232
      %v5265 = vmul.f32 %v4677, %v5233
      %v5266 = vmul.f32 %v4692, %v5234
      %v5267 = vmul.f32 %v4697, %v5235
      %v5268 = vmul.f32 %v4712, %v5236
      %v5269 = vmul.f32 %v4717, %v5237
      %v5270 = vmul.f32 %v4732, %v5238
      %v5271 = vmul.f32 %v4737, %v5239
      %v5272 = vmul.f32 %v4752, %v5240
      %v5273 = vmul.f32 %v4757, %v5241
      %v5274 = vadd.f32 %v5242, %v905
      %v5275 = vadd.f32 %v5243, %v904
      %v5276 = vadd.f32 %v5244, %v901
      %v5277 = vadd.f32 %v5245, %v900
      %v5278 = vadd.f32 %v5246, %v897
      %v5279 = vadd.f32 %v5247, %v896
      %v5280 = vadd.f32 %v5248, %v893
      %v5281 = vadd.f32 %v5249, %v892
      %v5282 = vadd.f32 %v5250, %v889
      %v5283 = vadd.f32 %v5251, %v888
      %v5284 = vadd.f32 %v5252, %v885
      %v5285 = vadd.f32 %v5253, %v884
      %v5286 = vadd.f32 %v5254, %v881
      %v5287 = vadd.f32 %v5255, %v880
      %v5288 = vadd.f32 %v5256, %v877
      %v5289 = vadd.f32 %v5257, %v876
      %v5290 = vadd.f32 %v5258, %v873
      %v5291 = vadd.f32 %v5259, %v872
      %v5292 = vadd.f32 %v5260, %v869
      %v5293 = vadd.f32 %v5261, %v868
      %v5294 = vadd.f32 %v5262, %v865
      %v5295 = vadd.f32 %v5263, %v864
      %v5296 = vadd.f32 %v5264, %v861
      %v5297 = vadd.f32 %v5265, %v860
      %v5298 = vadd.f32 %v5266, %v857
      %v5299 = vadd.f32 %v5267, %v856
      %v5300 = vadd.f32 %v5268, %v853
      %v5301 = vadd.f32 %v5269, %v852
      %v5302 = vadd.f32 %v5270, %v849
      %v5303 = vadd.f32 %v5271, %v848
      %v5304 = vadd.f32 %v5272, %v845
      %v5305 = vadd.f32 %v5273, %v844
      %vm5306 = vcmp.ge.f32.partialorder %v5274, 0.0
      %vm5307 = vcmp.ge.f32.partialorder %v5275, 0.0
      %vm5308 = vcmp.ge.f32.partialorder %v5276, 0.0
      %vm5309 = vcmp.ge.f32.partialorder %v5277, 0.0
      %vm5310 = vcmp.ge.f32.partialorder %v5278, 0.0
      %vm5311 = vcmp.ge.f32.partialorder %v5279, 0.0
      %vm5312 = vcmp.ge.f32.partialorder %v5280, 0.0
      %vm5313 = vcmp.ge.f32.partialorder %v5281, 0.0
      %vm5314 = vcmp.ge.f32.partialorder %v5282, 0.0
      %vm5315 = vcmp.ge.f32.partialorder %v5283, 0.0
      %vm5316 = vcmp.ge.f32.partialorder %v5284, 0.0
      %vm5317 = vcmp.ge.f32.partialorder %v5285, 0.0
      %vm5318 = vcmp.ge.f32.partialorder %v5286, 0.0
      %vm5319 = vcmp.ge.f32.partialorder %v5287, 0.0
      %vm5320 = vcmp.ge.f32.partialorder %v5288, 0.0
      %vm5321 = vcmp.ge.f32.partialorder %v5289, 0.0
      %vm5322 = vcmp.ge.f32.partialorder %v5290, 0.0
      %vm5323 = vcmp.ge.f32.partialorder %v5291, 0.0
      %vm5324 = vcmp.ge.f32.partialorder %v5292, 0.0
      %vm5325 = vcmp.ge.f32.partialorder %v5293, 0.0
      %vm5326 = vcmp.ge.f32.partialorder %v5294, 0.0
      %vm5327 = vcmp.ge.f32.partialorder %v5295, 0.0
      %vm5328 = vcmp.ge.f32.partialorder %v5296, 0.0
      %vm5329 = vcmp.ge.f32.partialorder %v5297, 0.0
      %vm5330 = vcmp.ge.f32.partialorder %v5298, 0.0
      %vm5331 = vcmp.ge.f32.partialorder %v5299, 0.0
      %vm5332 = vcmp.ge.f32.partialorder %v5300, 0.0
      %vm5333 = vcmp.ge.f32.partialorder %v5301, 0.0
      %vm5334 = vcmp.ge.f32.partialorder %v5302, 0.0
      %vm5335 = vcmp.ge.f32.partialorder %v5303, 0.0
      %vm5336 = vcmp.ge.f32.partialorder %v5304, 0.0
      %vm5337 = vcmp.ge.f32.partialorder %v5305, 0.0
      %v5338 = vmul.f32 %v4240, %v5274
      %v5339 = vmul.f32 %v4240, %v5275
      %v5340 = vmul.f32 %v4240, %v5276
      %v5341 = vmul.f32 %v4240, %v5277
      %v5342 = vmul.f32 %v4240, %v5278
      %v5343 = vmul.f32 %v4240, %v5279
      %v5344 = vmul.f32 %v4240, %v5280
      %v5345 = vmul.f32 %v4240, %v5281
      %v5346 = vmul.f32 %v4240, %v5282
      %v5347 = vmul.f32 %v4240, %v5283
      %v5348 = vmul.f32 %v4240, %v5284
      %v5349 = vmul.f32 %v4240, %v5285
      %v5350 = vmul.f32 %v4240, %v5286
      %v5351 = vmul.f32 %v4240, %v5287
      %v5352 = vmul.f32 %v4240, %v5288
      %v5353 = vmul.f32 %v4240, %v5289
      %v5354 = vmul.f32 %v4240, %v5290
      %v5355 = vmul.f32 %v4240, %v5291
      %v5356 = vmul.f32 %v4240, %v5292
      %v5357 = vmul.f32 %v4240, %v5293
      %v5358 = vmul.f32 %v4240, %v5294
      %v5359 = vmul.f32 %v4240, %v5295
      %v5360 = vmul.f32 %v4240, %v5296
      %v5361 = vmul.f32 %v4240, %v5297
      %v5362 = vmul.f32 %v4240, %v5298
      %v5363 = vmul.f32 %v4240, %v5299
      %v5364 = vmul.f32 %v4240, %v5300
      %v5365 = vmul.f32 %v4240, %v5301
      %v5366 = vmul.f32 %v4240, %v5302
      %v5367 = vmul.f32 %v4240, %v5303
      %v5368 = vmul.f32 %v4240, %v5304
      %v5369 = vmul.f32 %v4240, %v5305
      %v5370 = vsel %vm5306, %v5274, %v5338
      %v5371 = vsel %vm5307, %v5275, %v5339
      %v5372 = vsel %vm5308, %v5276, %v5340
      %v5373 = vsel %vm5309, %v5277, %v5341
      %v5374 = vsel %vm5310, %v5278, %v5342
      %v5375 = vsel %vm5311, %v5279, %v5343
      %v5376 = vsel %vm5312, %v5280, %v5344
      %v5377 = vsel %vm5313, %v5281, %v5345
      %v5378 = vsel %vm5314, %v5282, %v5346
      %v5379 = vsel %vm5315, %v5283, %v5347
      %v5380 = vsel %vm5316, %v5284, %v5348
      %v5381 = vsel %vm5317, %v5285, %v5349
      %v5382 = vsel %vm5318, %v5286, %v5350
      %v5383 = vsel %vm5319, %v5287, %v5351
      %v5384 = vsel %vm5320, %v5288, %v5352
      %v5385 = vsel %vm5321, %v5289, %v5353
      %v5386 = vsel %vm5322, %v5290, %v5354
      %v5387 = vsel %vm5323, %v5291, %v5355
      %v5388 = vsel %vm5324, %v5292, %v5356
      %v5389 = vsel %vm5325, %v5293, %v5357
      %v5390 = vsel %vm5326, %v5294, %v5358
      %v5391 = vsel %vm5327, %v5295, %v5359
      %v5392 = vsel %vm5328, %v5296, %v5360
      %v5393 = vsel %vm5329, %v5297, %v5361
      %v5394 = vsel %vm5330, %v5298, %v5362
      %v5395 = vsel %vm5331, %v5299, %v5363
      %v5396 = vsel %vm5332, %v5300, %v5364
      %v5397 = vsel %vm5333, %v5301, %v5365
      %v5398 = vsel %vm5334, %v5302, %v5366
      %v5399 = vsel %vm5335, %v5303, %v5367
      %v5400 = vsel %vm5336, %v5304, %v5368
      %v5401 = vsel %vm5337, %v5305, %v5369
      %5402 = vst [vmem:[%s527] sm:$0xff] %v5370
      %5403 = vst [vmem:[%s527 + $0x8] sm:$0xff] %v5371
      %5404 = vst [vmem:[%s527 + $0x10] sm:$0xff] %v5372
      %5405 = vst [vmem:[%s527 + $0x18] sm:$0xff] %v5373
      %5406 = vst [vmem:[%s527 + $0x20] sm:$0xff] %v5374
      %5407 = vst [vmem:[%s527 + $0x28] sm:$0xff] %v5375
      %5408 = vst [vmem:[%s527 + $0x30] sm:$0xff] %v5376
      %5409 = vst [vmem:[%s527 + $0x38] sm:$0xff] %v5377
      %5410 = vst [vmem:[%s527 + $0x40] sm:$0xff] %v5378
      %5411 = vst [vmem:[%s527 + $0x48] sm:$0xff] %v5379
      %5412 = vst [vmem:[%s527 + $0x50] sm:$0xff] %v5380
      %5413 = vst [vmem:[%s527 + $0x58] sm:$0xff] %v5381
      %5414 = vst [vmem:[%s527 + $0x60] sm:$0xff] %v5382
      %5415 = vst [vmem:[%s527 + $0x68] sm:$0xff] %v5383
      %5416 = vst [vmem:[%s527 + $0x70] sm:$0xff] %v5384
      %5417 = vst [vmem:[%s527 + $0x78] sm:$0xff] %v5385
      %5418 = vst [vmem:[%s527 + $0x80] sm:$0xff] %v5386
      %5419 = vst [vmem:[%s527 + $0x88] sm:$0xff] %v5387
      %5420 = vst [vmem:[%s527 + $0x90] sm:$0xff] %v5388
      %5421 = vst [vmem:[%s527 + $0x98] sm:$0xff] %v5389
      %5422 = vst [vmem:[%s527 + $0xa0] sm:$0xff] %v5390
      %5423 = vst [vmem:[%s527 + $0xa8] sm:$0xff] %v5391
      %5424 = vst [vmem:[%s527 + $0xb0] sm:$0xff] %v5392
      %5425 = vst [vmem:[%s527 + $0xb8] sm:$0xff] %v5393
      %5426 = vst [vmem:[%s527 + $0xc0] sm:$0xff] %v5394
      %5427 = vst [vmem:[%s527 + $0xc8] sm:$0xff] %v5395
      %5428 = vst [vmem:[%s527 + $0xd0] sm:$0xff] %v5396
      %5429 = vst [vmem:[%s527 + $0xd8] sm:$0xff] %v5397
      %5430 = vst [vmem:[%s527 + $0xe0] sm:$0xff] %v5398
      %5431 = vst [vmem:[%s527 + $0xe8] sm:$0xff] %v5399
      %5432 = vst [vmem:[%s527 + $0xf0] sm:$0xff] %v5400
      %5433 = vst [vmem:[%s527 + $0xf8] sm:$0xff] %v5401
      %s5434 = smul.u32 16, %s27
      %p5435 = scmp.lt.s32.totalorder %s26, 1
      %s5436 = scalar_select %p5435, %s26, 1
      %p5437 = scmp.lt.s32.totalorder %s5434, 15
      %s5438 = scalar_select %p5437, %s5434, 15
      %s5439 = smul.addr %s5438, 2
      %s5440 = smul.addr %s5436, 32
      %s5441 = sadd.s32 %s5439, %s5440
      %s5442 = smul.addr %s5441, 8
      %s5443 = scalar_lea.vmem %s10, %s5442
      // Predicated region
      $region61: #{conv_resblock_forward_nhwc.1} parent=59 // pred_check
        %p5444 = pneg %p301
      $region62: #{conv_resblock_forward_nhwc.1} parent=59 // pred_check_branch
        %5446 = sbr.rel (%p5444) target = $region64
      $region63: #{conv_resblock_forward_nhwc.1} parent=59 // pred_region
        %s5447 = smul.u32 16, %s27
      $region64: #{conv_resblock_forward_nhwc.1} parent=59 // pred_fallthru
        _
    $region60: #{conv_resblock_forward_nhwc.1} parent=5 // pred_fallthru
      _
    %p5448 = scmp.le.s32.totalorder 2, %s17
    // Predicated region
    $region65: #{conv_resblock_forward_nhwc.1} parent=5 // pred_check
      %p5449 = pneg %p5448
    $region66: #{conv_resblock_forward_nhwc.1} parent=5 // pred_check_branch
      %5451 = sbr.rel (%p5449) target = $region68
    $region67: #{conv_resblock_forward_nhwc.1} parent=5 // pred_region
      %s5452 = ssub.s32 %s17, 2
      // Predicated region
      $region69: #{conv_resblock_forward_nhwc.1} parent=67 // pred_check
        %p5453 = pneg %p307
      $region70: #{conv_resblock_forward_nhwc.1} parent=67 // pred_check_branch
        %5455 = sbr.rel (%p5453) target = $region72
      $region71: #{conv_resblock_forward_nhwc.1} parent=67 // pred_region
        %s5456 = smul.u32 16, %s29
        %p5457 = scmp.lt.s32.totalorder %s28, 1
        %s5458 = scalar_select %p5457, %s28, 1
        %p5459 = scmp.lt.s32.totalorder %s5456, 15
        %s5460 = scalar_select %p5459, %s5456, 15
        %s5461 = smul.addr %s5460, 2
        %s5462 = smul.addr %s5458, 32
        %s5463 = sadd.s32 %s5461, %s5462
        %s5464 = smul.addr %s5463, 8
        %s5465 = scalar_lea.vmem %s10, %s5464
      $region72: #{conv_resblock_forward_nhwc.1} parent=67 // pred_fallthru
        _
    $region68: #{conv_resblock_forward_nhwc.1} parent=5 // pred_fallthru
      _
  $region6: #{conv_resblock_forward_nhwc.1} parent=0 // loop_footer
    %s21 = sadd.s32 1, %s17
  $region7: #{conv_resblock_forward_nhwc.1} parent=0 // loop_footer_branch
    %16 = sbr.rel target = $region3
  $region8: #{conv_resblock_forward_nhwc.1} parent=0 // loop_exit
    _

</llo_original>
